<compile_context>
chip_gen: v7x
topology: tpu7x:2x2x1
jax: 0.10.0
libtpu: 0.0.40
codegen_flags: <defaults>
</compile_context>

<pallas_src>
import jax
import jax.numpy as jnp
import numpy as np
from jax.experimental import pallas as pl
from jax.experimental.pallas import tpu as pltpu

IN_DIM = 1024
HID = 512
NEG_SLOPE = 0.2  # LeakyReLU slope


def _round_up(x, m):
    return ((x + m - 1) // m) * m


def _leaky_relu(x):
    return jnp.where(x > 0, x, NEG_SLOPE * x)


def _adain_code_kernel(w1_ref,    # (1024, 512)
                       w2_ref,    # (512, 512)
                       w3_ref,    # (512, 512)
                       w4_ref,    # (512, 512)
                       bias_ref,  # (4, 512)   rows: b1, b2, b3, b4
                       out_ref):  # (TB, 512)
    tb = out_ref.shape[0]

    # fc1 on a constant-ones input == column-sum of w1 (no (TB,1024) ones, no matmul).
    x = jnp.sum(w1_ref[...], axis=0, keepdims=True) + bias_ref[0:1, :]   # (1, 512)
    # Compute the rest of the chain on one sublane tile (8 identical rows).
    x = jnp.broadcast_to(x, (8, HID))

    # fc2 / fc3 / fc4 + LeakyReLU(0.2), f32 accumulation on the MXU.
    x = _leaky_relu(jnp.dot(x, w2_ref[...], preferred_element_type=jnp.float32)
                    + bias_ref[1:2, :])
    x = _leaky_relu(jnp.dot(x, w3_ref[...], preferred_element_type=jnp.float32)
                    + bias_ref[2:3, :])
    x = _leaky_relu(jnp.dot(x, w4_ref[...], preferred_element_type=jnp.float32)
                    + bias_ref[3:4, :])

    # Every output row is identical: broadcast the single row into the whole
    # lane-dense (TB, 512) output tile (unmasked stores).
    out_ref[...] = jnp.broadcast_to(x[0:1, :], (tb, HID)).astype(out_ref.dtype)


def adain_code_generator_shared_forward(batch_size, params, *, tb=None):
    """Returns the (batch_size, 512) AdaIN shared code, matching the PyTorch module."""
    if tb is None:
        b8 = _round_up(batch_size, 8)
        if b8 <= 8:
            tb = 8
        else:
            # >=2 grid steps when possible (feeds both v7x TensorCores), cap at 256
            # (fills the 256-wide MXU M dim on v6e/v7x; output tile = 512 KiB f32).
            tb = min(256, _round_up((b8 + 1) // 2, 8))
    b_pad = _round_up(batch_size, tb)
    grid = (b_pad // tb,)

    w1 = params["fc1_w"].astype(jnp.float32)
    w2 = params["fc2_w"].astype(jnp.float32)
    w3 = params["fc3_w"].astype(jnp.float32)
    w4 = params["fc4_w"].astype(jnp.float32)
    biases = jnp.stack(
        [params["fc1_b"], params["fc2_b"], params["fc3_b"], params["fc4_b"]],
        axis=0).astype(jnp.float32)                       # (4, 512), one lane-dense block

    const_ix = lambda i: (0, 0)  # weights/biases resident across all batch tiles

    out = pl.pallas_call(
        _adain_code_kernel,
        out_shape=jax.ShapeDtypeStruct((b_pad, HID), jnp.float32),
        grid_spec=pltpu.PrefetchScalarGridSpec(
            num_scalar_prefetch=0,
            grid=grid,
            in_specs=[
                pl.BlockSpec((IN_DIM, HID), const_ix),    # fc1_w
                pl.BlockSpec((HID, HID), const_ix),       # fc2_w
                pl.BlockSpec((HID, HID), const_ix),       # fc3_w
                pl.BlockSpec((HID, HID), const_ix),       # fc4_w
                pl.BlockSpec((4, HID), const_ix),         # packed biases
            ],
            out_specs=pl.BlockSpec((tb, HID), lambda i: (i, 0)),  # lane-dense (512)
        ),
        compiler_params=pltpu.CompilerParams(
            dimension_semantics=("parallel",)),           # batch tiles are independent
    )(w1, w2, w3, w4, biases)

    return out[:batch_size]


def init_params(key):
    """Deterministic synthetic weights (PyTorch Linear fan-in uniform init), stored (in, out)."""
    ks = jax.random.split(key, 8)

    def lin(kw, kb, fan_in, fan_out):
        bound = 1.0 / np.sqrt(fan_in)
        w = jax.random.uniform(kw, (fan_in, fan_out), jnp.float32, -bound, bound)
        b = jax.random.uniform(kb, (fan_out,), jnp.float32, -bound, bound)
        return w, b

    fc1_w, fc1_b = lin(ks[0], ks[1], IN_DIM, HID)
    fc2_w, fc2_b = lin(ks[2], ks[3], HID, HID)
    fc3_w, fc3_b = lin(ks[4], ks[5], HID, HID)
    fc4_w, fc4_b = lin(ks[6], ks[7], HID, HID)
    return dict(fc1_w=fc1_w, fc1_b=fc1_b, fc2_w=fc2_w, fc2_b=fc2_b,
                fc3_w=fc3_w, fc3_b=fc3_b, fc4_w=fc4_w, fc4_b=fc4_b)


def ref_forward(batch_size, params):
    """Pure-JAX reference of the PyTorch forward."""
    x = jnp.ones((batch_size, IN_DIM), dtype=jnp.float32)
    x = x @ params["fc1_w"] + params["fc1_b"]
    x = x @ params["fc2_w"] + params["fc2_b"]
    x = jnp.where(x > 0, x, NEG_SLOPE * x)
    x = x @ params["fc3_w"] + params["fc3_b"]
    x = jnp.where(x > 0, x, NEG_SLOPE * x)
    x = x @ params["fc4_w"] + params["fc4_b"]
    x = jnp.where(x > 0, x, NEG_SLOPE * x)
    return x


if __name__ == "__main__":
    batch_size = 2
    key = jax.random.PRNGKey(0)
    params = init_params(key)

    out = adain_code_generator_shared_forward(batch_size, params)
    out = jax.block_until_ready(out)

    ref = jax.block_until_ready(ref_forward(batch_size, params))
    assert out.shape == (batch_size, HID), out.shape
    if not np.allclose(np.asarray(out), np.asarray(ref), rtol=1e-3, atol=1e-3):
        raise AssertionError("Pallas kernel output mismatch vs JAX reference")

    print("KERNEL_OK")
</pallas_src>

<mosaic_0001>
module attributes {stable_mosaic.version = 11 : i64} {
  func.func @_adain_code_kernel(%arg0: i32, %arg1: memref<1024x512xf32, #tpu.memory_space<vmem>>, %arg2: memref<512x512xf32, #tpu.memory_space<vmem>>, %arg3: memref<512x512xf32, #tpu.memory_space<vmem>>, %arg4: memref<512x512xf32, #tpu.memory_space<vmem>>, %arg5: memref<4x512xf32, #tpu.memory_space<vmem>>, %arg6: memref<8x512xf32, #tpu.memory_space<vmem>>) attributes {dimension_semantics = [#tpu.dimension_semantics<parallel>], iteration_bounds = array<i64: 1>, scalar_prefetch = 0 : i64, scratch_operands = 0 : i64, tpu.core_type = #tpu.core_type<tc>, window_params = [{pipeline_mode = #tpu.pipeline_mode<synchronous>, transform_indices = @transform_0, window_bounds = array<i64: 1024, 512>}, {pipeline_mode = #tpu.pipeline_mode<synchronous>, transform_indices = @transform_1, window_bounds = array<i64: 512, 512>}, {pipeline_mode = #tpu.pipeline_mode<synchronous>, transform_indices = @transform_2, window_bounds = array<i64: 512, 512>}, {pipeline_mode = #tpu.pipeline_mode<synchronous>, transform_indices = @transform_3, window_bounds = array<i64: 512, 512>}, {pipeline_mode = #tpu.pipeline_mode<synchronous>, transform_indices = @transform_4, window_bounds = array<i64: 4, 512>}, {transform_indices = @transform_5, window_bounds = array<i64: 8, 512>}]} {
    %c0 = arith.constant 0 : index
    %c0_0 = arith.constant 0 : index
    %0 = vector.load %arg1[%c0, %c0_0] : memref<1024x512xf32, #tpu.memory_space<vmem>>, vector<1024x512xf32>
    %cst = arith.constant dense<0.000000e+00> : vector<512xf32>
    %1 = vector.multi_reduction <add>, %0, %cst [0] : vector<1024x512xf32> to vector<512xf32>
    %2 = vector.shape_cast %1 : vector<512xf32> to vector<1x512xf32>
    %c0_1 = arith.constant 0 : index
    %c0_2 = arith.constant 0 : index
    %3 = vector.load %arg5[%c0_1, %c0_2] : memref<4x512xf32, #tpu.memory_space<vmem>>, vector<1x512xf32>
    %4 = arith.addf %2, %3 : vector<1x512xf32>
    %5 = vector.shape_cast %4 : vector<1x512xf32> to vector<1x512xf32>
    %6 = vector.broadcast %5 : vector<1x512xf32> to vector<8x512xf32>
    %c0_3 = arith.constant 0 : index
    %c0_4 = arith.constant 0 : index
    %7 = vector.load %arg2[%c0_3, %c0_4] : memref<512x512xf32, #tpu.memory_space<vmem>>, vector<512x512xf32>
    %cst_5 = arith.constant dense<0.000000e+00> : vector<8x512xf32>
    %8 = tpu.matmul %6, %7, %cst_5 {dimension_numbers = #tpu.dot_dimension_numbers<[1], [0], [0], [1], [0, 0, 1, 1], [], []>} : vector<8x512xf32>, vector<512x512xf32>, vector<8x512xf32> -> vector<8x512xf32>
    %c1 = arith.constant 1 : index
    %c0_6 = arith.constant 0 : index
    %9 = vector.load %arg5[%c1, %c0_6] : memref<4x512xf32, #tpu.memory_space<vmem>>, vector<1x512xf32>
    %10 = vector.broadcast %9 : vector<1x512xf32> to vector<8x512xf32>
    %11 = arith.addf %8, %10 : vector<8x512xf32>
    %cst_7 = arith.constant 0.000000e+00 : f32
    %12 = vector.broadcast %cst_7 : f32 to vector<8x512xf32>
    %13 = arith.cmpf ogt, %11, %12 : vector<8x512xf32>
    %cst_8 = arith.constant 2.000000e-01 : f32
    %14 = vector.broadcast %cst_8 : f32 to vector<8x512xf32>
    %15 = arith.mulf %14, %11 : vector<8x512xf32>
    %16 = arith.select %13, %11, %15 : vector<8x512xi1>, vector<8x512xf32>
    %c0_9 = arith.constant 0 : index
    %c0_10 = arith.constant 0 : index
    %17 = vector.load %arg3[%c0_9, %c0_10] : memref<512x512xf32, #tpu.memory_space<vmem>>, vector<512x512xf32>
    %cst_11 = arith.constant dense<0.000000e+00> : vector<8x512xf32>
    %18 = tpu.matmul %16, %17, %cst_11 {dimension_numbers = #tpu.dot_dimension_numbers<[1], [0], [0], [1], [0, 0, 1, 1], [], []>} : vector<8x512xf32>, vector<512x512xf32>, vector<8x512xf32> -> vector<8x512xf32>
    %c2 = arith.constant 2 : index
    %c0_12 = arith.constant 0 : index
    %19 = vector.load %arg5[%c2, %c0_12] : memref<4x512xf32, #tpu.memory_space<vmem>>, vector<1x512xf32>
    %20 = vector.broadcast %19 : vector<1x512xf32> to vector<8x512xf32>
    %21 = arith.addf %18, %20 : vector<8x512xf32>
    %cst_13 = arith.constant 0.000000e+00 : f32
    %22 = vector.broadcast %cst_13 : f32 to vector<8x512xf32>
    %23 = arith.cmpf ogt, %21, %22 : vector<8x512xf32>
    %cst_14 = arith.constant 2.000000e-01 : f32
    %24 = vector.broadcast %cst_14 : f32 to vector<8x512xf32>
    %25 = arith.mulf %24, %21 : vector<8x512xf32>
    %26 = arith.select %23, %21, %25 : vector<8x512xi1>, vector<8x512xf32>
    %c0_15 = arith.constant 0 : index
    %c0_16 = arith.constant 0 : index
    %27 = vector.load %arg4[%c0_15, %c0_16] : memref<512x512xf32, #tpu.memory_space<vmem>>, vector<512x512xf32>
    %cst_17 = arith.constant dense<0.000000e+00> : vector<8x512xf32>
    %28 = tpu.matmul %26, %27, %cst_17 {dimension_numbers = #tpu.dot_dimension_numbers<[1], [0], [0], [1], [0, 0, 1, 1], [], []>} : vector<8x512xf32>, vector<512x512xf32>, vector<8x512xf32> -> vector<8x512xf32>
    %c3 = arith.constant 3 : index
    %c0_18 = arith.constant 0 : index
    %29 = vector.load %arg5[%c3, %c0_18] : memref<4x512xf32, #tpu.memory_space<vmem>>, vector<1x512xf32>
    %30 = vector.broadcast %29 : vector<1x512xf32> to vector<8x512xf32>
    %31 = arith.addf %28, %30 : vector<8x512xf32>
    %cst_19 = arith.constant 0.000000e+00 : f32
    %32 = vector.broadcast %cst_19 : f32 to vector<8x512xf32>
    %33 = arith.cmpf ogt, %31, %32 : vector<8x512xf32>
    %cst_20 = arith.constant 2.000000e-01 : f32
    %34 = vector.broadcast %cst_20 : f32 to vector<8x512xf32>
    %35 = arith.mulf %34, %31 : vector<8x512xf32>
    %36 = arith.select %33, %31, %35 : vector<8x512xi1>, vector<8x512xf32>
    %37 = vector.extract_strided_slice %36 {offsets = [0, 0], sizes = [1, 512], strides = [1, 1]} : vector<8x512xf32> to vector<1x512xf32>
    %38 = vector.shape_cast %37 : vector<1x512xf32> to vector<1x512xf32>
    %39 = vector.broadcast %38 : vector<1x512xf32> to vector<8x512xf32>
    %c0_21 = arith.constant 0 : index
    %c0_22 = arith.constant 0 : index
    %40 = vector.load %arg6[%c0_21, %c0_22] : memref<8x512xf32, #tpu.memory_space<vmem>>, vector<8x512xf32>
    tpu.vector_store %arg6[%c0_21, %c0_22], %39 {strides = array<i32>} : memref<8x512xf32, #tpu.memory_space<vmem>>, vector<8x512xf32>,
    return
  }
  func.func @transform_0(%arg0: i32) -> (i32, i32) {
    %c0_i32 = arith.constant 0 : i32
    %c0_i32_0 = arith.constant 0 : i32
    %c0_i32_1 = arith.constant 0 : i32
    return %c0_i32, %c0_i32_0 : i32, i32
  }
  func.func @transform_1(%arg0: i32) -> (i32, i32) {
    %c0_i32 = arith.constant 0 : i32
    %c0_i32_0 = arith.constant 0 : i32
    %c0_i32_1 = arith.constant 0 : i32
    return %c0_i32, %c0_i32_0 : i32, i32
  }
  func.func @transform_2(%arg0: i32) -> (i32, i32) {
    %c0_i32 = arith.constant 0 : i32
    %c0_i32_0 = arith.constant 0 : i32
    %c0_i32_1 = arith.constant 0 : i32
    return %c0_i32, %c0_i32_0 : i32, i32
  }
  func.func @transform_3(%arg0: i32) -> (i32, i32) {
    %c0_i32 = arith.constant 0 : i32
    %c0_i32_0 = arith.constant 0 : i32
    %c0_i32_1 = arith.constant 0 : i32
    return %c0_i32, %c0_i32_0 : i32, i32
  }
  func.func @transform_4(%arg0: i32) -> (i32, i32) {
    %c0_i32 = arith.constant 0 : i32
    %c0_i32_0 = arith.constant 0 : i32
    %c0_i32_1 = arith.constant 0 : i32
    return %c0_i32, %c0_i32_0 : i32, i32
  }
  func.func @transform_5(%arg0: i32) -> (i32, i32) {
    %c0_i32 = arith.constant 0 : i32
    %c0_i32_0 = arith.constant 0 : i32
    return %arg0, %c0_i32 : i32, i32
  }
}

</mosaic_0001>

<llo_original>
// kernel: tpu_custom_call.1
$region0: #{tpu_custom_call.1}
  #allocation0 [shape = 'u32[]', space=smem, size = 0x4, offset = 0x4, fixed_abs, tag = 'smem constant byte address 0x4 - core index']
  #allocation1 [shape = 'u32[144,128]{1,0:T(1,128)}', space=vmem, size = 0x12000, scoped, tag = 'internal scratch']
  %s0 = inlined_call_operand.hbm [shape: f32[1024,512], index: 0, kind: input, shape index: {}]
  %s1 = inlined_call_operand.hbm [shape: f32[512,512], index: 1, kind: input, shape index: {}]
  %s2 = inlined_call_operand.hbm [shape: f32[512,512], index: 2, kind: input, shape index: {}]
  %s3 = inlined_call_operand.hbm [shape: f32[512,512], index: 3, kind: input, shape index: {}]
  %s4 = inlined_call_operand.hbm [shape: f32[4,512], index: 4, kind: input, shape index: {}]
  %s5 = inlined_call_operand.hbm [shape: f32[8,512], index: 5, kind: output, shape index: {}]
  %s6 = sld [smem:[#allocation0]]
  $region50: #{tpu_custom_call.1} parent=0
    _
  %s8 = ssub.s32 1, %s6
  %s9 = scalar_select 0, %s8, %s6
  $region1: #{tpu_custom_call.1} parent=0
    #allocation2 [shape = 'u8[2097152]{0}', space=vmem, size = 0x200000, scoped, tag = 'input window, operand 0, single buffered']
    #allocation3 [shape = 's32[1]{0}', space=sflag, size = 0x4, scoped, tag = 'scoped memory for tpu_custom_call.1']
    #allocation4 [shape = 's32[1]{0}', space=sflag, size = 0x4, scoped, tag = 'scoped memory for tpu_custom_call.1']
    #allocation5 [shape = 'u8[1048576]{0}', space=vmem, size = 0x100000, scoped, tag = 'input window, operand 1, single buffered']
    #allocation6 [shape = 's32[1]{0}', space=sflag, size = 0x4, scoped, tag = 'scoped memory for tpu_custom_call.1']
    #allocation7 [shape = 'u8[1048576]{0}', space=vmem, size = 0x100000, scoped, tag = 'input window, operand 2, single buffered']
    #allocation8 [shape = 'u8[1048576]{0}', space=vmem, size = 0x100000, scoped, tag = 'input window, operand 3, single buffered']
    #allocation9 [shape = 's32[1]{0}', space=sflag, size = 0x4, scoped, tag = 'scoped memory for tpu_custom_call.1']
    #allocation10 [shape = 'u8[8192]{0}', space=vmem, size = 0x2000, scoped, tag = 'input window, operand 4, single buffered']
    #allocation11 [shape = 'u8[16384]{0}', space=vmem, size = 0x4000, scoped, tag = 'output window, operand 0, single buffered']
    %10 = vsyncpa [#allocation3], 0
    %11 = vsyncpa [#allocation6], 0
    %12 = vsyncpa [#allocation9], 0
    %13 = vsyncpa [#allocation4], 0
    // Predicated region
    $region2: #{tpu_custom_call.1} parent=1 // pred_check
      _
    $region3: #{tpu_custom_call.1} parent=1 // pred_check_branch
      %15 = sbr.rel (0) target = $region5
    $region4: #{tpu_custom_call.1} parent=1 // pred_region
      %s17 = ssub.s32 65536, 65536
      %18 = vsyncadd [#allocation3], %s17
      %s19 = sshll.u32 [#allocation2], 4
      %s20 = int_to_ptr.vmem [resolvable:$true] %s19
      %25 = dma.hbm_to_vmem [thread:$0]  %s0, 65536, %s20, [#allocation3], 512, 512, 32
    $region5: #{tpu_custom_call.1} parent=1 // pred_fallthru
      _
    // Predicated region
    $region6: #{tpu_custom_call.1} parent=1 // pred_check
      _
    $region7: #{tpu_custom_call.1} parent=1 // pred_check_branch
      %27 = sbr.rel (0) target = $region9
    $region8: #{tpu_custom_call.1} parent=1 // pred_region
      %s29 = ssub.s32 32768, 32768
      %30 = vsyncadd [#allocation6], %s29
      %s31 = sshll.u32 [#allocation5], 4
      %s32 = int_to_ptr.vmem [resolvable:$true] %s31
      %37 = dma.hbm_to_vmem [thread:$0]  %s1, 32768, %s32, [#allocation6], 512, 512, 32
    $region9: #{tpu_custom_call.1} parent=1 // pred_fallthru
      _
    // Predicated region
    $region10: #{tpu_custom_call.1} parent=1 // pred_check
      _
    $region11: #{tpu_custom_call.1} parent=1 // pred_check_branch
      %39 = sbr.rel (0) target = $region13
    $region12: #{tpu_custom_call.1} parent=1 // pred_region
      %s41 = ssub.s32 32768, 32768
      %42 = vsyncadd [#allocation6], %s41
      %s43 = sshll.u32 [#allocation7], 4
      %s44 = int_to_ptr.vmem [resolvable:$true] %s43
      %49 = dma.hbm_to_vmem [thread:$0]  %s2, 32768, %s44, [#allocation6], 512, 512, 32
    $region13: #{tpu_custom_call.1} parent=1 // pred_fallthru
      _
    // Predicated region
    $region14: #{tpu_custom_call.1} parent=1 // pred_check
      _
    $region15: #{tpu_custom_call.1} parent=1 // pred_check_branch
      %51 = sbr.rel (0) target = $region17
    $region16: #{tpu_custom_call.1} parent=1 // pred_region
      %s53 = ssub.s32 32768, 32768
      %54 = vsyncadd [#allocation9], %s53
      %s55 = sshll.u32 [#allocation8], 4
      %s56 = int_to_ptr.vmem [resolvable:$true] %s55
      %61 = dma.hbm_to_vmem [thread:$0]  %s3, 32768, %s56, [#allocation9], 512, 512, 32
    $region17: #{tpu_custom_call.1} parent=1 // pred_fallthru
      _
    // Predicated region
    $region18: #{tpu_custom_call.1} parent=1 // pred_check
      _
    $region19: #{tpu_custom_call.1} parent=1 // pred_check_branch
      %63 = sbr.rel (0) target = $region21
    $region20: #{tpu_custom_call.1} parent=1 // pred_region
      %s65 = ssub.s32 256, 256
      %66 = vsyncadd [#allocation9], %s65
      %s68 = sshll.u32 [#allocation10], 4
      %s69 = int_to_ptr.vmem [resolvable:$true] %s68
      %71 = dma.hbm_to_vmem [thread:$0]  %s4, 256, %s69, [#allocation9]
    $region21: #{tpu_custom_call.1} parent=1 // pred_fallthru
      _
    // Predicated region
    $region22: #{tpu_custom_call.1} parent=1 // pred_check
      _
    $region23: #{tpu_custom_call.1} parent=1 // pred_check_branch
      %73 = sbr.rel (0) target = $region25
    $region24: #{tpu_custom_call.1} parent=1 // pred_region
      %74 = dma.done [#allocation3], 65536
    $region25: #{tpu_custom_call.1} parent=1 // pred_fallthru
      _
    // Predicated region
    $region26: #{tpu_custom_call.1} parent=1 // pred_check
      _
    $region27: #{tpu_custom_call.1} parent=1 // pred_check_branch
      %76 = sbr.rel (0) target = $region29
    $region28: #{tpu_custom_call.1} parent=1 // pred_region
      %77 = dma.done [#allocation6], 32768
    $region29: #{tpu_custom_call.1} parent=1 // pred_fallthru
      _
    // Predicated region
    $region30: #{tpu_custom_call.1} parent=1 // pred_check
      _
    $region31: #{tpu_custom_call.1} parent=1 // pred_check_branch
      %79 = sbr.rel (0) target = $region33
    $region32: #{tpu_custom_call.1} parent=1 // pred_region
      %80 = dma.done [#allocation6], 32768
    $region33: #{tpu_custom_call.1} parent=1 // pred_fallthru
      _
    // Predicated region
    $region34: #{tpu_custom_call.1} parent=1 // pred_check
      _
    $region35: #{tpu_custom_call.1} parent=1 // pred_check_branch
      %82 = sbr.rel (0) target = $region37
    $region36: #{tpu_custom_call.1} parent=1 // pred_region
      %83 = dma.done [#allocation9], 32768
    $region37: #{tpu_custom_call.1} parent=1 // pred_fallthru
      _
    // Predicated region
    $region38: #{tpu_custom_call.1} parent=1 // pred_check
      _
    $region39: #{tpu_custom_call.1} parent=1 // pred_check_branch
      %85 = sbr.rel (0) target = $region41
    $region40: #{tpu_custom_call.1} parent=1 // pred_region
      %86 = dma.done [#allocation9], 256
    $region41: #{tpu_custom_call.1} parent=1 // pred_fallthru
      _
    %v87 = vld [vmem:[#allocation2] sm:$0xff]
    %v88 = vld [vmem:[#allocation2 + $0x8] sm:$0xff]
    %v89 = vld [vmem:[#allocation2 + $0x10] sm:$0xff]
    %v90 = vld [vmem:[#allocation2 + $0x18] sm:$0xff]
    %v91 = vld [vmem:[#allocation2 + $0x20] sm:$0xff]
    %v92 = vld [vmem:[#allocation2 + $0x28] sm:$0xff]
    %v93 = vld [vmem:[#allocation2 + $0x30] sm:$0xff]
    %v94 = vld [vmem:[#allocation2 + $0x38] sm:$0xff]
    %v95 = vld [vmem:[#allocation2 + $0x40] sm:$0xff]
    %v96 = vld [vmem:[#allocation2 + $0x48] sm:$0xff]
    %v97 = vld [vmem:[#allocation2 + $0x50] sm:$0xff]
    %v98 = vld [vmem:[#allocation2 + $0x58] sm:$0xff]
    %v99 = vld [vmem:[#allocation2 + $0x60] sm:$0xff]
    %v100 = vld [vmem:[#allocation2 + $0x68] sm:$0xff]
    %v101 = vld [vmem:[#allocation2 + $0x70] sm:$0xff]
    %v102 = vld [vmem:[#allocation2 + $0x78] sm:$0xff]
    %v103 = vld [vmem:[#allocation2 + $0x80] sm:$0xff]
    %v104 = vld [vmem:[#allocation2 + $0x88] sm:$0xff]
    %v105 = vld [vmem:[#allocation2 + $0x90] sm:$0xff]
    %v106 = vld [vmem:[#allocation2 + $0x98] sm:$0xff]
    %v107 = vld [vmem:[#allocation2 + $0xa0] sm:$0xff]
    %v108 = vld [vmem:[#allocation2 + $0xa8] sm:$0xff]
    %v109 = vld [vmem:[#allocation2 + $0xb0] sm:$0xff]
    %v110 = vld [vmem:[#allocation2 + $0xb8] sm:$0xff]
    %v111 = vld [vmem:[#allocation2 + $0xc0] sm:$0xff]
    %v112 = vld [vmem:[#allocation2 + $0xc8] sm:$0xff]
    %v113 = vld [vmem:[#allocation2 + $0xd0] sm:$0xff]
    %v114 = vld [vmem:[#allocation2 + $0xd8] sm:$0xff]
    %v115 = vld [vmem:[#allocation2 + $0xe0] sm:$0xff]
    %v116 = vld [vmem:[#allocation2 + $0xe8] sm:$0xff]
    %v117 = vld [vmem:[#allocation2 + $0xf0] sm:$0xff]
    %v118 = vld [vmem:[#allocation2 + $0xf8] sm:$0xff]
    %v119 = vld [vmem:[#allocation2 + $0x100] sm:$0xff]
    %v120 = vld [vmem:[#allocation2 + $0x108] sm:$0xff]
    %v121 = vld [vmem:[#allocation2 + $0x110] sm:$0xff]
    %v122 = vld [vmem:[#allocation2 + $0x118] sm:$0xff]
    %v123 = vld [vmem:[#allocation2 + $0x120] sm:$0xff]
    %v124 = vld [vmem:[#allocation2 + $0x128] sm:$0xff]
    %v125 = vld [vmem:[#allocation2 + $0x130] sm:$0xff]
    %v126 = vld [vmem:[#allocation2 + $0x138] sm:$0xff]
    %v127 = vld [vmem:[#allocation2 + $0x140] sm:$0xff]
    %v128 = vld [vmem:[#allocation2 + $0x148] sm:$0xff]
    %v129 = vld [vmem:[#allocation2 + $0x150] sm:$0xff]
    %v130 = vld [vmem:[#allocation2 + $0x158] sm:$0xff]
    %v131 = vld [vmem:[#allocation2 + $0x160] sm:$0xff]
    %v132 = vld [vmem:[#allocation2 + $0x168] sm:$0xff]
    %v133 = vld [vmem:[#allocation2 + $0x170] sm:$0xff]
    %v134 = vld [vmem:[#allocation2 + $0x178] sm:$0xff]
    %v135 = vld [vmem:[#allocation2 + $0x180] sm:$0xff]
    %v136 = vld [vmem:[#allocation2 + $0x188] sm:$0xff]
    %v137 = vld [vmem:[#allocation2 + $0x190] sm:$0xff]
    %v138 = vld [vmem:[#allocation2 + $0x198] sm:$0xff]
    %v139 = vld [vmem:[#allocation2 + $0x1a0] sm:$0xff]
    %v140 = vld [vmem:[#allocation2 + $0x1a8] sm:$0xff]
    %v141 = vld [vmem:[#allocation2 + $0x1b0] sm:$0xff]
    %v142 = vld [vmem:[#allocation2 + $0x1b8] sm:$0xff]
    %v143 = vld [vmem:[#allocation2 + $0x1c0] sm:$0xff]
    %v144 = vld [vmem:[#allocation2 + $0x1c8] sm:$0xff]
    %v145 = vld [vmem:[#allocation2 + $0x1d0] sm:$0xff]
    %v146 = vld [vmem:[#allocation2 + $0x1d8] sm:$0xff]
    %v147 = vld [vmem:[#allocation2 + $0x1e0] sm:$0xff]
    %v148 = vld [vmem:[#allocation2 + $0x1e8] sm:$0xff]
    %v149 = vld [vmem:[#allocation2 + $0x1f0] sm:$0xff]
    %v150 = vld [vmem:[#allocation2 + $0x1f8] sm:$0xff]
    %v151 = vld [vmem:[#allocation2 + $0x200] sm:$0xff]
    %v152 = vld [vmem:[#allocation2 + $0x208] sm:$0xff]
    %v153 = vld [vmem:[#allocation2 + $0x210] sm:$0xff]
    %v154 = vld [vmem:[#allocation2 + $0x218] sm:$0xff]
    %v155 = vld [vmem:[#allocation2 + $0x220] sm:$0xff]
    %v156 = vld [vmem:[#allocation2 + $0x228] sm:$0xff]
    %v157 = vld [vmem:[#allocation2 + $0x230] sm:$0xff]
    %v158 = vld [vmem:[#allocation2 + $0x238] sm:$0xff]
    %v159 = vld [vmem:[#allocation2 + $0x240] sm:$0xff]
    %v160 = vld [vmem:[#allocation2 + $0x248] sm:$0xff]
    %v161 = vld [vmem:[#allocation2 + $0x250] sm:$0xff]
    %v162 = vld [vmem:[#allocation2 + $0x258] sm:$0xff]
    %v163 = vld [vmem:[#allocation2 + $0x260] sm:$0xff]
    %v164 = vld [vmem:[#allocation2 + $0x268] sm:$0xff]
    %v165 = vld [vmem:[#allocation2 + $0x270] sm:$0xff]
    %v166 = vld [vmem:[#allocation2 + $0x278] sm:$0xff]
    %v167 = vld [vmem:[#allocation2 + $0x280] sm:$0xff]
    %v168 = vld [vmem:[#allocation2 + $0x288] sm:$0xff]
    %v169 = vld [vmem:[#allocation2 + $0x290] sm:$0xff]
    %v170 = vld [vmem:[#allocation2 + $0x298] sm:$0xff]
    %v171 = vld [vmem:[#allocation2 + $0x2a0] sm:$0xff]
    %v172 = vld [vmem:[#allocation2 + $0x2a8] sm:$0xff]
    %v173 = vld [vmem:[#allocation2 + $0x2b0] sm:$0xff]
    %v174 = vld [vmem:[#allocation2 + $0x2b8] sm:$0xff]
    %v175 = vld [vmem:[#allocation2 + $0x2c0] sm:$0xff]
    %v176 = vld [vmem:[#allocation2 + $0x2c8] sm:$0xff]
    %v177 = vld [vmem:[#allocation2 + $0x2d0] sm:$0xff]
    %v178 = vld [vmem:[#allocation2 + $0x2d8] sm:$0xff]
    %v179 = vld [vmem:[#allocation2 + $0x2e0] sm:$0xff]
    %v180 = vld [vmem:[#allocation2 + $0x2e8] sm:$0xff]
    %v181 = vld [vmem:[#allocation2 + $0x2f0] sm:$0xff]
    %v182 = vld [vmem:[#allocation2 + $0x2f8] sm:$0xff]
    %v183 = vld [vmem:[#allocation2 + $0x300] sm:$0xff]
    %v184 = vld [vmem:[#allocation2 + $0x308] sm:$0xff]
    %v185 = vld [vmem:[#allocation2 + $0x310] sm:$0xff]
    %v186 = vld [vmem:[#allocation2 + $0x318] sm:$0xff]
    %v187 = vld [vmem:[#allocation2 + $0x320] sm:$0xff]
    %v188 = vld [vmem:[#allocation2 + $0x328] sm:$0xff]
    %v189 = vld [vmem:[#allocation2 + $0x330] sm:$0xff]
    %v190 = vld [vmem:[#allocation2 + $0x338] sm:$0xff]
    %v191 = vld [vmem:[#allocation2 + $0x340] sm:$0xff]
    %v192 = vld [vmem:[#allocation2 + $0x348] sm:$0xff]
    %v193 = vld [vmem:[#allocation2 + $0x350] sm:$0xff]
    %v194 = vld [vmem:[#allocation2 + $0x358] sm:$0xff]
    %v195 = vld [vmem:[#allocation2 + $0x360] sm:$0xff]
    %v196 = vld [vmem:[#allocation2 + $0x368] sm:$0xff]
    %v197 = vld [vmem:[#allocation2 + $0x370] sm:$0xff]
    %v198 = vld [vmem:[#allocation2 + $0x378] sm:$0xff]
    %v199 = vld [vmem:[#allocation2 + $0x380] sm:$0xff]
    %v200 = vld [vmem:[#allocation2 + $0x388] sm:$0xff]
    %v201 = vld [vmem:[#allocation2 + $0x390] sm:$0xff]
    %v202 = vld [vmem:[#allocation2 + $0x398] sm:$0xff]
    %v203 = vld [vmem:[#allocation2 + $0x3a0] sm:$0xff]
    %v204 = vld [vmem:[#allocation2 + $0x3a8] sm:$0xff]
    %v205 = vld [vmem:[#allocation2 + $0x3b0] sm:$0xff]
    %v206 = vld [vmem:[#allocation2 + $0x3b8] sm:$0xff]
    %v207 = vld [vmem:[#allocation2 + $0x3c0] sm:$0xff]
    %v208 = vld [vmem:[#allocation2 + $0x3c8] sm:$0xff]
    %v209 = vld [vmem:[#allocation2 + $0x3d0] sm:$0xff]
    %v210 = vld [vmem:[#allocation2 + $0x3d8] sm:$0xff]
    %v211 = vld [vmem:[#allocation2 + $0x3e0] sm:$0xff]
    %v212 = vld [vmem:[#allocation2 + $0x3e8] sm:$0xff]
    %v213 = vld [vmem:[#allocation2 + $0x3f0] sm:$0xff]
    %v214 = vld [vmem:[#allocation2 + $0x3f8] sm:$0xff]
    %v215 = vld [vmem:[#allocation2 + $0x400] sm:$0xff]
    %v216 = vld [vmem:[#allocation2 + $0x408] sm:$0xff]
    %v217 = vld [vmem:[#allocation2 + $0x410] sm:$0xff]
    %v218 = vld [vmem:[#allocation2 + $0x418] sm:$0xff]
    %v219 = vld [vmem:[#allocation2 + $0x420] sm:$0xff]
    %v220 = vld [vmem:[#allocation2 + $0x428] sm:$0xff]
    %v221 = vld [vmem:[#allocation2 + $0x430] sm:$0xff]
    %v222 = vld [vmem:[#allocation2 + $0x438] sm:$0xff]
    %v223 = vld [vmem:[#allocation2 + $0x440] sm:$0xff]
    %v224 = vld [vmem:[#allocation2 + $0x448] sm:$0xff]
    %v225 = vld [vmem:[#allocation2 + $0x450] sm:$0xff]
    %v226 = vld [vmem:[#allocation2 + $0x458] sm:$0xff]
    %v227 = vld [vmem:[#allocation2 + $0x460] sm:$0xff]
    %v228 = vld [vmem:[#allocation2 + $0x468] sm:$0xff]
    %v229 = vld [vmem:[#allocation2 + $0x470] sm:$0xff]
    %v230 = vld [vmem:[#allocation2 + $0x478] sm:$0xff]
    %v231 = vld [vmem:[#allocation2 + $0x480] sm:$0xff]
    %v232 = vld [vmem:[#allocation2 + $0x488] sm:$0xff]
    %v233 = vld [vmem:[#allocation2 + $0x490] sm:$0xff]
    %v234 = vld [vmem:[#allocation2 + $0x498] sm:$0xff]
    %v235 = vld [vmem:[#allocation2 + $0x4a0] sm:$0xff]
    %v236 = vld [vmem:[#allocation2 + $0x4a8] sm:$0xff]
    %v237 = vld [vmem:[#allocation2 + $0x4b0] sm:$0xff]
    %v238 = vld [vmem:[#allocation2 + $0x4b8] sm:$0xff]
    %v239 = vld [vmem:[#allocation2 + $0x4c0] sm:$0xff]
    %v240 = vld [vmem:[#allocation2 + $0x4c8] sm:$0xff]
    %v241 = vld [vmem:[#allocation2 + $0x4d0] sm:$0xff]
    %v242 = vld [vmem:[#allocation2 + $0x4d8] sm:$0xff]
    %v243 = vld [vmem:[#allocation2 + $0x4e0] sm:$0xff]
    %v244 = vld [vmem:[#allocation2 + $0x4e8] sm:$0xff]
    %v245 = vld [vmem:[#allocation2 + $0x4f0] sm:$0xff]
    %v246 = vld [vmem:[#allocation2 + $0x4f8] sm:$0xff]
    %v247 = vld [vmem:[#allocation2 + $0x500] sm:$0xff]
    %v248 = vld [vmem:[#allocation2 + $0x508] sm:$0xff]
    %v249 = vld [vmem:[#allocation2 + $0x510] sm:$0xff]
    %v250 = vld [vmem:[#allocation2 + $0x518] sm:$0xff]
    %v251 = vld [vmem:[#allocation2 + $0x520] sm:$0xff]
    %v252 = vld [vmem:[#allocation2 + $0x528] sm:$0xff]
    %v253 = vld [vmem:[#allocation2 + $0x530] sm:$0xff]
    %v254 = vld [vmem:[#allocation2 + $0x538] sm:$0xff]
    %v255 = vld [vmem:[#allocation2 + $0x540] sm:$0xff]
    %v256 = vld [vmem:[#allocation2 + $0x548] sm:$0xff]
    %v257 = vld [vmem:[#allocation2 + $0x550] sm:$0xff]
    %v258 = vld [vmem:[#allocation2 + $0x558] sm:$0xff]
    %v259 = vld [vmem:[#allocation2 + $0x560] sm:$0xff]
    %v260 = vld [vmem:[#allocation2 + $0x568] sm:$0xff]
    %v261 = vld [vmem:[#allocation2 + $0x570] sm:$0xff]
    %v262 = vld [vmem:[#allocation2 + $0x578] sm:$0xff]
    %v263 = vld [vmem:[#allocation2 + $0x580] sm:$0xff]
    %v264 = vld [vmem:[#allocation2 + $0x588] sm:$0xff]
    %v265 = vld [vmem:[#allocation2 + $0x590] sm:$0xff]
    %v266 = vld [vmem:[#allocation2 + $0x598] sm:$0xff]
    %v267 = vld [vmem:[#allocation2 + $0x5a0] sm:$0xff]
    %v268 = vld [vmem:[#allocation2 + $0x5a8] sm:$0xff]
    %v269 = vld [vmem:[#allocation2 + $0x5b0] sm:$0xff]
    %v270 = vld [vmem:[#allocation2 + $0x5b8] sm:$0xff]
    %v271 = vld [vmem:[#allocation2 + $0x5c0] sm:$0xff]
    %v272 = vld [vmem:[#allocation2 + $0x5c8] sm:$0xff]
    %v273 = vld [vmem:[#allocation2 + $0x5d0] sm:$0xff]
    %v274 = vld [vmem:[#allocation2 + $0x5d8] sm:$0xff]
    %v275 = vld [vmem:[#allocation2 + $0x5e0] sm:$0xff]
    %v276 = vld [vmem:[#allocation2 + $0x5e8] sm:$0xff]
    %v277 = vld [vmem:[#allocation2 + $0x5f0] sm:$0xff]
    %v278 = vld [vmem:[#allocation2 + $0x5f8] sm:$0xff]
    %v279 = vld [vmem:[#allocation2 + $0x600] sm:$0xff]
    %v280 = vld [vmem:[#allocation2 + $0x608] sm:$0xff]
    %v281 = vld [vmem:[#allocation2 + $0x610] sm:$0xff]
    %v282 = vld [vmem:[#allocation2 + $0x618] sm:$0xff]
    %v283 = vld [vmem:[#allocation2 + $0x620] sm:$0xff]
    %v284 = vld [vmem:[#allocation2 + $0x628] sm:$0xff]
    %v285 = vld [vmem:[#allocation2 + $0x630] sm:$0xff]
    %v286 = vld [vmem:[#allocation2 + $0x638] sm:$0xff]
    %v287 = vld [vmem:[#allocation2 + $0x640] sm:$0xff]
    %v288 = vld [vmem:[#allocation2 + $0x648] sm:$0xff]
    %v289 = vld [vmem:[#allocation2 + $0x650] sm:$0xff]
    %v290 = vld [vmem:[#allocation2 + $0x658] sm:$0xff]
    %v291 = vld [vmem:[#allocation2 + $0x660] sm:$0xff]
    %v292 = vld [vmem:[#allocation2 + $0x668] sm:$0xff]
    %v293 = vld [vmem:[#allocation2 + $0x670] sm:$0xff]
    %v294 = vld [vmem:[#allocation2 + $0x678] sm:$0xff]
    %v295 = vld [vmem:[#allocation2 + $0x680] sm:$0xff]
    %v296 = vld [vmem:[#allocation2 + $0x688] sm:$0xff]
    %v297 = vld [vmem:[#allocation2 + $0x690] sm:$0xff]
    %v298 = vld [vmem:[#allocation2 + $0x698] sm:$0xff]
    %v299 = vld [vmem:[#allocation2 + $0x6a0] sm:$0xff]
    %v300 = vld [vmem:[#allocation2 + $0x6a8] sm:$0xff]
    %v301 = vld [vmem:[#allocation2 + $0x6b0] sm:$0xff]
    %v302 = vld [vmem:[#allocation2 + $0x6b8] sm:$0xff]
    %v303 = vld [vmem:[#allocation2 + $0x6c0] sm:$0xff]
    %v304 = vld [vmem:[#allocation2 + $0x6c8] sm:$0xff]
    %v305 = vld [vmem:[#allocation2 + $0x6d0] sm:$0xff]
    %v306 = vld [vmem:[#allocation2 + $0x6d8] sm:$0xff]
    %v307 = vld [vmem:[#allocation2 + $0x6e0] sm:$0xff]
    %v308 = vld [vmem:[#allocation2 + $0x6e8] sm:$0xff]
    %v309 = vld [vmem:[#allocation2 + $0x6f0] sm:$0xff]
    %v310 = vld [vmem:[#allocation2 + $0x6f8] sm:$0xff]
    %v311 = vld [vmem:[#allocation2 + $0x700] sm:$0xff]
    %v312 = vld [vmem:[#allocation2 + $0x708] sm:$0xff]
    %v313 = vld [vmem:[#allocation2 + $0x710] sm:$0xff]
    %v314 = vld [vmem:[#allocation2 + $0x718] sm:$0xff]
    %v315 = vld [vmem:[#allocation2 + $0x720] sm:$0xff]
    %v316 = vld [vmem:[#allocation2 + $0x728] sm:$0xff]
    %v317 = vld [vmem:[#allocation2 + $0x730] sm:$0xff]
    %v318 = vld [vmem:[#allocation2 + $0x738] sm:$0xff]
    %v319 = vld [vmem:[#allocation2 + $0x740] sm:$0xff]
    %v320 = vld [vmem:[#allocation2 + $0x748] sm:$0xff]
    %v321 = vld [vmem:[#allocation2 + $0x750] sm:$0xff]
    %v322 = vld [vmem:[#allocation2 + $0x758] sm:$0xff]
    %v323 = vld [vmem:[#allocation2 + $0x760] sm:$0xff]
    %v324 = vld [vmem:[#allocation2 + $0x768] sm:$0xff]
    %v325 = vld [vmem:[#allocation2 + $0x770] sm:$0xff]
    %v326 = vld [vmem:[#allocation2 + $0x778] sm:$0xff]
    %v327 = vld [vmem:[#allocation2 + $0x780] sm:$0xff]
    %v328 = vld [vmem:[#allocation2 + $0x788] sm:$0xff]
    %v329 = vld [vmem:[#allocation2 + $0x790] sm:$0xff]
    %v330 = vld [vmem:[#allocation2 + $0x798] sm:$0xff]
    %v331 = vld [vmem:[#allocation2 + $0x7a0] sm:$0xff]
    %v332 = vld [vmem:[#allocation2 + $0x7a8] sm:$0xff]
    %v333 = vld [vmem:[#allocation2 + $0x7b0] sm:$0xff]
    %v334 = vld [vmem:[#allocation2 + $0x7b8] sm:$0xff]
    %v335 = vld [vmem:[#allocation2 + $0x7c0] sm:$0xff]
    %v336 = vld [vmem:[#allocation2 + $0x7c8] sm:$0xff]
    %v337 = vld [vmem:[#allocation2 + $0x7d0] sm:$0xff]
    %v338 = vld [vmem:[#allocation2 + $0x7d8] sm:$0xff]
    %v339 = vld [vmem:[#allocation2 + $0x7e0] sm:$0xff]
    %v340 = vld [vmem:[#allocation2 + $0x7e8] sm:$0xff]
    %v341 = vld [vmem:[#allocation2 + $0x7f0] sm:$0xff]
    %v342 = vld [vmem:[#allocation2 + $0x7f8] sm:$0xff]
    %v343 = vld [vmem:[#allocation2 + $0x800] sm:$0xff]
    %v344 = vld [vmem:[#allocation2 + $0x808] sm:$0xff]
    %v345 = vld [vmem:[#allocation2 + $0x810] sm:$0xff]
    %v346 = vld [vmem:[#allocation2 + $0x818] sm:$0xff]
    %v347 = vld [vmem:[#allocation2 + $0x820] sm:$0xff]
    %v348 = vld [vmem:[#allocation2 + $0x828] sm:$0xff]
    %v349 = vld [vmem:[#allocation2 + $0x830] sm:$0xff]
    %v350 = vld [vmem:[#allocation2 + $0x838] sm:$0xff]
    %v351 = vld [vmem:[#allocation2 + $0x840] sm:$0xff]
    %v352 = vld [vmem:[#allocation2 + $0x848] sm:$0xff]
    %v353 = vld [vmem:[#allocation2 + $0x850] sm:$0xff]
    %v354 = vld [vmem:[#allocation2 + $0x858] sm:$0xff]
    %v355 = vld [vmem:[#allocation2 + $0x860] sm:$0xff]
    %v356 = vld [vmem:[#allocation2 + $0x868] sm:$0xff]
    %v357 = vld [vmem:[#allocation2 + $0x870] sm:$0xff]
    %v358 = vld [vmem:[#allocation2 + $0x878] sm:$0xff]
    %v359 = vld [vmem:[#allocation2 + $0x880] sm:$0xff]
    %v360 = vld [vmem:[#allocation2 + $0x888] sm:$0xff]
    %v361 = vld [vmem:[#allocation2 + $0x890] sm:$0xff]
    %v362 = vld [vmem:[#allocation2 + $0x898] sm:$0xff]
    %v363 = vld [vmem:[#allocation2 + $0x8a0] sm:$0xff]
    %v364 = vld [vmem:[#allocation2 + $0x8a8] sm:$0xff]
    %v365 = vld [vmem:[#allocation2 + $0x8b0] sm:$0xff]
    %v366 = vld [vmem:[#allocation2 + $0x8b8] sm:$0xff]
    %v367 = vld [vmem:[#allocation2 + $0x8c0] sm:$0xff]
    %v368 = vld [vmem:[#allocation2 + $0x8c8] sm:$0xff]
    %v369 = vld [vmem:[#allocation2 + $0x8d0] sm:$0xff]
    %v370 = vld [vmem:[#allocation2 + $0x8d8] sm:$0xff]
    %v371 = vld [vmem:[#allocation2 + $0x8e0] sm:$0xff]
    %v372 = vld [vmem:[#allocation2 + $0x8e8] sm:$0xff]
    %v373 = vld [vmem:[#allocation2 + $0x8f0] sm:$0xff]
    %v374 = vld [vmem:[#allocation2 + $0x8f8] sm:$0xff]
    %v375 = vld [vmem:[#allocation2 + $0x900] sm:$0xff]
    %v376 = vld [vmem:[#allocation2 + $0x908] sm:$0xff]
    %v377 = vld [vmem:[#allocation2 + $0x910] sm:$0xff]
    %v378 = vld [vmem:[#allocation2 + $0x918] sm:$0xff]
    %v379 = vld [vmem:[#allocation2 + $0x920] sm:$0xff]
    %v380 = vld [vmem:[#allocation2 + $0x928] sm:$0xff]
    %v381 = vld [vmem:[#allocation2 + $0x930] sm:$0xff]
    %v382 = vld [vmem:[#allocation2 + $0x938] sm:$0xff]
    %v383 = vld [vmem:[#allocation2 + $0x940] sm:$0xff]
    %v384 = vld [vmem:[#allocation2 + $0x948] sm:$0xff]
    %v385 = vld [vmem:[#allocation2 + $0x950] sm:$0xff]
    %v386 = vld [vmem:[#allocation2 + $0x958] sm:$0xff]
    %v387 = vld [vmem:[#allocation2 + $0x960] sm:$0xff]
    %v388 = vld [vmem:[#allocation2 + $0x968] sm:$0xff]
    %v389 = vld [vmem:[#allocation2 + $0x970] sm:$0xff]
    %v390 = vld [vmem:[#allocation2 + $0x978] sm:$0xff]
    %v391 = vld [vmem:[#allocation2 + $0x980] sm:$0xff]
    %v392 = vld [vmem:[#allocation2 + $0x988] sm:$0xff]
    %v393 = vld [vmem:[#allocation2 + $0x990] sm:$0xff]
    %v394 = vld [vmem:[#allocation2 + $0x998] sm:$0xff]
    %v395 = vld [vmem:[#allocation2 + $0x9a0] sm:$0xff]
    %v396 = vld [vmem:[#allocation2 + $0x9a8] sm:$0xff]
    %v397 = vld [vmem:[#allocation2 + $0x9b0] sm:$0xff]
    %v398 = vld [vmem:[#allocation2 + $0x9b8] sm:$0xff]
    %v399 = vld [vmem:[#allocation2 + $0x9c0] sm:$0xff]
    %v400 = vld [vmem:[#allocation2 + $0x9c8] sm:$0xff]
    %v401 = vld [vmem:[#allocation2 + $0x9d0] sm:$0xff]
    %v402 = vld [vmem:[#allocation2 + $0x9d8] sm:$0xff]
    %v403 = vld [vmem:[#allocation2 + $0x9e0] sm:$0xff]
    %v404 = vld [vmem:[#allocation2 + $0x9e8] sm:$0xff]
    %v405 = vld [vmem:[#allocation2 + $0x9f0] sm:$0xff]
    %v406 = vld [vmem:[#allocation2 + $0x9f8] sm:$0xff]
    %v407 = vld [vmem:[#allocation2 + $0xa00] sm:$0xff]
    %v408 = vld [vmem:[#allocation2 + $0xa08] sm:$0xff]
    %v409 = vld [vmem:[#allocation2 + $0xa10] sm:$0xff]
    %v410 = vld [vmem:[#allocation2 + $0xa18] sm:$0xff]
    %v411 = vld [vmem:[#allocation2 + $0xa20] sm:$0xff]
    %v412 = vld [vmem:[#allocation2 + $0xa28] sm:$0xff]
    %v413 = vld [vmem:[#allocation2 + $0xa30] sm:$0xff]
    %v414 = vld [vmem:[#allocation2 + $0xa38] sm:$0xff]
    %v415 = vld [vmem:[#allocation2 + $0xa40] sm:$0xff]
    %v416 = vld [vmem:[#allocation2 + $0xa48] sm:$0xff]
    %v417 = vld [vmem:[#allocation2 + $0xa50] sm:$0xff]
    %v418 = vld [vmem:[#allocation2 + $0xa58] sm:$0xff]
    %v419 = vld [vmem:[#allocation2 + $0xa60] sm:$0xff]
    %v420 = vld [vmem:[#allocation2 + $0xa68] sm:$0xff]
    %v421 = vld [vmem:[#allocation2 + $0xa70] sm:$0xff]
    %v422 = vld [vmem:[#allocation2 + $0xa78] sm:$0xff]
    %v423 = vld [vmem:[#allocation2 + $0xa80] sm:$0xff]
    %v424 = vld [vmem:[#allocation2 + $0xa88] sm:$0xff]
    %v425 = vld [vmem:[#allocation2 + $0xa90] sm:$0xff]
    %v426 = vld [vmem:[#allocation2 + $0xa98] sm:$0xff]
    %v427 = vld [vmem:[#allocation2 + $0xaa0] sm:$0xff]
    %v428 = vld [vmem:[#allocation2 + $0xaa8] sm:$0xff]
    %v429 = vld [vmem:[#allocation2 + $0xab0] sm:$0xff]
    %v430 = vld [vmem:[#allocation2 + $0xab8] sm:$0xff]
    %v431 = vld [vmem:[#allocation2 + $0xac0] sm:$0xff]
    %v432 = vld [vmem:[#allocation2 + $0xac8] sm:$0xff]
    %v433 = vld [vmem:[#allocation2 + $0xad0] sm:$0xff]
    %v434 = vld [vmem:[#allocation2 + $0xad8] sm:$0xff]
    %v435 = vld [vmem:[#allocation2 + $0xae0] sm:$0xff]
    %v436 = vld [vmem:[#allocation2 + $0xae8] sm:$0xff]
    %v437 = vld [vmem:[#allocation2 + $0xaf0] sm:$0xff]
    %v438 = vld [vmem:[#allocation2 + $0xaf8] sm:$0xff]
    %v439 = vld [vmem:[#allocation2 + $0xb00] sm:$0xff]
    %v440 = vld [vmem:[#allocation2 + $0xb08] sm:$0xff]
    %v441 = vld [vmem:[#allocation2 + $0xb10] sm:$0xff]
    %v442 = vld [vmem:[#allocation2 + $0xb18] sm:$0xff]
    %v443 = vld [vmem:[#allocation2 + $0xb20] sm:$0xff]
    %v444 = vld [vmem:[#allocation2 + $0xb28] sm:$0xff]
    %v445 = vld [vmem:[#allocation2 + $0xb30] sm:$0xff]
    %v446 = vld [vmem:[#allocation2 + $0xb38] sm:$0xff]
    %v447 = vld [vmem:[#allocation2 + $0xb40] sm:$0xff]
    %v448 = vld [vmem:[#allocation2 + $0xb48] sm:$0xff]
    %v449 = vld [vmem:[#allocation2 + $0xb50] sm:$0xff]
    %v450 = vld [vmem:[#allocation2 + $0xb58] sm:$0xff]
    %v451 = vld [vmem:[#allocation2 + $0xb60] sm:$0xff]
    %v452 = vld [vmem:[#allocation2 + $0xb68] sm:$0xff]
    %v453 = vld [vmem:[#allocation2 + $0xb70] sm:$0xff]
    %v454 = vld [vmem:[#allocation2 + $0xb78] sm:$0xff]
    %v455 = vld [vmem:[#allocation2 + $0xb80] sm:$0xff]
    %v456 = vld [vmem:[#allocation2 + $0xb88] sm:$0xff]
    %v457 = vld [vmem:[#allocation2 + $0xb90] sm:$0xff]
    %v458 = vld [vmem:[#allocation2 + $0xb98] sm:$0xff]
    %v459 = vld [vmem:[#allocation2 + $0xba0] sm:$0xff]
    %v460 = vld [vmem:[#allocation2 + $0xba8] sm:$0xff]
    %v461 = vld [vmem:[#allocation2 + $0xbb0] sm:$0xff]
    %v462 = vld [vmem:[#allocation2 + $0xbb8] sm:$0xff]
    %v463 = vld [vmem:[#allocation2 + $0xbc0] sm:$0xff]
    %v464 = vld [vmem:[#allocation2 + $0xbc8] sm:$0xff]
    %v465 = vld [vmem:[#allocation2 + $0xbd0] sm:$0xff]
    %v466 = vld [vmem:[#allocation2 + $0xbd8] sm:$0xff]
    %v467 = vld [vmem:[#allocation2 + $0xbe0] sm:$0xff]
    %v468 = vld [vmem:[#allocation2 + $0xbe8] sm:$0xff]
    %v469 = vld [vmem:[#allocation2 + $0xbf0] sm:$0xff]
    %v470 = vld [vmem:[#allocation2 + $0xbf8] sm:$0xff]
    %v471 = vld [vmem:[#allocation2 + $0xc00] sm:$0xff]
    %v472 = vld [vmem:[#allocation2 + $0xc08] sm:$0xff]
    %v473 = vld [vmem:[#allocation2 + $0xc10] sm:$0xff]
    %v474 = vld [vmem:[#allocation2 + $0xc18] sm:$0xff]
    %v475 = vld [vmem:[#allocation2 + $0xc20] sm:$0xff]
    %v476 = vld [vmem:[#allocation2 + $0xc28] sm:$0xff]
    %v477 = vld [vmem:[#allocation2 + $0xc30] sm:$0xff]
    %v478 = vld [vmem:[#allocation2 + $0xc38] sm:$0xff]
    %v479 = vld [vmem:[#allocation2 + $0xc40] sm:$0xff]
    %v480 = vld [vmem:[#allocation2 + $0xc48] sm:$0xff]
    %v481 = vld [vmem:[#allocation2 + $0xc50] sm:$0xff]
    %v482 = vld [vmem:[#allocation2 + $0xc58] sm:$0xff]
    %v483 = vld [vmem:[#allocation2 + $0xc60] sm:$0xff]
    %v484 = vld [vmem:[#allocation2 + $0xc68] sm:$0xff]
    %v485 = vld [vmem:[#allocation2 + $0xc70] sm:$0xff]
    %v486 = vld [vmem:[#allocation2 + $0xc78] sm:$0xff]
    %v487 = vld [vmem:[#allocation2 + $0xc80] sm:$0xff]
    %v488 = vld [vmem:[#allocation2 + $0xc88] sm:$0xff]
    %v489 = vld [vmem:[#allocation2 + $0xc90] sm:$0xff]
    %v490 = vld [vmem:[#allocation2 + $0xc98] sm:$0xff]
    %v491 = vld [vmem:[#allocation2 + $0xca0] sm:$0xff]
    %v492 = vld [vmem:[#allocation2 + $0xca8] sm:$0xff]
    %v493 = vld [vmem:[#allocation2 + $0xcb0] sm:$0xff]
    %v494 = vld [vmem:[#allocation2 + $0xcb8] sm:$0xff]
    %v495 = vld [vmem:[#allocation2 + $0xcc0] sm:$0xff]
    %v496 = vld [vmem:[#allocation2 + $0xcc8] sm:$0xff]
    %v497 = vld [vmem:[#allocation2 + $0xcd0] sm:$0xff]
    %v498 = vld [vmem:[#allocation2 + $0xcd8] sm:$0xff]
    %v499 = vld [vmem:[#allocation2 + $0xce0] sm:$0xff]
    %v500 = vld [vmem:[#allocation2 + $0xce8] sm:$0xff]
    %v501 = vld [vmem:[#allocation2 + $0xcf0] sm:$0xff]
    %v502 = vld [vmem:[#allocation2 + $0xcf8] sm:$0xff]
    %v503 = vld [vmem:[#allocation2 + $0xd00] sm:$0xff]
    %v504 = vld [vmem:[#allocation2 + $0xd08] sm:$0xff]
    %v505 = vld [vmem:[#allocation2 + $0xd10] sm:$0xff]
    %v506 = vld [vmem:[#allocation2 + $0xd18] sm:$0xff]
    %v507 = vld [vmem:[#allocation2 + $0xd20] sm:$0xff]
    %v508 = vld [vmem:[#allocation2 + $0xd28] sm:$0xff]
    %v509 = vld [vmem:[#allocation2 + $0xd30] sm:$0xff]
    %v510 = vld [vmem:[#allocation2 + $0xd38] sm:$0xff]
    %v511 = vld [vmem:[#allocation2 + $0xd40] sm:$0xff]
    %v512 = vld [vmem:[#allocation2 + $0xd48] sm:$0xff]
    %v513 = vld [vmem:[#allocation2 + $0xd50] sm:$0xff]
    %v514 = vld [vmem:[#allocation2 + $0xd58] sm:$0xff]
    %v515 = vld [vmem:[#allocation2 + $0xd60] sm:$0xff]
    %v516 = vld [vmem:[#allocation2 + $0xd68] sm:$0xff]
    %v517 = vld [vmem:[#allocation2 + $0xd70] sm:$0xff]
    %v518 = vld [vmem:[#allocation2 + $0xd78] sm:$0xff]
    %v519 = vld [vmem:[#allocation2 + $0xd80] sm:$0xff]
    %v520 = vld [vmem:[#allocation2 + $0xd88] sm:$0xff]
    %v521 = vld [vmem:[#allocation2 + $0xd90] sm:$0xff]
    %v522 = vld [vmem:[#allocation2 + $0xd98] sm:$0xff]
    %v523 = vld [vmem:[#allocation2 + $0xda0] sm:$0xff]
    %v524 = vld [vmem:[#allocation2 + $0xda8] sm:$0xff]
    %v525 = vld [vmem:[#allocation2 + $0xdb0] sm:$0xff]
    %v526 = vld [vmem:[#allocation2 + $0xdb8] sm:$0xff]
    %v527 = vld [vmem:[#allocation2 + $0xdc0] sm:$0xff]
    %v528 = vld [vmem:[#allocation2 + $0xdc8] sm:$0xff]
    %v529 = vld [vmem:[#allocation2 + $0xdd0] sm:$0xff]
    %v530 = vld [vmem:[#allocation2 + $0xdd8] sm:$0xff]
    %v531 = vld [vmem:[#allocation2 + $0xde0] sm:$0xff]
    %v532 = vld [vmem:[#allocation2 + $0xde8] sm:$0xff]
    %v533 = vld [vmem:[#allocation2 + $0xdf0] sm:$0xff]
    %v534 = vld [vmem:[#allocation2 + $0xdf8] sm:$0xff]
    %v535 = vld [vmem:[#allocation2 + $0xe00] sm:$0xff]
    %v536 = vld [vmem:[#allocation2 + $0xe08] sm:$0xff]
    %v537 = vld [vmem:[#allocation2 + $0xe10] sm:$0xff]
    %v538 = vld [vmem:[#allocation2 + $0xe18] sm:$0xff]
    %v539 = vld [vmem:[#allocation2 + $0xe20] sm:$0xff]
    %v540 = vld [vmem:[#allocation2 + $0xe28] sm:$0xff]
    %v541 = vld [vmem:[#allocation2 + $0xe30] sm:$0xff]
    %v542 = vld [vmem:[#allocation2 + $0xe38] sm:$0xff]
    %v543 = vld [vmem:[#allocation2 + $0xe40] sm:$0xff]
    %v544 = vld [vmem:[#allocation2 + $0xe48] sm:$0xff]
    %v545 = vld [vmem:[#allocation2 + $0xe50] sm:$0xff]
    %v546 = vld [vmem:[#allocation2 + $0xe58] sm:$0xff]
    %v547 = vld [vmem:[#allocation2 + $0xe60] sm:$0xff]
    %v548 = vld [vmem:[#allocation2 + $0xe68] sm:$0xff]
    %v549 = vld [vmem:[#allocation2 + $0xe70] sm:$0xff]
    %v550 = vld [vmem:[#allocation2 + $0xe78] sm:$0xff]
    %v551 = vld [vmem:[#allocation2 + $0xe80] sm:$0xff]
    %v552 = vld [vmem:[#allocation2 + $0xe88] sm:$0xff]
    %v553 = vld [vmem:[#allocation2 + $0xe90] sm:$0xff]
    %v554 = vld [vmem:[#allocation2 + $0xe98] sm:$0xff]
    %v555 = vld [vmem:[#allocation2 + $0xea0] sm:$0xff]
    %v556 = vld [vmem:[#allocation2 + $0xea8] sm:$0xff]
    %v557 = vld [vmem:[#allocation2 + $0xeb0] sm:$0xff]
    %v558 = vld [vmem:[#allocation2 + $0xeb8] sm:$0xff]
    %v559 = vld [vmem:[#allocation2 + $0xec0] sm:$0xff]
    %v560 = vld [vmem:[#allocation2 + $0xec8] sm:$0xff]
    %v561 = vld [vmem:[#allocation2 + $0xed0] sm:$0xff]
    %v562 = vld [vmem:[#allocation2 + $0xed8] sm:$0xff]
    %v563 = vld [vmem:[#allocation2 + $0xee0] sm:$0xff]
    %v564 = vld [vmem:[#allocation2 + $0xee8] sm:$0xff]
    %v565 = vld [vmem:[#allocation2 + $0xef0] sm:$0xff]
    %v566 = vld [vmem:[#allocation2 + $0xef8] sm:$0xff]
    %v567 = vld [vmem:[#allocation2 + $0xf00] sm:$0xff]
    %v568 = vld [vmem:[#allocation2 + $0xf08] sm:$0xff]
    %v569 = vld [vmem:[#allocation2 + $0xf10] sm:$0xff]
    %v570 = vld [vmem:[#allocation2 + $0xf18] sm:$0xff]
    %v571 = vld [vmem:[#allocation2 + $0xf20] sm:$0xff]
    %v572 = vld [vmem:[#allocation2 + $0xf28] sm:$0xff]
    %v573 = vld [vmem:[#allocation2 + $0xf30] sm:$0xff]
    %v574 = vld [vmem:[#allocation2 + $0xf38] sm:$0xff]
    %v575 = vld [vmem:[#allocation2 + $0xf40] sm:$0xff]
    %v576 = vld [vmem:[#allocation2 + $0xf48] sm:$0xff]
    %v577 = vld [vmem:[#allocation2 + $0xf50] sm:$0xff]
    %v578 = vld [vmem:[#allocation2 + $0xf58] sm:$0xff]
    %v579 = vld [vmem:[#allocation2 + $0xf60] sm:$0xff]
    %v580 = vld [vmem:[#allocation2 + $0xf68] sm:$0xff]
    %v581 = vld [vmem:[#allocation2 + $0xf70] sm:$0xff]
    %v582 = vld [vmem:[#allocation2 + $0xf78] sm:$0xff]
    %v583 = vld [vmem:[#allocation2 + $0xf80] sm:$0xff]
    %v584 = vld [vmem:[#allocation2 + $0xf88] sm:$0xff]
    %v585 = vld [vmem:[#allocation2 + $0xf90] sm:$0xff]
    %v586 = vld [vmem:[#allocation2 + $0xf98] sm:$0xff]
    %v587 = vld [vmem:[#allocation2 + $0xfa0] sm:$0xff]
    %v588 = vld [vmem:[#allocation2 + $0xfa8] sm:$0xff]
    %v589 = vld [vmem:[#allocation2 + $0xfb0] sm:$0xff]
    %v590 = vld [vmem:[#allocation2 + $0xfb8] sm:$0xff]
    %v591 = vld [vmem:[#allocation2 + $0xfc0] sm:$0xff]
    %v592 = vld [vmem:[#allocation2 + $0xfc8] sm:$0xff]
    %v593 = vld [vmem:[#allocation2 + $0xfd0] sm:$0xff]
    %v594 = vld [vmem:[#allocation2 + $0xfd8] sm:$0xff]
    %v595 = vld [vmem:[#allocation2 + $0xfe0] sm:$0xff]
    %v596 = vld [vmem:[#allocation2 + $0xfe8] sm:$0xff]
    %v597 = vld [vmem:[#allocation2 + $0xff0] sm:$0xff]
    %v598 = vld [vmem:[#allocation2 + $0xff8] sm:$0xff]
    %v599 = vadd.f32 %v87, %v91
    %v600 = vadd.f32 %v599, %v95
    %v601 = vadd.f32 %v600, %v99
    %v602 = vadd.f32 %v601, %v103
    %v603 = vadd.f32 %v602, %v107
    %v604 = vadd.f32 %v603, %v111
    %v605 = vadd.f32 %v604, %v115
    %v606 = vadd.f32 %v605, %v119
    %v607 = vadd.f32 %v606, %v123
    %v608 = vadd.f32 %v607, %v127
    %v609 = vadd.f32 %v608, %v131
    %v610 = vadd.f32 %v609, %v135
    %v611 = vadd.f32 %v610, %v139
    %v612 = vadd.f32 %v611, %v143
    %v613 = vadd.f32 %v612, %v147
    %v614 = vadd.f32 %v613, %v151
    %v615 = vadd.f32 %v614, %v155
    %v616 = vadd.f32 %v615, %v159
    %v617 = vadd.f32 %v616, %v163
    %v618 = vadd.f32 %v617, %v167
    %v619 = vadd.f32 %v618, %v171
    %v620 = vadd.f32 %v619, %v175
    %v621 = vadd.f32 %v620, %v179
    %v622 = vadd.f32 %v621, %v183
    %v623 = vadd.f32 %v622, %v187
    %v624 = vadd.f32 %v623, %v191
    %v625 = vadd.f32 %v624, %v195
    %v626 = vadd.f32 %v625, %v199
    %v627 = vadd.f32 %v626, %v203
    %v628 = vadd.f32 %v627, %v207
    %v629 = vadd.f32 %v628, %v211
    %v630 = vadd.f32 %v629, %v215
    %v631 = vadd.f32 %v630, %v219
    %v632 = vadd.f32 %v631, %v223
    %v633 = vadd.f32 %v632, %v227
    %v634 = vadd.f32 %v633, %v231
    %v635 = vadd.f32 %v634, %v235
    %v636 = vadd.f32 %v635, %v239
    %v637 = vadd.f32 %v636, %v243
    %v638 = vadd.f32 %v637, %v247
    %v639 = vadd.f32 %v638, %v251
    %v640 = vadd.f32 %v639, %v255
    %v641 = vadd.f32 %v640, %v259
    %v642 = vadd.f32 %v641, %v263
    %v643 = vadd.f32 %v642, %v267
    %v644 = vadd.f32 %v643, %v271
    %v645 = vadd.f32 %v644, %v275
    %v646 = vadd.f32 %v645, %v279
    %v647 = vadd.f32 %v646, %v283
    %v648 = vadd.f32 %v647, %v287
    %v649 = vadd.f32 %v648, %v291
    %v650 = vadd.f32 %v649, %v295
    %v651 = vadd.f32 %v650, %v299
    %v652 = vadd.f32 %v651, %v303
    %v653 = vadd.f32 %v652, %v307
    %v654 = vadd.f32 %v653, %v311
    %v655 = vadd.f32 %v654, %v315
    %v656 = vadd.f32 %v655, %v319
    %v657 = vadd.f32 %v656, %v323
    %v658 = vadd.f32 %v657, %v327
    %v659 = vadd.f32 %v658, %v331
    %v660 = vadd.f32 %v659, %v335
    %v661 = vadd.f32 %v660, %v339
    %v662 = vadd.f32 %v661, %v343
    %v663 = vadd.f32 %v662, %v347
    %v664 = vadd.f32 %v663, %v351
    %v665 = vadd.f32 %v664, %v355
    %v666 = vadd.f32 %v665, %v359
    %v667 = vadd.f32 %v666, %v363
    %v668 = vadd.f32 %v667, %v367
    %v669 = vadd.f32 %v668, %v371
    %v670 = vadd.f32 %v669, %v375
    %v671 = vadd.f32 %v670, %v379
    %v672 = vadd.f32 %v671, %v383
    %v673 = vadd.f32 %v672, %v387
    %v674 = vadd.f32 %v673, %v391
    %v675 = vadd.f32 %v674, %v395
    %v676 = vadd.f32 %v675, %v399
    %v677 = vadd.f32 %v676, %v403
    %v678 = vadd.f32 %v677, %v407
    %v679 = vadd.f32 %v678, %v411
    %v680 = vadd.f32 %v679, %v415
    %v681 = vadd.f32 %v680, %v419
    %v682 = vadd.f32 %v681, %v423
    %v683 = vadd.f32 %v682, %v427
    %v684 = vadd.f32 %v683, %v431
    %v685 = vadd.f32 %v684, %v435
    %v686 = vadd.f32 %v685, %v439
    %v687 = vadd.f32 %v686, %v443
    %v688 = vadd.f32 %v687, %v447
    %v689 = vadd.f32 %v688, %v451
    %v690 = vadd.f32 %v689, %v455
    %v691 = vadd.f32 %v690, %v459
    %v692 = vadd.f32 %v691, %v463
    %v693 = vadd.f32 %v692, %v467
    %v694 = vadd.f32 %v693, %v471
    %v695 = vadd.f32 %v694, %v475
    %v696 = vadd.f32 %v695, %v479
    %v697 = vadd.f32 %v696, %v483
    %v698 = vadd.f32 %v697, %v487
    %v699 = vadd.f32 %v698, %v491
    %v700 = vadd.f32 %v699, %v495
    %v701 = vadd.f32 %v700, %v499
    %v702 = vadd.f32 %v701, %v503
    %v703 = vadd.f32 %v702, %v507
    %v704 = vadd.f32 %v703, %v511
    %v705 = vadd.f32 %v704, %v515
    %v706 = vadd.f32 %v705, %v519
    %v707 = vadd.f32 %v706, %v523
    %v708 = vadd.f32 %v707, %v527
    %v709 = vadd.f32 %v708, %v531
    %v710 = vadd.f32 %v709, %v535
    %v711 = vadd.f32 %v710, %v539
    %v712 = vadd.f32 %v711, %v543
    %v713 = vadd.f32 %v712, %v547
    %v714 = vadd.f32 %v713, %v551
    %v715 = vadd.f32 %v714, %v555
    %v716 = vadd.f32 %v715, %v559
    %v717 = vadd.f32 %v716, %v563
    %v718 = vadd.f32 %v717, %v567
    %v719 = vadd.f32 %v718, %v571
    %v720 = vadd.f32 %v719, %v575
    %v721 = vadd.f32 %v720, %v579
    %v722 = vadd.f32 %v721, %v583
    %v723 = vadd.f32 %v722, %v587
    %v724 = vadd.f32 %v723, %v591
    %v725 = vadd.f32 %v724, %v595
    %v726 = vrot.slane %v725, 4
    %v727 = vadd.f32 %v725, %v726
    %v728 = vrot.slane %v727, 2
    %v729 = vadd.f32 %v727, %v728
    %v730 = vrot.slane %v729, 1
    %v731 = vadd.f32 %v729, %v730
    %v732 = vadd.f32 %v88, %v92
    %v733 = vadd.f32 %v732, %v96
    %v734 = vadd.f32 %v733, %v100
    %v735 = vadd.f32 %v734, %v104
    %v736 = vadd.f32 %v735, %v108
    %v737 = vadd.f32 %v736, %v112
    %v738 = vadd.f32 %v737, %v116
    %v739 = vadd.f32 %v738, %v120
    %v740 = vadd.f32 %v739, %v124
    %v741 = vadd.f32 %v740, %v128
    %v742 = vadd.f32 %v741, %v132
    %v743 = vadd.f32 %v742, %v136
    %v744 = vadd.f32 %v743, %v140
    %v745 = vadd.f32 %v744, %v144
    %v746 = vadd.f32 %v745, %v148
    %v747 = vadd.f32 %v746, %v152
    %v748 = vadd.f32 %v747, %v156
    %v749 = vadd.f32 %v748, %v160
    %v750 = vadd.f32 %v749, %v164
    %v751 = vadd.f32 %v750, %v168
    %v752 = vadd.f32 %v751, %v172
    %v753 = vadd.f32 %v752, %v176
    %v754 = vadd.f32 %v753, %v180
    %v755 = vadd.f32 %v754, %v184
    %v756 = vadd.f32 %v755, %v188
    %v757 = vadd.f32 %v756, %v192
    %v758 = vadd.f32 %v757, %v196
    %v759 = vadd.f32 %v758, %v200
    %v760 = vadd.f32 %v759, %v204
    %v761 = vadd.f32 %v760, %v208
    %v762 = vadd.f32 %v761, %v212
    %v763 = vadd.f32 %v762, %v216
    %v764 = vadd.f32 %v763, %v220
    %v765 = vadd.f32 %v764, %v224
    %v766 = vadd.f32 %v765, %v228
    %v767 = vadd.f32 %v766, %v232
    %v768 = vadd.f32 %v767, %v236
    %v769 = vadd.f32 %v768, %v240
    %v770 = vadd.f32 %v769, %v244
    %v771 = vadd.f32 %v770, %v248
    %v772 = vadd.f32 %v771, %v252
    %v773 = vadd.f32 %v772, %v256
    %v774 = vadd.f32 %v773, %v260
    %v775 = vadd.f32 %v774, %v264
    %v776 = vadd.f32 %v775, %v268
    %v777 = vadd.f32 %v776, %v272
    %v778 = vadd.f32 %v777, %v276
    %v779 = vadd.f32 %v778, %v280
    %v780 = vadd.f32 %v779, %v284
    %v781 = vadd.f32 %v780, %v288
    %v782 = vadd.f32 %v781, %v292
    %v783 = vadd.f32 %v782, %v296
    %v784 = vadd.f32 %v783, %v300
    %v785 = vadd.f32 %v784, %v304
    %v786 = vadd.f32 %v785, %v308
    %v787 = vadd.f32 %v786, %v312
    %v788 = vadd.f32 %v787, %v316
    %v789 = vadd.f32 %v788, %v320
    %v790 = vadd.f32 %v789, %v324
    %v791 = vadd.f32 %v790, %v328
    %v792 = vadd.f32 %v791, %v332
    %v793 = vadd.f32 %v792, %v336
    %v794 = vadd.f32 %v793, %v340
    %v795 = vadd.f32 %v794, %v344
    %v796 = vadd.f32 %v795, %v348
    %v797 = vadd.f32 %v796, %v352
    %v798 = vadd.f32 %v797, %v356
    %v799 = vadd.f32 %v798, %v360
    %v800 = vadd.f32 %v799, %v364
    %v801 = vadd.f32 %v800, %v368
    %v802 = vadd.f32 %v801, %v372
    %v803 = vadd.f32 %v802, %v376
    %v804 = vadd.f32 %v803, %v380
    %v805 = vadd.f32 %v804, %v384
    %v806 = vadd.f32 %v805, %v388
    %v807 = vadd.f32 %v806, %v392
    %v808 = vadd.f32 %v807, %v396
    %v809 = vadd.f32 %v808, %v400
    %v810 = vadd.f32 %v809, %v404
    %v811 = vadd.f32 %v810, %v408
    %v812 = vadd.f32 %v811, %v412
    %v813 = vadd.f32 %v812, %v416
    %v814 = vadd.f32 %v813, %v420
    %v815 = vadd.f32 %v814, %v424
    %v816 = vadd.f32 %v815, %v428
    %v817 = vadd.f32 %v816, %v432
    %v818 = vadd.f32 %v817, %v436
    %v819 = vadd.f32 %v818, %v440
    %v820 = vadd.f32 %v819, %v444
    %v821 = vadd.f32 %v820, %v448
    %v822 = vadd.f32 %v821, %v452
    %v823 = vadd.f32 %v822, %v456
    %v824 = vadd.f32 %v823, %v460
    %v825 = vadd.f32 %v824, %v464
    %v826 = vadd.f32 %v825, %v468
    %v827 = vadd.f32 %v826, %v472
    %v828 = vadd.f32 %v827, %v476
    %v829 = vadd.f32 %v828, %v480
    %v830 = vadd.f32 %v829, %v484
    %v831 = vadd.f32 %v830, %v488
    %v832 = vadd.f32 %v831, %v492
    %v833 = vadd.f32 %v832, %v496
    %v834 = vadd.f32 %v833, %v500
    %v835 = vadd.f32 %v834, %v504
    %v836 = vadd.f32 %v835, %v508
    %v837 = vadd.f32 %v836, %v512
    %v838 = vadd.f32 %v837, %v516
    %v839 = vadd.f32 %v838, %v520
    %v840 = vadd.f32 %v839, %v524
    %v841 = vadd.f32 %v840, %v528
    %v842 = vadd.f32 %v841, %v532
    %v843 = vadd.f32 %v842, %v536
    %v844 = vadd.f32 %v843, %v540
    %v845 = vadd.f32 %v844, %v544
    %v846 = vadd.f32 %v845, %v548
    %v847 = vadd.f32 %v846, %v552
    %v848 = vadd.f32 %v847, %v556
    %v849 = vadd.f32 %v848, %v560
    %v850 = vadd.f32 %v849, %v564
    %v851 = vadd.f32 %v850, %v568
    %v852 = vadd.f32 %v851, %v572
    %v853 = vadd.f32 %v852, %v576
    %v854 = vadd.f32 %v853, %v580
    %v855 = vadd.f32 %v854, %v584
    %v856 = vadd.f32 %v855, %v588
    %v857 = vadd.f32 %v856, %v592
    %v858 = vadd.f32 %v857, %v596
    %v859 = vrot.slane %v858, 4
    %v860 = vadd.f32 %v858, %v859
    %v861 = vrot.slane %v860, 2
    %v862 = vadd.f32 %v860, %v861
    %v863 = vrot.slane %v862, 1
    %v864 = vadd.f32 %v862, %v863
    %v865 = vadd.f32 %v89, %v93
    %v866 = vadd.f32 %v865, %v97
    %v867 = vadd.f32 %v866, %v101
    %v868 = vadd.f32 %v867, %v105
    %v869 = vadd.f32 %v868, %v109
    %v870 = vadd.f32 %v869, %v113
    %v871 = vadd.f32 %v870, %v117
    %v872 = vadd.f32 %v871, %v121
    %v873 = vadd.f32 %v872, %v125
    %v874 = vadd.f32 %v873, %v129
    %v875 = vadd.f32 %v874, %v133
    %v876 = vadd.f32 %v875, %v137
    %v877 = vadd.f32 %v876, %v141
    %v878 = vadd.f32 %v877, %v145
    %v879 = vadd.f32 %v878, %v149
    %v880 = vadd.f32 %v879, %v153
    %v881 = vadd.f32 %v880, %v157
    %v882 = vadd.f32 %v881, %v161
    %v883 = vadd.f32 %v882, %v165
    %v884 = vadd.f32 %v883, %v169
    %v885 = vadd.f32 %v884, %v173
    %v886 = vadd.f32 %v885, %v177
    %v887 = vadd.f32 %v886, %v181
    %v888 = vadd.f32 %v887, %v185
    %v889 = vadd.f32 %v888, %v189
    %v890 = vadd.f32 %v889, %v193
    %v891 = vadd.f32 %v890, %v197
    %v892 = vadd.f32 %v891, %v201
    %v893 = vadd.f32 %v892, %v205
    %v894 = vadd.f32 %v893, %v209
    %v895 = vadd.f32 %v894, %v213
    %v896 = vadd.f32 %v895, %v217
    %v897 = vadd.f32 %v896, %v221
    %v898 = vadd.f32 %v897, %v225
    %v899 = vadd.f32 %v898, %v229
    %v900 = vadd.f32 %v899, %v233
    %v901 = vadd.f32 %v900, %v237
    %v902 = vadd.f32 %v901, %v241
    %v903 = vadd.f32 %v902, %v245
    %v904 = vadd.f32 %v903, %v249
    %v905 = vadd.f32 %v904, %v253
    %v906 = vadd.f32 %v905, %v257
    %v907 = vadd.f32 %v906, %v261
    %v908 = vadd.f32 %v907, %v265
    %v909 = vadd.f32 %v908, %v269
    %v910 = vadd.f32 %v909, %v273
    %v911 = vadd.f32 %v910, %v277
    %v912 = vadd.f32 %v911, %v281
    %v913 = vadd.f32 %v912, %v285
    %v914 = vadd.f32 %v913, %v289
    %v915 = vadd.f32 %v914, %v293
    %v916 = vadd.f32 %v915, %v297
    %v917 = vadd.f32 %v916, %v301
    %v918 = vadd.f32 %v917, %v305
    %v919 = vadd.f32 %v918, %v309
    %v920 = vadd.f32 %v919, %v313
    %v921 = vadd.f32 %v920, %v317
    %v922 = vadd.f32 %v921, %v321
    %v923 = vadd.f32 %v922, %v325
    %v924 = vadd.f32 %v923, %v329
    %v925 = vadd.f32 %v924, %v333
    %v926 = vadd.f32 %v925, %v337
    %v927 = vadd.f32 %v926, %v341
    %v928 = vadd.f32 %v927, %v345
    %v929 = vadd.f32 %v928, %v349
    %v930 = vadd.f32 %v929, %v353
    %v931 = vadd.f32 %v930, %v357
    %v932 = vadd.f32 %v931, %v361
    %v933 = vadd.f32 %v932, %v365
    %v934 = vadd.f32 %v933, %v369
    %v935 = vadd.f32 %v934, %v373
    %v936 = vadd.f32 %v935, %v377
    %v937 = vadd.f32 %v936, %v381
    %v938 = vadd.f32 %v937, %v385
    %v939 = vadd.f32 %v938, %v389
    %v940 = vadd.f32 %v939, %v393
    %v941 = vadd.f32 %v940, %v397
    %v942 = vadd.f32 %v941, %v401
    %v943 = vadd.f32 %v942, %v405
    %v944 = vadd.f32 %v943, %v409
    %v945 = vadd.f32 %v944, %v413
    %v946 = vadd.f32 %v945, %v417
    %v947 = vadd.f32 %v946, %v421
    %v948 = vadd.f32 %v947, %v425
    %v949 = vadd.f32 %v948, %v429
    %v950 = vadd.f32 %v949, %v433
    %v951 = vadd.f32 %v950, %v437
    %v952 = vadd.f32 %v951, %v441
    %v953 = vadd.f32 %v952, %v445
    %v954 = vadd.f32 %v953, %v449
    %v955 = vadd.f32 %v954, %v453
    %v956 = vadd.f32 %v955, %v457
    %v957 = vadd.f32 %v956, %v461
    %v958 = vadd.f32 %v957, %v465
    %v959 = vadd.f32 %v958, %v469
    %v960 = vadd.f32 %v959, %v473
    %v961 = vadd.f32 %v960, %v477
    %v962 = vadd.f32 %v961, %v481
    %v963 = vadd.f32 %v962, %v485
    %v964 = vadd.f32 %v963, %v489
    %v965 = vadd.f32 %v964, %v493
    %v966 = vadd.f32 %v965, %v497
    %v967 = vadd.f32 %v966, %v501
    %v968 = vadd.f32 %v967, %v505
    %v969 = vadd.f32 %v968, %v509
    %v970 = vadd.f32 %v969, %v513
    %v971 = vadd.f32 %v970, %v517
    %v972 = vadd.f32 %v971, %v521
    %v973 = vadd.f32 %v972, %v525
    %v974 = vadd.f32 %v973, %v529
    %v975 = vadd.f32 %v974, %v533
    %v976 = vadd.f32 %v975, %v537
    %v977 = vadd.f32 %v976, %v541
    %v978 = vadd.f32 %v977, %v545
    %v979 = vadd.f32 %v978, %v549
    %v980 = vadd.f32 %v979, %v553
    %v981 = vadd.f32 %v980, %v557
    %v982 = vadd.f32 %v981, %v561
    %v983 = vadd.f32 %v982, %v565
    %v984 = vadd.f32 %v983, %v569
    %v985 = vadd.f32 %v984, %v573
    %v986 = vadd.f32 %v985, %v577
    %v987 = vadd.f32 %v986, %v581
    %v988 = vadd.f32 %v987, %v585
    %v989 = vadd.f32 %v988, %v589
    %v990 = vadd.f32 %v989, %v593
    %v991 = vadd.f32 %v990, %v597
    %v992 = vrot.slane %v991, 4
    %v993 = vadd.f32 %v991, %v992
    %v994 = vrot.slane %v993, 2
    %v995 = vadd.f32 %v993, %v994
    %v996 = vrot.slane %v995, 1
    %v997 = vadd.f32 %v995, %v996
    %v998 = vadd.f32 %v90, %v94
    %v999 = vadd.f32 %v998, %v98
    %v1000 = vadd.f32 %v999, %v102
    %v1001 = vadd.f32 %v1000, %v106
    %v1002 = vadd.f32 %v1001, %v110
    %v1003 = vadd.f32 %v1002, %v114
    %v1004 = vadd.f32 %v1003, %v118
    %v1005 = vadd.f32 %v1004, %v122
    %v1006 = vadd.f32 %v1005, %v126
    %v1007 = vadd.f32 %v1006, %v130
    %v1008 = vadd.f32 %v1007, %v134
    %v1009 = vadd.f32 %v1008, %v138
    %v1010 = vadd.f32 %v1009, %v142
    %v1011 = vadd.f32 %v1010, %v146
    %v1012 = vadd.f32 %v1011, %v150
    %v1013 = vadd.f32 %v1012, %v154
    %v1014 = vadd.f32 %v1013, %v158
    %v1015 = vadd.f32 %v1014, %v162
    %v1016 = vadd.f32 %v1015, %v166
    %v1017 = vadd.f32 %v1016, %v170
    %v1018 = vadd.f32 %v1017, %v174
    %v1019 = vadd.f32 %v1018, %v178
    %v1020 = vadd.f32 %v1019, %v182
    %v1021 = vadd.f32 %v1020, %v186
    %v1022 = vadd.f32 %v1021, %v190
    %v1023 = vadd.f32 %v1022, %v194
    %v1024 = vadd.f32 %v1023, %v198
    %v1025 = vadd.f32 %v1024, %v202
    %v1026 = vadd.f32 %v1025, %v206
    %v1027 = vadd.f32 %v1026, %v210
    %v1028 = vadd.f32 %v1027, %v214
    %v1029 = vadd.f32 %v1028, %v218
    %v1030 = vadd.f32 %v1029, %v222
    %v1031 = vadd.f32 %v1030, %v226
    %v1032 = vadd.f32 %v1031, %v230
    %v1033 = vadd.f32 %v1032, %v234
    %v1034 = vadd.f32 %v1033, %v238
    %v1035 = vadd.f32 %v1034, %v242
    %v1036 = vadd.f32 %v1035, %v246
    %v1037 = vadd.f32 %v1036, %v250
    %v1038 = vadd.f32 %v1037, %v254
    %v1039 = vadd.f32 %v1038, %v258
    %v1040 = vadd.f32 %v1039, %v262
    %v1041 = vadd.f32 %v1040, %v266
    %v1042 = vadd.f32 %v1041, %v270
    %v1043 = vadd.f32 %v1042, %v274
    %v1044 = vadd.f32 %v1043, %v278
    %v1045 = vadd.f32 %v1044, %v282
    %v1046 = vadd.f32 %v1045, %v286
    %v1047 = vadd.f32 %v1046, %v290
    %v1048 = vadd.f32 %v1047, %v294
    %v1049 = vadd.f32 %v1048, %v298
    %v1050 = vadd.f32 %v1049, %v302
    %v1051 = vadd.f32 %v1050, %v306
    %v1052 = vadd.f32 %v1051, %v310
    %v1053 = vadd.f32 %v1052, %v314
    %v1054 = vadd.f32 %v1053, %v318
    %v1055 = vadd.f32 %v1054, %v322
    %v1056 = vadd.f32 %v1055, %v326
    %v1057 = vadd.f32 %v1056, %v330
    %v1058 = vadd.f32 %v1057, %v334
    %v1059 = vadd.f32 %v1058, %v338
    %v1060 = vadd.f32 %v1059, %v342
    %v1061 = vadd.f32 %v1060, %v346
    %v1062 = vadd.f32 %v1061, %v350
    %v1063 = vadd.f32 %v1062, %v354
    %v1064 = vadd.f32 %v1063, %v358
    %v1065 = vadd.f32 %v1064, %v362
    %v1066 = vadd.f32 %v1065, %v366
    %v1067 = vadd.f32 %v1066, %v370
    %v1068 = vadd.f32 %v1067, %v374
    %v1069 = vadd.f32 %v1068, %v378
    %v1070 = vadd.f32 %v1069, %v382
    %v1071 = vadd.f32 %v1070, %v386
    %v1072 = vadd.f32 %v1071, %v390
    %v1073 = vadd.f32 %v1072, %v394
    %v1074 = vadd.f32 %v1073, %v398
    %v1075 = vadd.f32 %v1074, %v402
    %v1076 = vadd.f32 %v1075, %v406
    %v1077 = vadd.f32 %v1076, %v410
    %v1078 = vadd.f32 %v1077, %v414
    %v1079 = vadd.f32 %v1078, %v418
    %v1080 = vadd.f32 %v1079, %v422
    %v1081 = vadd.f32 %v1080, %v426
    %v1082 = vadd.f32 %v1081, %v430
    %v1083 = vadd.f32 %v1082, %v434
    %v1084 = vadd.f32 %v1083, %v438
    %v1085 = vadd.f32 %v1084, %v442
    %v1086 = vadd.f32 %v1085, %v446
    %v1087 = vadd.f32 %v1086, %v450
    %v1088 = vadd.f32 %v1087, %v454
    %v1089 = vadd.f32 %v1088, %v458
    %v1090 = vadd.f32 %v1089, %v462
    %v1091 = vadd.f32 %v1090, %v466
    %v1092 = vadd.f32 %v1091, %v470
    %v1093 = vadd.f32 %v1092, %v474
    %v1094 = vadd.f32 %v1093, %v478
    %v1095 = vadd.f32 %v1094, %v482
    %v1096 = vadd.f32 %v1095, %v486
    %v1097 = vadd.f32 %v1096, %v490
    %v1098 = vadd.f32 %v1097, %v494
    %v1099 = vadd.f32 %v1098, %v498
    %v1100 = vadd.f32 %v1099, %v502
    %v1101 = vadd.f32 %v1100, %v506
    %v1102 = vadd.f32 %v1101, %v510
    %v1103 = vadd.f32 %v1102, %v514
    %v1104 = vadd.f32 %v1103, %v518
    %v1105 = vadd.f32 %v1104, %v522
    %v1106 = vadd.f32 %v1105, %v526
    %v1107 = vadd.f32 %v1106, %v530
    %v1108 = vadd.f32 %v1107, %v534
    %v1109 = vadd.f32 %v1108, %v538
    %v1110 = vadd.f32 %v1109, %v542
    %v1111 = vadd.f32 %v1110, %v546
    %v1112 = vadd.f32 %v1111, %v550
    %v1113 = vadd.f32 %v1112, %v554
    %v1114 = vadd.f32 %v1113, %v558
    %v1115 = vadd.f32 %v1114, %v562
    %v1116 = vadd.f32 %v1115, %v566
    %v1117 = vadd.f32 %v1116, %v570
    %v1118 = vadd.f32 %v1117, %v574
    %v1119 = vadd.f32 %v1118, %v578
    %v1120 = vadd.f32 %v1119, %v582
    %v1121 = vadd.f32 %v1120, %v586
    %v1122 = vadd.f32 %v1121, %v590
    %v1123 = vadd.f32 %v1122, %v594
    %v1124 = vadd.f32 %v1123, %v598
    %v1125 = vrot.slane %v1124, 4
    %v1126 = vadd.f32 %v1124, %v1125
    %v1127 = vrot.slane %v1126, 2
    %v1128 = vadd.f32 %v1126, %v1127
    %v1129 = vrot.slane %v1128, 1
    %v1130 = vadd.f32 %v1128, %v1129
    %v1131 = vld [vmem:[#allocation10] ss:$4 sm:$0xf]
    %v1133 = vlaneseq
    %v1134 = vshrl.u32 %v1133, 7
    %v1135 = vsub.s32 0, %v1134
    %v1136 = vrot.slane %v1131, %v1135
    %v1137 = vlaneseq
    %v1138 = vshrl.u32 %v1137, 7
    %v1139 = vsub.s32 1, %v1138
    %v1140 = vrot.slane %v1131, %v1139
    %v1141 = vlaneseq
    %v1142 = vshrl.u32 %v1141, 7
    %v1143 = vsub.s32 2, %v1142
    %v1144 = vrot.slane %v1131, %v1143
    %v1145 = vlaneseq
    %v1146 = vshrl.u32 %v1145, 7
    %v1147 = vsub.s32 3, %v1146
    %v1148 = vrot.slane %v1131, %v1147
    %v1153 = vadd.f32 %v731, %v1136
    %v1154 = vadd.f32 %v864, %v1140
    %v1155 = vadd.f32 %v997, %v1144
    %v1156 = vadd.f32 %v1130, %v1148
    %v1157 = vlaneseq
    %v1158 = vshrl.u32 %v1157, 7
    %v1159 = vsub.s32 0, %v1158
    %v1160 = vrot.slane %v1153, %v1159
    %v1161 = vlaneseq
    %v1162 = vshrl.u32 %v1161, 7
    %v1163 = vsub.s32 0, %v1162
    %v1164 = vrot.slane %v1154, %v1163
    %v1165 = vlaneseq
    %v1166 = vshrl.u32 %v1165, 7
    %v1167 = vsub.s32 0, %v1166
    %v1168 = vrot.slane %v1155, %v1167
    %v1169 = vlaneseq
    %v1170 = vshrl.u32 %v1169, 7
    %v1171 = vsub.s32 0, %v1170
    %v1172 = vrot.slane %v1156, %v1171
    %v1173 = vld [vmem:[#allocation5] sm:$0xff]
    %v1174 = vld [vmem:[#allocation5 + $0x8] sm:$0xff]
    %v1175 = vld [vmem:[#allocation5 + $0x10] sm:$0xff]
    %v1176 = vld [vmem:[#allocation5 + $0x18] sm:$0xff]
    %v1177 = vld [vmem:[#allocation5 + $0x20] sm:$0xff]
    %v1178 = vld [vmem:[#allocation5 + $0x28] sm:$0xff]
    %v1179 = vld [vmem:[#allocation5 + $0x30] sm:$0xff]
    %v1180 = vld [vmem:[#allocation5 + $0x38] sm:$0xff]
    %v1181 = vld [vmem:[#allocation5 + $0x40] sm:$0xff]
    %v1182 = vld [vmem:[#allocation5 + $0x48] sm:$0xff]
    %v1183 = vld [vmem:[#allocation5 + $0x50] sm:$0xff]
    %v1184 = vld [vmem:[#allocation5 + $0x58] sm:$0xff]
    %v1185 = vld [vmem:[#allocation5 + $0x60] sm:$0xff]
    %v1186 = vld [vmem:[#allocation5 + $0x68] sm:$0xff]
    %v1187 = vld [vmem:[#allocation5 + $0x70] sm:$0xff]
    %v1188 = vld [vmem:[#allocation5 + $0x78] sm:$0xff]
    %v1189 = vld [vmem:[#allocation5 + $0x80] sm:$0xff]
    %v1190 = vld [vmem:[#allocation5 + $0x88] sm:$0xff]
    %v1191 = vld [vmem:[#allocation5 + $0x90] sm:$0xff]
    %v1192 = vld [vmem:[#allocation5 + $0x98] sm:$0xff]
    %v1193 = vld [vmem:[#allocation5 + $0xa0] sm:$0xff]
    %v1194 = vld [vmem:[#allocation5 + $0xa8] sm:$0xff]
    %v1195 = vld [vmem:[#allocation5 + $0xb0] sm:$0xff]
    %v1196 = vld [vmem:[#allocation5 + $0xb8] sm:$0xff]
    %v1197 = vld [vmem:[#allocation5 + $0xc0] sm:$0xff]
    %v1198 = vld [vmem:[#allocation5 + $0xc8] sm:$0xff]
    %v1199 = vld [vmem:[#allocation5 + $0xd0] sm:$0xff]
    %v1200 = vld [vmem:[#allocation5 + $0xd8] sm:$0xff]
    %v1201 = vld [vmem:[#allocation5 + $0xe0] sm:$0xff]
    %v1202 = vld [vmem:[#allocation5 + $0xe8] sm:$0xff]
    %v1203 = vld [vmem:[#allocation5 + $0xf0] sm:$0xff]
    %v1204 = vld [vmem:[#allocation5 + $0xf8] sm:$0xff]
    %v1205 = vld [vmem:[#allocation5 + $0x100] sm:$0xff]
    %v1206 = vld [vmem:[#allocation5 + $0x108] sm:$0xff]
    %v1207 = vld [vmem:[#allocation5 + $0x110] sm:$0xff]
    %v1208 = vld [vmem:[#allocation5 + $0x118] sm:$0xff]
    %v1209 = vld [vmem:[#allocation5 + $0x120] sm:$0xff]
    %v1210 = vld [vmem:[#allocation5 + $0x128] sm:$0xff]
    %v1211 = vld [vmem:[#allocation5 + $0x130] sm:$0xff]
    %v1212 = vld [vmem:[#allocation5 + $0x138] sm:$0xff]
    %v1213 = vld [vmem:[#allocation5 + $0x140] sm:$0xff]
    %v1214 = vld [vmem:[#allocation5 + $0x148] sm:$0xff]
    %v1215 = vld [vmem:[#allocation5 + $0x150] sm:$0xff]
    %v1216 = vld [vmem:[#allocation5 + $0x158] sm:$0xff]
    %v1217 = vld [vmem:[#allocation5 + $0x160] sm:$0xff]
    %v1218 = vld [vmem:[#allocation5 + $0x168] sm:$0xff]
    %v1219 = vld [vmem:[#allocation5 + $0x170] sm:$0xff]
    %v1220 = vld [vmem:[#allocation5 + $0x178] sm:$0xff]
    %v1221 = vld [vmem:[#allocation5 + $0x180] sm:$0xff]
    %v1222 = vld [vmem:[#allocation5 + $0x188] sm:$0xff]
    %v1223 = vld [vmem:[#allocation5 + $0x190] sm:$0xff]
    %v1224 = vld [vmem:[#allocation5 + $0x198] sm:$0xff]
    %v1225 = vld [vmem:[#allocation5 + $0x1a0] sm:$0xff]
    %v1226 = vld [vmem:[#allocation5 + $0x1a8] sm:$0xff]
    %v1227 = vld [vmem:[#allocation5 + $0x1b0] sm:$0xff]
    %v1228 = vld [vmem:[#allocation5 + $0x1b8] sm:$0xff]
    %v1229 = vld [vmem:[#allocation5 + $0x1c0] sm:$0xff]
    %v1230 = vld [vmem:[#allocation5 + $0x1c8] sm:$0xff]
    %v1231 = vld [vmem:[#allocation5 + $0x1d0] sm:$0xff]
    %v1232 = vld [vmem:[#allocation5 + $0x1d8] sm:$0xff]
    %v1233 = vld [vmem:[#allocation5 + $0x1e0] sm:$0xff]
    %v1234 = vld [vmem:[#allocation5 + $0x1e8] sm:$0xff]
    %v1235 = vld [vmem:[#allocation5 + $0x1f0] sm:$0xff]
    %v1236 = vld [vmem:[#allocation5 + $0x1f8] sm:$0xff]
    %v1237 = vld [vmem:[#allocation5 + $0x200] sm:$0xff]
    %v1238 = vld [vmem:[#allocation5 + $0x208] sm:$0xff]
    %v1239 = vld [vmem:[#allocation5 + $0x210] sm:$0xff]
    %v1240 = vld [vmem:[#allocation5 + $0x218] sm:$0xff]
    %v1241 = vld [vmem:[#allocation5 + $0x220] sm:$0xff]
    %v1242 = vld [vmem:[#allocation5 + $0x228] sm:$0xff]
    %v1243 = vld [vmem:[#allocation5 + $0x230] sm:$0xff]
    %v1244 = vld [vmem:[#allocation5 + $0x238] sm:$0xff]
    %v1245 = vld [vmem:[#allocation5 + $0x240] sm:$0xff]
    %v1246 = vld [vmem:[#allocation5 + $0x248] sm:$0xff]
    %v1247 = vld [vmem:[#allocation5 + $0x250] sm:$0xff]
    %v1248 = vld [vmem:[#allocation5 + $0x258] sm:$0xff]
    %v1249 = vld [vmem:[#allocation5 + $0x260] sm:$0xff]
    %v1250 = vld [vmem:[#allocation5 + $0x268] sm:$0xff]
    %v1251 = vld [vmem:[#allocation5 + $0x270] sm:$0xff]
    %v1252 = vld [vmem:[#allocation5 + $0x278] sm:$0xff]
    %v1253 = vld [vmem:[#allocation5 + $0x280] sm:$0xff]
    %v1254 = vld [vmem:[#allocation5 + $0x288] sm:$0xff]
    %v1255 = vld [vmem:[#allocation5 + $0x290] sm:$0xff]
    %v1256 = vld [vmem:[#allocation5 + $0x298] sm:$0xff]
    %v1257 = vld [vmem:[#allocation5 + $0x2a0] sm:$0xff]
    %v1258 = vld [vmem:[#allocation5 + $0x2a8] sm:$0xff]
    %v1259 = vld [vmem:[#allocation5 + $0x2b0] sm:$0xff]
    %v1260 = vld [vmem:[#allocation5 + $0x2b8] sm:$0xff]
    %v1261 = vld [vmem:[#allocation5 + $0x2c0] sm:$0xff]
    %v1262 = vld [vmem:[#allocation5 + $0x2c8] sm:$0xff]
    %v1263 = vld [vmem:[#allocation5 + $0x2d0] sm:$0xff]
    %v1264 = vld [vmem:[#allocation5 + $0x2d8] sm:$0xff]
    %v1265 = vld [vmem:[#allocation5 + $0x2e0] sm:$0xff]
    %v1266 = vld [vmem:[#allocation5 + $0x2e8] sm:$0xff]
    %v1267 = vld [vmem:[#allocation5 + $0x2f0] sm:$0xff]
    %v1268 = vld [vmem:[#allocation5 + $0x2f8] sm:$0xff]
    %v1269 = vld [vmem:[#allocation5 + $0x300] sm:$0xff]
    %v1270 = vld [vmem:[#allocation5 + $0x308] sm:$0xff]
    %v1271 = vld [vmem:[#allocation5 + $0x310] sm:$0xff]
    %v1272 = vld [vmem:[#allocation5 + $0x318] sm:$0xff]
    %v1273 = vld [vmem:[#allocation5 + $0x320] sm:$0xff]
    %v1274 = vld [vmem:[#allocation5 + $0x328] sm:$0xff]
    %v1275 = vld [vmem:[#allocation5 + $0x330] sm:$0xff]
    %v1276 = vld [vmem:[#allocation5 + $0x338] sm:$0xff]
    %v1277 = vld [vmem:[#allocation5 + $0x340] sm:$0xff]
    %v1278 = vld [vmem:[#allocation5 + $0x348] sm:$0xff]
    %v1279 = vld [vmem:[#allocation5 + $0x350] sm:$0xff]
    %v1280 = vld [vmem:[#allocation5 + $0x358] sm:$0xff]
    %v1281 = vld [vmem:[#allocation5 + $0x360] sm:$0xff]
    %v1282 = vld [vmem:[#allocation5 + $0x368] sm:$0xff]
    %v1283 = vld [vmem:[#allocation5 + $0x370] sm:$0xff]
    %v1284 = vld [vmem:[#allocation5 + $0x378] sm:$0xff]
    %v1285 = vld [vmem:[#allocation5 + $0x380] sm:$0xff]
    %v1286 = vld [vmem:[#allocation5 + $0x388] sm:$0xff]
    %v1287 = vld [vmem:[#allocation5 + $0x390] sm:$0xff]
    %v1288 = vld [vmem:[#allocation5 + $0x398] sm:$0xff]
    %v1289 = vld [vmem:[#allocation5 + $0x3a0] sm:$0xff]
    %v1290 = vld [vmem:[#allocation5 + $0x3a8] sm:$0xff]
    %v1291 = vld [vmem:[#allocation5 + $0x3b0] sm:$0xff]
    %v1292 = vld [vmem:[#allocation5 + $0x3b8] sm:$0xff]
    %v1293 = vld [vmem:[#allocation5 + $0x3c0] sm:$0xff]
    %v1294 = vld [vmem:[#allocation5 + $0x3c8] sm:$0xff]
    %v1295 = vld [vmem:[#allocation5 + $0x3d0] sm:$0xff]
    %v1296 = vld [vmem:[#allocation5 + $0x3d8] sm:$0xff]
    %v1297 = vld [vmem:[#allocation5 + $0x3e0] sm:$0xff]
    %v1298 = vld [vmem:[#allocation5 + $0x3e8] sm:$0xff]
    %v1299 = vld [vmem:[#allocation5 + $0x3f0] sm:$0xff]
    %v1300 = vld [vmem:[#allocation5 + $0x3f8] sm:$0xff]
    %v1301 = vld [vmem:[#allocation5 + $0x400] sm:$0xff]
    %v1302 = vld [vmem:[#allocation5 + $0x408] sm:$0xff]
    %v1303 = vld [vmem:[#allocation5 + $0x410] sm:$0xff]
    %v1304 = vld [vmem:[#allocation5 + $0x418] sm:$0xff]
    %v1305 = vld [vmem:[#allocation5 + $0x420] sm:$0xff]
    %v1306 = vld [vmem:[#allocation5 + $0x428] sm:$0xff]
    %v1307 = vld [vmem:[#allocation5 + $0x430] sm:$0xff]
    %v1308 = vld [vmem:[#allocation5 + $0x438] sm:$0xff]
    %v1309 = vld [vmem:[#allocation5 + $0x440] sm:$0xff]
    %v1310 = vld [vmem:[#allocation5 + $0x448] sm:$0xff]
    %v1311 = vld [vmem:[#allocation5 + $0x450] sm:$0xff]
    %v1312 = vld [vmem:[#allocation5 + $0x458] sm:$0xff]
    %v1313 = vld [vmem:[#allocation5 + $0x460] sm:$0xff]
    %v1314 = vld [vmem:[#allocation5 + $0x468] sm:$0xff]
    %v1315 = vld [vmem:[#allocation5 + $0x470] sm:$0xff]
    %v1316 = vld [vmem:[#allocation5 + $0x478] sm:$0xff]
    %v1317 = vld [vmem:[#allocation5 + $0x480] sm:$0xff]
    %v1318 = vld [vmem:[#allocation5 + $0x488] sm:$0xff]
    %v1319 = vld [vmem:[#allocation5 + $0x490] sm:$0xff]
    %v1320 = vld [vmem:[#allocation5 + $0x498] sm:$0xff]
    %v1321 = vld [vmem:[#allocation5 + $0x4a0] sm:$0xff]
    %v1322 = vld [vmem:[#allocation5 + $0x4a8] sm:$0xff]
    %v1323 = vld [vmem:[#allocation5 + $0x4b0] sm:$0xff]
    %v1324 = vld [vmem:[#allocation5 + $0x4b8] sm:$0xff]
    %v1325 = vld [vmem:[#allocation5 + $0x4c0] sm:$0xff]
    %v1326 = vld [vmem:[#allocation5 + $0x4c8] sm:$0xff]
    %v1327 = vld [vmem:[#allocation5 + $0x4d0] sm:$0xff]
    %v1328 = vld [vmem:[#allocation5 + $0x4d8] sm:$0xff]
    %v1329 = vld [vmem:[#allocation5 + $0x4e0] sm:$0xff]
    %v1330 = vld [vmem:[#allocation5 + $0x4e8] sm:$0xff]
    %v1331 = vld [vmem:[#allocation5 + $0x4f0] sm:$0xff]
    %v1332 = vld [vmem:[#allocation5 + $0x4f8] sm:$0xff]
    %v1333 = vld [vmem:[#allocation5 + $0x500] sm:$0xff]
    %v1334 = vld [vmem:[#allocation5 + $0x508] sm:$0xff]
    %v1335 = vld [vmem:[#allocation5 + $0x510] sm:$0xff]
    %v1336 = vld [vmem:[#allocation5 + $0x518] sm:$0xff]
    %v1337 = vld [vmem:[#allocation5 + $0x520] sm:$0xff]
    %v1338 = vld [vmem:[#allocation5 + $0x528] sm:$0xff]
    %v1339 = vld [vmem:[#allocation5 + $0x530] sm:$0xff]
    %v1340 = vld [vmem:[#allocation5 + $0x538] sm:$0xff]
    %v1341 = vld [vmem:[#allocation5 + $0x540] sm:$0xff]
    %v1342 = vld [vmem:[#allocation5 + $0x548] sm:$0xff]
    %v1343 = vld [vmem:[#allocation5 + $0x550] sm:$0xff]
    %v1344 = vld [vmem:[#allocation5 + $0x558] sm:$0xff]
    %v1345 = vld [vmem:[#allocation5 + $0x560] sm:$0xff]
    %v1346 = vld [vmem:[#allocation5 + $0x568] sm:$0xff]
    %v1347 = vld [vmem:[#allocation5 + $0x570] sm:$0xff]
    %v1348 = vld [vmem:[#allocation5 + $0x578] sm:$0xff]
    %v1349 = vld [vmem:[#allocation5 + $0x580] sm:$0xff]
    %v1350 = vld [vmem:[#allocation5 + $0x588] sm:$0xff]
    %v1351 = vld [vmem:[#allocation5 + $0x590] sm:$0xff]
    %v1352 = vld [vmem:[#allocation5 + $0x598] sm:$0xff]
    %v1353 = vld [vmem:[#allocation5 + $0x5a0] sm:$0xff]
    %v1354 = vld [vmem:[#allocation5 + $0x5a8] sm:$0xff]
    %v1355 = vld [vmem:[#allocation5 + $0x5b0] sm:$0xff]
    %v1356 = vld [vmem:[#allocation5 + $0x5b8] sm:$0xff]
    %v1357 = vld [vmem:[#allocation5 + $0x5c0] sm:$0xff]
    %v1358 = vld [vmem:[#allocation5 + $0x5c8] sm:$0xff]
    %v1359 = vld [vmem:[#allocation5 + $0x5d0] sm:$0xff]
    %v1360 = vld [vmem:[#allocation5 + $0x5d8] sm:$0xff]
    %v1361 = vld [vmem:[#allocation5 + $0x5e0] sm:$0xff]
    %v1362 = vld [vmem:[#allocation5 + $0x5e8] sm:$0xff]
    %v1363 = vld [vmem:[#allocation5 + $0x5f0] sm:$0xff]
    %v1364 = vld [vmem:[#allocation5 + $0x5f8] sm:$0xff]
    %v1365 = vld [vmem:[#allocation5 + $0x600] sm:$0xff]
    %v1366 = vld [vmem:[#allocation5 + $0x608] sm:$0xff]
    %v1367 = vld [vmem:[#allocation5 + $0x610] sm:$0xff]
    %v1368 = vld [vmem:[#allocation5 + $0x618] sm:$0xff]
    %v1369 = vld [vmem:[#allocation5 + $0x620] sm:$0xff]
    %v1370 = vld [vmem:[#allocation5 + $0x628] sm:$0xff]
    %v1371 = vld [vmem:[#allocation5 + $0x630] sm:$0xff]
    %v1372 = vld [vmem:[#allocation5 + $0x638] sm:$0xff]
    %v1373 = vld [vmem:[#allocation5 + $0x640] sm:$0xff]
    %v1374 = vld [vmem:[#allocation5 + $0x648] sm:$0xff]
    %v1375 = vld [vmem:[#allocation5 + $0x650] sm:$0xff]
    %v1376 = vld [vmem:[#allocation5 + $0x658] sm:$0xff]
    %v1377 = vld [vmem:[#allocation5 + $0x660] sm:$0xff]
    %v1378 = vld [vmem:[#allocation5 + $0x668] sm:$0xff]
    %v1379 = vld [vmem:[#allocation5 + $0x670] sm:$0xff]
    %v1380 = vld [vmem:[#allocation5 + $0x678] sm:$0xff]
    %v1381 = vld [vmem:[#allocation5 + $0x680] sm:$0xff]
    %v1382 = vld [vmem:[#allocation5 + $0x688] sm:$0xff]
    %v1383 = vld [vmem:[#allocation5 + $0x690] sm:$0xff]
    %v1384 = vld [vmem:[#allocation5 + $0x698] sm:$0xff]
    %v1385 = vld [vmem:[#allocation5 + $0x6a0] sm:$0xff]
    %v1386 = vld [vmem:[#allocation5 + $0x6a8] sm:$0xff]
    %v1387 = vld [vmem:[#allocation5 + $0x6b0] sm:$0xff]
    %v1388 = vld [vmem:[#allocation5 + $0x6b8] sm:$0xff]
    %v1389 = vld [vmem:[#allocation5 + $0x6c0] sm:$0xff]
    %v1390 = vld [vmem:[#allocation5 + $0x6c8] sm:$0xff]
    %v1391 = vld [vmem:[#allocation5 + $0x6d0] sm:$0xff]
    %v1392 = vld [vmem:[#allocation5 + $0x6d8] sm:$0xff]
    %v1393 = vld [vmem:[#allocation5 + $0x6e0] sm:$0xff]
    %v1394 = vld [vmem:[#allocation5 + $0x6e8] sm:$0xff]
    %v1395 = vld [vmem:[#allocation5 + $0x6f0] sm:$0xff]
    %v1396 = vld [vmem:[#allocation5 + $0x6f8] sm:$0xff]
    %v1397 = vld [vmem:[#allocation5 + $0x700] sm:$0xff]
    %v1398 = vld [vmem:[#allocation5 + $0x708] sm:$0xff]
    %v1399 = vld [vmem:[#allocation5 + $0x710] sm:$0xff]
    %v1400 = vld [vmem:[#allocation5 + $0x718] sm:$0xff]
    %v1401 = vld [vmem:[#allocation5 + $0x720] sm:$0xff]
    %v1402 = vld [vmem:[#allocation5 + $0x728] sm:$0xff]
    %v1403 = vld [vmem:[#allocation5 + $0x730] sm:$0xff]
    %v1404 = vld [vmem:[#allocation5 + $0x738] sm:$0xff]
    %v1405 = vld [vmem:[#allocation5 + $0x740] sm:$0xff]
    %v1406 = vld [vmem:[#allocation5 + $0x748] sm:$0xff]
    %v1407 = vld [vmem:[#allocation5 + $0x750] sm:$0xff]
    %v1408 = vld [vmem:[#allocation5 + $0x758] sm:$0xff]
    %v1409 = vld [vmem:[#allocation5 + $0x760] sm:$0xff]
    %v1410 = vld [vmem:[#allocation5 + $0x768] sm:$0xff]
    %v1411 = vld [vmem:[#allocation5 + $0x770] sm:$0xff]
    %v1412 = vld [vmem:[#allocation5 + $0x778] sm:$0xff]
    %v1413 = vld [vmem:[#allocation5 + $0x780] sm:$0xff]
    %v1414 = vld [vmem:[#allocation5 + $0x788] sm:$0xff]
    %v1415 = vld [vmem:[#allocation5 + $0x790] sm:$0xff]
    %v1416 = vld [vmem:[#allocation5 + $0x798] sm:$0xff]
    %v1417 = vld [vmem:[#allocation5 + $0x7a0] sm:$0xff]
    %v1418 = vld [vmem:[#allocation5 + $0x7a8] sm:$0xff]
    %v1419 = vld [vmem:[#allocation5 + $0x7b0] sm:$0xff]
    %v1420 = vld [vmem:[#allocation5 + $0x7b8] sm:$0xff]
    %v1421 = vld [vmem:[#allocation5 + $0x7c0] sm:$0xff]
    %v1422 = vld [vmem:[#allocation5 + $0x7c8] sm:$0xff]
    %v1423 = vld [vmem:[#allocation5 + $0x7d0] sm:$0xff]
    %v1424 = vld [vmem:[#allocation5 + $0x7d8] sm:$0xff]
    %v1425 = vld [vmem:[#allocation5 + $0x7e0] sm:$0xff]
    %v1426 = vld [vmem:[#allocation5 + $0x7e8] sm:$0xff]
    %v1427 = vld [vmem:[#allocation5 + $0x7f0] sm:$0xff]
    %v1428 = vld [vmem:[#allocation5 + $0x7f8] sm:$0xff]
    %s1429 = scalar_lea.vmem [#allocation10], 1
    %v1430 = vld [vmem:[%s1429] ss:$4 sm:$0xf]
    %v1432 = vlaneseq
    %v1433 = vshrl.u32 %v1432, 7
    %v1434 = vsub.s32 0, %v1433
    %v1435 = vrot.slane %v1430, %v1434
    %v1436 = vlaneseq
    %v1437 = vshrl.u32 %v1436, 7
    %v1438 = vsub.s32 1, %v1437
    %v1439 = vrot.slane %v1430, %v1438
    %v1440 = vlaneseq
    %v1441 = vshrl.u32 %v1440, 7
    %v1442 = vsub.s32 2, %v1441
    %v1443 = vrot.slane %v1430, %v1442
    %v1444 = vlaneseq
    %v1445 = vshrl.u32 %v1444, 7
    %v1446 = vsub.s32 3, %v1445
    %v1447 = vrot.slane %v1430, %v1446
    %1452 = vmatprep.subr.mxu0 %v1174
    %1453 = vmatpush1.msra.mxu0 %v1173
    %1454 = vmatprep.subr.mxu0 %v1178
    %1455 = vmatpush1.msra.mxu0 %v1177
    %1456 = vmatprep.subr.mxu0 %v1182
    %1457 = vmatpush1.msra.mxu0 %v1181
    %1458 = vmatprep.subr.mxu0 %v1186
    %1459 = vmatpush1.msra.mxu0 %v1185
    %1460 = vmatprep.subr.mxu0 %v1190
    %1461 = vmatpush1.msra.mxu0 %v1189
    %1462 = vmatprep.subr.mxu0 %v1194
    %1463 = vmatpush1.msra.mxu0 %v1193
    %1464 = vmatprep.subr.mxu0 %v1198
    %1465 = vmatpush1.msra.mxu0 %v1197
    %1466 = vmatprep.subr.mxu0 %v1202
    %1467 = vmatpush1.msra.mxu0 %v1201
    %1468 = vmatprep.subr.mxu0 %v1206
    %1469 = vmatpush1.msra.mxu0 %v1205
    %1470 = vmatprep.subr.mxu0 %v1210
    %1471 = vmatpush1.msra.mxu0 %v1209
    %1472 = vmatprep.subr.mxu0 %v1214
    %1473 = vmatpush1.msra.mxu0 %v1213
    %1474 = vmatprep.subr.mxu0 %v1218
    %1475 = vmatpush1.msra.mxu0 %v1217
    %1476 = vmatprep.subr.mxu0 %v1222
    %1477 = vmatpush1.msra.mxu0 %v1221
    %1478 = vmatprep.subr.mxu0 %v1226
    %1479 = vmatpush1.msra.mxu0 %v1225
    %1480 = vmatprep.subr.mxu0 %v1230
    %1481 = vmatpush1.msra.mxu0 %v1229
    %1482 = vmatprep.subr.mxu0 %v1234
    %1483 = vmatpush1.msra.mxu0 %v1233
    %1484 = vmatprep.subr.mxu0 %v1238
    %1485 = vmatpush1.msra.mxu0 %v1237
    %1486 = vmatprep.subr.mxu0 %v1242
    %1487 = vmatpush1.msra.mxu0 %v1241
    %1488 = vmatprep.subr.mxu0 %v1246
    %1489 = vmatpush1.msra.mxu0 %v1245
    %1490 = vmatprep.subr.mxu0 %v1250
    %1491 = vmatpush1.msra.mxu0 %v1249
    %1492 = vmatprep.subr.mxu0 %v1254
    %1493 = vmatpush1.msra.mxu0 %v1253
    %1494 = vmatprep.subr.mxu0 %v1258
    %1495 = vmatpush1.msra.mxu0 %v1257
    %1496 = vmatprep.subr.mxu0 %v1262
    %1497 = vmatpush1.msra.mxu0 %v1261
    %1498 = vmatprep.subr.mxu0 %v1266
    %1499 = vmatpush1.msra.mxu0 %v1265
    %1500 = vmatprep.subr.mxu0 %v1270
    %1501 = vmatpush1.msra.mxu0 %v1269
    %1502 = vmatprep.subr.mxu0 %v1274
    %1503 = vmatpush1.msra.mxu0 %v1273
    %1504 = vmatprep.subr.mxu0 %v1278
    %1505 = vmatpush1.msra.mxu0 %v1277
    %1506 = vmatprep.subr.mxu0 %v1282
    %1507 = vmatpush1.msra.mxu0 %v1281
    %1508 = vmatprep.subr.mxu0 %v1286
    %1509 = vmatpush1.msra.mxu0 %v1285
    %1510 = vmatprep.subr.mxu0 %v1290
    %1511 = vmatpush1.msra.mxu0 %v1289
    %1512 = vmatprep.subr.mxu0 %v1294
    %1513 = vmatpush1.msra.mxu0 %v1293
    %1514 = vmatprep.subr.mxu0 %v1298
    %1515 = vmatpush1.msra.mxu0 %v1297
    %1516 = vmatprep.mubr.f32.mxu0 %v1164
    %1517 = vmatmul.mubr.f32.gmra.mrb[0].mxu0 %v1160
    %v1518 = vpop.f32.mrb[0].mxu0
    %v1519 = vadd.f32 %v1435, %v1518
    %v1520 = vpop.f32.mrb[0].mxu0
    %v1521 = vadd.f32 %v1439, %v1520
    %1522 = vdwg.mxu0
    %1523 = vmatprep.subr.mxu0 %v1302
    %1524 = vmatpush1.msra.mxu0 %v1301
    %1525 = vmatprep.subr.mxu0 %v1306
    %1526 = vmatpush1.msra.mxu0 %v1305
    %1527 = vmatprep.subr.mxu0 %v1310
    %1528 = vmatpush1.msra.mxu0 %v1309
    %1529 = vmatprep.subr.mxu0 %v1314
    %1530 = vmatpush1.msra.mxu0 %v1313
    %1531 = vmatprep.subr.mxu0 %v1318
    %1532 = vmatpush1.msra.mxu0 %v1317
    %1533 = vmatprep.subr.mxu0 %v1322
    %1534 = vmatpush1.msra.mxu0 %v1321
    %1535 = vmatprep.subr.mxu0 %v1326
    %1536 = vmatpush1.msra.mxu0 %v1325
    %1537 = vmatprep.subr.mxu0 %v1330
    %1538 = vmatpush1.msra.mxu0 %v1329
    %1539 = vmatprep.subr.mxu0 %v1334
    %1540 = vmatpush1.msra.mxu0 %v1333
    %1541 = vmatprep.subr.mxu0 %v1338
    %1542 = vmatpush1.msra.mxu0 %v1337
    %1543 = vmatprep.subr.mxu0 %v1342
    %1544 = vmatpush1.msra.mxu0 %v1341
    %1545 = vmatprep.subr.mxu0 %v1346
    %1546 = vmatpush1.msra.mxu0 %v1345
    %1547 = vmatprep.subr.mxu0 %v1350
    %1548 = vmatpush1.msra.mxu0 %v1349
    %1549 = vmatprep.subr.mxu0 %v1354
    %1550 = vmatpush1.msra.mxu0 %v1353
    %1551 = vmatprep.subr.mxu0 %v1358
    %1552 = vmatpush1.msra.mxu0 %v1357
    %1553 = vmatprep.subr.mxu0 %v1362
    %1554 = vmatpush1.msra.mxu0 %v1361
    %1555 = vmatprep.subr.mxu0 %v1366
    %1556 = vmatpush1.msra.mxu0 %v1365
    %1557 = vmatprep.subr.mxu0 %v1370
    %1558 = vmatpush1.msra.mxu0 %v1369
    %1559 = vmatprep.subr.mxu0 %v1374
    %1560 = vmatpush1.msra.mxu0 %v1373
    %1561 = vmatprep.subr.mxu0 %v1378
    %1562 = vmatpush1.msra.mxu0 %v1377
    %1563 = vmatprep.subr.mxu0 %v1382
    %1564 = vmatpush1.msra.mxu0 %v1381
    %1565 = vmatprep.subr.mxu0 %v1386
    %1566 = vmatpush1.msra.mxu0 %v1385
    %1567 = vmatprep.subr.mxu0 %v1390
    %1568 = vmatpush1.msra.mxu0 %v1389
    %1569 = vmatprep.subr.mxu0 %v1394
    %1570 = vmatpush1.msra.mxu0 %v1393
    %1571 = vmatprep.subr.mxu0 %v1398
    %1572 = vmatpush1.msra.mxu0 %v1397
    %1573 = vmatprep.subr.mxu0 %v1402
    %1574 = vmatpush1.msra.mxu0 %v1401
    %1575 = vmatprep.subr.mxu0 %v1406
    %1576 = vmatpush1.msra.mxu0 %v1405
    %1577 = vmatprep.subr.mxu0 %v1410
    %1578 = vmatpush1.msra.mxu0 %v1409
    %1579 = vmatprep.subr.mxu0 %v1414
    %1580 = vmatpush1.msra.mxu0 %v1413
    %1581 = vmatprep.subr.mxu0 %v1418
    %1582 = vmatpush1.msra.mxu0 %v1417
    %1583 = vmatprep.subr.mxu0 %v1422
    %1584 = vmatpush1.msra.mxu0 %v1421
    %1585 = vmatprep.subr.mxu0 %v1426
    %1586 = vmatpush1.msra.mxu0 %v1425
    %1587 = vmatprep.mubr.f32.mxu0 %v1172
    %1588 = vmatmul.mubr.f32.gmra.mrb[0].mxu0 %v1168
    %v1589 = vpop.f32.mrb[0].mxu0
    %v1590 = vadd.f32 %v1519, %v1589
    %v1591 = vpop.f32.mrb[0].mxu0
    %v1592 = vadd.f32 %v1521, %v1591
    %1593 = vdwg.mxu0
    %1594 = vmatprep.subr.mxu0 %v1176
    %1595 = vmatpush1.msra.mxu0 %v1175
    %1596 = vmatprep.subr.mxu0 %v1180
    %1597 = vmatpush1.msra.mxu0 %v1179
    %1598 = vmatprep.subr.mxu0 %v1184
    %1599 = vmatpush1.msra.mxu0 %v1183
    %1600 = vmatprep.subr.mxu0 %v1188
    %1601 = vmatpush1.msra.mxu0 %v1187
    %1602 = vmatprep.subr.mxu0 %v1192
    %1603 = vmatpush1.msra.mxu0 %v1191
    %1604 = vmatprep.subr.mxu0 %v1196
    %1605 = vmatpush1.msra.mxu0 %v1195
    %1606 = vmatprep.subr.mxu0 %v1200
    %1607 = vmatpush1.msra.mxu0 %v1199
    %1608 = vmatprep.subr.mxu0 %v1204
    %1609 = vmatpush1.msra.mxu0 %v1203
    %1610 = vmatprep.subr.mxu0 %v1208
    %1611 = vmatpush1.msra.mxu0 %v1207
    %1612 = vmatprep.subr.mxu0 %v1212
    %1613 = vmatpush1.msra.mxu0 %v1211
    %1614 = vmatprep.subr.mxu0 %v1216
    %1615 = vmatpush1.msra.mxu0 %v1215
    %1616 = vmatprep.subr.mxu0 %v1220
    %1617 = vmatpush1.msra.mxu0 %v1219
    %1618 = vmatprep.subr.mxu0 %v1224
    %1619 = vmatpush1.msra.mxu0 %v1223
    %1620 = vmatprep.subr.mxu0 %v1228
    %1621 = vmatpush1.msra.mxu0 %v1227
    %1622 = vmatprep.subr.mxu0 %v1232
    %1623 = vmatpush1.msra.mxu0 %v1231
    %1624 = vmatprep.subr.mxu0 %v1236
    %1625 = vmatpush1.msra.mxu0 %v1235
    %1626 = vmatprep.subr.mxu0 %v1240
    %1627 = vmatpush1.msra.mxu0 %v1239
    %1628 = vmatprep.subr.mxu0 %v1244
    %1629 = vmatpush1.msra.mxu0 %v1243
    %1630 = vmatprep.subr.mxu0 %v1248
    %1631 = vmatpush1.msra.mxu0 %v1247
    %1632 = vmatprep.subr.mxu0 %v1252
    %1633 = vmatpush1.msra.mxu0 %v1251
    %1634 = vmatprep.subr.mxu0 %v1256
    %1635 = vmatpush1.msra.mxu0 %v1255
    %1636 = vmatprep.subr.mxu0 %v1260
    %1637 = vmatpush1.msra.mxu0 %v1259
    %1638 = vmatprep.subr.mxu0 %v1264
    %1639 = vmatpush1.msra.mxu0 %v1263
    %1640 = vmatprep.subr.mxu0 %v1268
    %1641 = vmatpush1.msra.mxu0 %v1267
    %1642 = vmatprep.subr.mxu0 %v1272
    %1643 = vmatpush1.msra.mxu0 %v1271
    %1644 = vmatprep.subr.mxu0 %v1276
    %1645 = vmatpush1.msra.mxu0 %v1275
    %1646 = vmatprep.subr.mxu0 %v1280
    %1647 = vmatpush1.msra.mxu0 %v1279
    %1648 = vmatprep.subr.mxu0 %v1284
    %1649 = vmatpush1.msra.mxu0 %v1283
    %1650 = vmatprep.subr.mxu0 %v1288
    %1651 = vmatpush1.msra.mxu0 %v1287
    %1652 = vmatprep.subr.mxu0 %v1292
    %1653 = vmatpush1.msra.mxu0 %v1291
    %1654 = vmatprep.subr.mxu0 %v1296
    %1655 = vmatpush1.msra.mxu0 %v1295
    %1656 = vmatprep.subr.mxu0 %v1300
    %1657 = vmatpush1.msra.mxu0 %v1299
    %1658 = vmatprep.mubr.f32.mxu0 %v1164
    %1659 = vmatmul.mubr.f32.gmra.mrb[0].mxu0 %v1160
    %v1660 = vpop.f32.mrb[0].mxu0
    %v1661 = vadd.f32 %v1443, %v1660
    %v1662 = vpop.f32.mrb[0].mxu0
    %v1663 = vadd.f32 %v1447, %v1662
    %1664 = vdwg.mxu0
    %1665 = vmatprep.subr.mxu0 %v1304
    %1666 = vmatpush1.msra.mxu0 %v1303
    %1667 = vmatprep.subr.mxu0 %v1308
    %1668 = vmatpush1.msra.mxu0 %v1307
    %1669 = vmatprep.subr.mxu0 %v1312
    %1670 = vmatpush1.msra.mxu0 %v1311
    %1671 = vmatprep.subr.mxu0 %v1316
    %1672 = vmatpush1.msra.mxu0 %v1315
    %1673 = vmatprep.subr.mxu0 %v1320
    %1674 = vmatpush1.msra.mxu0 %v1319
    %1675 = vmatprep.subr.mxu0 %v1324
    %1676 = vmatpush1.msra.mxu0 %v1323
    %1677 = vmatprep.subr.mxu0 %v1328
    %1678 = vmatpush1.msra.mxu0 %v1327
    %1679 = vmatprep.subr.mxu0 %v1332
    %1680 = vmatpush1.msra.mxu0 %v1331
    %1681 = vmatprep.subr.mxu0 %v1336
    %1682 = vmatpush1.msra.mxu0 %v1335
    %1683 = vmatprep.subr.mxu0 %v1340
    %1684 = vmatpush1.msra.mxu0 %v1339
    %1685 = vmatprep.subr.mxu0 %v1344
    %1686 = vmatpush1.msra.mxu0 %v1343
    %1687 = vmatprep.subr.mxu0 %v1348
    %1688 = vmatpush1.msra.mxu0 %v1347
    %1689 = vmatprep.subr.mxu0 %v1352
    %1690 = vmatpush1.msra.mxu0 %v1351
    %1691 = vmatprep.subr.mxu0 %v1356
    %1692 = vmatpush1.msra.mxu0 %v1355
    %1693 = vmatprep.subr.mxu0 %v1360
    %1694 = vmatpush1.msra.mxu0 %v1359
    %1695 = vmatprep.subr.mxu0 %v1364
    %1696 = vmatpush1.msra.mxu0 %v1363
    %1697 = vmatprep.subr.mxu0 %v1368
    %1698 = vmatpush1.msra.mxu0 %v1367
    %1699 = vmatprep.subr.mxu0 %v1372
    %1700 = vmatpush1.msra.mxu0 %v1371
    %1701 = vmatprep.subr.mxu0 %v1376
    %1702 = vmatpush1.msra.mxu0 %v1375
    %1703 = vmatprep.subr.mxu0 %v1380
    %1704 = vmatpush1.msra.mxu0 %v1379
    %1705 = vmatprep.subr.mxu0 %v1384
    %1706 = vmatpush1.msra.mxu0 %v1383
    %1707 = vmatprep.subr.mxu0 %v1388
    %1708 = vmatpush1.msra.mxu0 %v1387
    %1709 = vmatprep.subr.mxu0 %v1392
    %1710 = vmatpush1.msra.mxu0 %v1391
    %1711 = vmatprep.subr.mxu0 %v1396
    %1712 = vmatpush1.msra.mxu0 %v1395
    %1713 = vmatprep.subr.mxu0 %v1400
    %1714 = vmatpush1.msra.mxu0 %v1399
    %1715 = vmatprep.subr.mxu0 %v1404
    %1716 = vmatpush1.msra.mxu0 %v1403
    %1717 = vmatprep.subr.mxu0 %v1408
    %1718 = vmatpush1.msra.mxu0 %v1407
    %1719 = vmatprep.subr.mxu0 %v1412
    %1720 = vmatpush1.msra.mxu0 %v1411
    %1721 = vmatprep.subr.mxu0 %v1416
    %1722 = vmatpush1.msra.mxu0 %v1415
    %1723 = vmatprep.subr.mxu0 %v1420
    %1724 = vmatpush1.msra.mxu0 %v1419
    %1725 = vmatprep.subr.mxu0 %v1424
    %1726 = vmatpush1.msra.mxu0 %v1423
    %1727 = vmatprep.subr.mxu0 %v1428
    %1728 = vmatpush1.msra.mxu0 %v1427
    %1729 = vmatprep.mubr.f32.mxu0 %v1172
    %1730 = vmatmul.mubr.f32.gmra.mrb[0].mxu0 %v1168
    %v1731 = vpop.f32.mrb[0].mxu0
    %v1732 = vadd.f32 %v1661, %v1731
    %v1733 = vpop.f32.mrb[0].mxu0
    %v1734 = vadd.f32 %v1663, %v1733
    %1735 = vdwg.mxu0
    %vm1736 = vcmp.gt.f32.partialorder %v1590, 0.0
    %vm1737 = vcmp.gt.f32.partialorder %v1592, 0.0
    %vm1738 = vcmp.gt.f32.partialorder %v1732, 0.0
    %vm1739 = vcmp.gt.f32.partialorder %v1734, 0.0
    %v1740 = vmul.f32 %v1590, 0.2
    %v1741 = vmul.f32 %v1592, 0.2
    %v1742 = vmul.f32 %v1732, 0.2
    %v1743 = vmul.f32 %v1734, 0.2
    %v1744 = vsel %vm1736, %v1590, %v1740
    %v1745 = vsel %vm1737, %v1592, %v1741
    %v1746 = vsel %vm1738, %v1732, %v1742
    %v1747 = vsel %vm1739, %v1734, %v1743
    %v1748 = vld [vmem:[#allocation7] sm:$0xff]
    %v1749 = vld [vmem:[#allocation7 + $0x8] sm:$0xff]
    %v1750 = vld [vmem:[#allocation7 + $0x10] sm:$0xff]
    %v1751 = vld [vmem:[#allocation7 + $0x18] sm:$0xff]
    %v1752 = vld [vmem:[#allocation7 + $0x20] sm:$0xff]
    %v1753 = vld [vmem:[#allocation7 + $0x28] sm:$0xff]
    %v1754 = vld [vmem:[#allocation7 + $0x30] sm:$0xff]
    %v1755 = vld [vmem:[#allocation7 + $0x38] sm:$0xff]
    %v1756 = vld [vmem:[#allocation7 + $0x40] sm:$0xff]
    %v1757 = vld [vmem:[#allocation7 + $0x48] sm:$0xff]
    %v1758 = vld [vmem:[#allocation7 + $0x50] sm:$0xff]
    %v1759 = vld [vmem:[#allocation7 + $0x58] sm:$0xff]
    %v1760 = vld [vmem:[#allocation7 + $0x60] sm:$0xff]
    %v1761 = vld [vmem:[#allocation7 + $0x68] sm:$0xff]
    %v1762 = vld [vmem:[#allocation7 + $0x70] sm:$0xff]
    %v1763 = vld [vmem:[#allocation7 + $0x78] sm:$0xff]
    %v1764 = vld [vmem:[#allocation7 + $0x80] sm:$0xff]
    %v1765 = vld [vmem:[#allocation7 + $0x88] sm:$0xff]
    %v1766 = vld [vmem:[#allocation7 + $0x90] sm:$0xff]
    %v1767 = vld [vmem:[#allocation7 + $0x98] sm:$0xff]
    %v1768 = vld [vmem:[#allocation7 + $0xa0] sm:$0xff]
    %v1769 = vld [vmem:[#allocation7 + $0xa8] sm:$0xff]
    %v1770 = vld [vmem:[#allocation7 + $0xb0] sm:$0xff]
    %v1771 = vld [vmem:[#allocation7 + $0xb8] sm:$0xff]
    %v1772 = vld [vmem:[#allocation7 + $0xc0] sm:$0xff]
    %v1773 = vld [vmem:[#allocation7 + $0xc8] sm:$0xff]
    %v1774 = vld [vmem:[#allocation7 + $0xd0] sm:$0xff]
    %v1775 = vld [vmem:[#allocation7 + $0xd8] sm:$0xff]
    %v1776 = vld [vmem:[#allocation7 + $0xe0] sm:$0xff]
    %v1777 = vld [vmem:[#allocation7 + $0xe8] sm:$0xff]
    %v1778 = vld [vmem:[#allocation7 + $0xf0] sm:$0xff]
    %v1779 = vld [vmem:[#allocation7 + $0xf8] sm:$0xff]
    %v1780 = vld [vmem:[#allocation7 + $0x100] sm:$0xff]
    %v1781 = vld [vmem:[#allocation7 + $0x108] sm:$0xff]
    %v1782 = vld [vmem:[#allocation7 + $0x110] sm:$0xff]
    %v1783 = vld [vmem:[#allocation7 + $0x118] sm:$0xff]
    %v1784 = vld [vmem:[#allocation7 + $0x120] sm:$0xff]
    %v1785 = vld [vmem:[#allocation7 + $0x128] sm:$0xff]
    %v1786 = vld [vmem:[#allocation7 + $0x130] sm:$0xff]
    %v1787 = vld [vmem:[#allocation7 + $0x138] sm:$0xff]
    %v1788 = vld [vmem:[#allocation7 + $0x140] sm:$0xff]
    %v1789 = vld [vmem:[#allocation7 + $0x148] sm:$0xff]
    %v1790 = vld [vmem:[#allocation7 + $0x150] sm:$0xff]
    %v1791 = vld [vmem:[#allocation7 + $0x158] sm:$0xff]
    %v1792 = vld [vmem:[#allocation7 + $0x160] sm:$0xff]
    %v1793 = vld [vmem:[#allocation7 + $0x168] sm:$0xff]
    %v1794 = vld [vmem:[#allocation7 + $0x170] sm:$0xff]
    %v1795 = vld [vmem:[#allocation7 + $0x178] sm:$0xff]
    %v1796 = vld [vmem:[#allocation7 + $0x180] sm:$0xff]
    %v1797 = vld [vmem:[#allocation7 + $0x188] sm:$0xff]
    %v1798 = vld [vmem:[#allocation7 + $0x190] sm:$0xff]
    %v1799 = vld [vmem:[#allocation7 + $0x198] sm:$0xff]
    %v1800 = vld [vmem:[#allocation7 + $0x1a0] sm:$0xff]
    %v1801 = vld [vmem:[#allocation7 + $0x1a8] sm:$0xff]
    %v1802 = vld [vmem:[#allocation7 + $0x1b0] sm:$0xff]
    %v1803 = vld [vmem:[#allocation7 + $0x1b8] sm:$0xff]
    %v1804 = vld [vmem:[#allocation7 + $0x1c0] sm:$0xff]
    %v1805 = vld [vmem:[#allocation7 + $0x1c8] sm:$0xff]
    %v1806 = vld [vmem:[#allocation7 + $0x1d0] sm:$0xff]
    %v1807 = vld [vmem:[#allocation7 + $0x1d8] sm:$0xff]
    %v1808 = vld [vmem:[#allocation7 + $0x1e0] sm:$0xff]
    %v1809 = vld [vmem:[#allocation7 + $0x1e8] sm:$0xff]
    %v1810 = vld [vmem:[#allocation7 + $0x1f0] sm:$0xff]
    %v1811 = vld [vmem:[#allocation7 + $0x1f8] sm:$0xff]
    %v1812 = vld [vmem:[#allocation7 + $0x200] sm:$0xff]
    %v1813 = vld [vmem:[#allocation7 + $0x208] sm:$0xff]
    %v1814 = vld [vmem:[#allocation7 + $0x210] sm:$0xff]
    %v1815 = vld [vmem:[#allocation7 + $0x218] sm:$0xff]
    %v1816 = vld [vmem:[#allocation7 + $0x220] sm:$0xff]
    %v1817 = vld [vmem:[#allocation7 + $0x228] sm:$0xff]
    %v1818 = vld [vmem:[#allocation7 + $0x230] sm:$0xff]
    %v1819 = vld [vmem:[#allocation7 + $0x238] sm:$0xff]
    %v1820 = vld [vmem:[#allocation7 + $0x240] sm:$0xff]
    %v1821 = vld [vmem:[#allocation7 + $0x248] sm:$0xff]
    %v1822 = vld [vmem:[#allocation7 + $0x250] sm:$0xff]
    %v1823 = vld [vmem:[#allocation7 + $0x258] sm:$0xff]
    %v1824 = vld [vmem:[#allocation7 + $0x260] sm:$0xff]
    %v1825 = vld [vmem:[#allocation7 + $0x268] sm:$0xff]
    %v1826 = vld [vmem:[#allocation7 + $0x270] sm:$0xff]
    %v1827 = vld [vmem:[#allocation7 + $0x278] sm:$0xff]
    %v1828 = vld [vmem:[#allocation7 + $0x280] sm:$0xff]
    %v1829 = vld [vmem:[#allocation7 + $0x288] sm:$0xff]
    %v1830 = vld [vmem:[#allocation7 + $0x290] sm:$0xff]
    %v1831 = vld [vmem:[#allocation7 + $0x298] sm:$0xff]
    %v1832 = vld [vmem:[#allocation7 + $0x2a0] sm:$0xff]
    %v1833 = vld [vmem:[#allocation7 + $0x2a8] sm:$0xff]
    %v1834 = vld [vmem:[#allocation7 + $0x2b0] sm:$0xff]
    %v1835 = vld [vmem:[#allocation7 + $0x2b8] sm:$0xff]
    %v1836 = vld [vmem:[#allocation7 + $0x2c0] sm:$0xff]
    %v1837 = vld [vmem:[#allocation7 + $0x2c8] sm:$0xff]
    %v1838 = vld [vmem:[#allocation7 + $0x2d0] sm:$0xff]
    %v1839 = vld [vmem:[#allocation7 + $0x2d8] sm:$0xff]
    %v1840 = vld [vmem:[#allocation7 + $0x2e0] sm:$0xff]
    %v1841 = vld [vmem:[#allocation7 + $0x2e8] sm:$0xff]
    %v1842 = vld [vmem:[#allocation7 + $0x2f0] sm:$0xff]
    %v1843 = vld [vmem:[#allocation7 + $0x2f8] sm:$0xff]
    %v1844 = vld [vmem:[#allocation7 + $0x300] sm:$0xff]
    %v1845 = vld [vmem:[#allocation7 + $0x308] sm:$0xff]
    %v1846 = vld [vmem:[#allocation7 + $0x310] sm:$0xff]
    %v1847 = vld [vmem:[#allocation7 + $0x318] sm:$0xff]
    %v1848 = vld [vmem:[#allocation7 + $0x320] sm:$0xff]
    %v1849 = vld [vmem:[#allocation7 + $0x328] sm:$0xff]
    %v1850 = vld [vmem:[#allocation7 + $0x330] sm:$0xff]
    %v1851 = vld [vmem:[#allocation7 + $0x338] sm:$0xff]
    %v1852 = vld [vmem:[#allocation7 + $0x340] sm:$0xff]
    %v1853 = vld [vmem:[#allocation7 + $0x348] sm:$0xff]
    %v1854 = vld [vmem:[#allocation7 + $0x350] sm:$0xff]
    %v1855 = vld [vmem:[#allocation7 + $0x358] sm:$0xff]
    %v1856 = vld [vmem:[#allocation7 + $0x360] sm:$0xff]
    %v1857 = vld [vmem:[#allocation7 + $0x368] sm:$0xff]
    %v1858 = vld [vmem:[#allocation7 + $0x370] sm:$0xff]
    %v1859 = vld [vmem:[#allocation7 + $0x378] sm:$0xff]
    %v1860 = vld [vmem:[#allocation7 + $0x380] sm:$0xff]
    %v1861 = vld [vmem:[#allocation7 + $0x388] sm:$0xff]
    %v1862 = vld [vmem:[#allocation7 + $0x390] sm:$0xff]
    %v1863 = vld [vmem:[#allocation7 + $0x398] sm:$0xff]
    %v1864 = vld [vmem:[#allocation7 + $0x3a0] sm:$0xff]
    %v1865 = vld [vmem:[#allocation7 + $0x3a8] sm:$0xff]
    %v1866 = vld [vmem:[#allocation7 + $0x3b0] sm:$0xff]
    %v1867 = vld [vmem:[#allocation7 + $0x3b8] sm:$0xff]
    %v1868 = vld [vmem:[#allocation7 + $0x3c0] sm:$0xff]
    %v1869 = vld [vmem:[#allocation7 + $0x3c8] sm:$0xff]
    %v1870 = vld [vmem:[#allocation7 + $0x3d0] sm:$0xff]
    %v1871 = vld [vmem:[#allocation7 + $0x3d8] sm:$0xff]
    %v1872 = vld [vmem:[#allocation7 + $0x3e0] sm:$0xff]
    %v1873 = vld [vmem:[#allocation7 + $0x3e8] sm:$0xff]
    %v1874 = vld [vmem:[#allocation7 + $0x3f0] sm:$0xff]
    %v1875 = vld [vmem:[#allocation7 + $0x3f8] sm:$0xff]
    %v1876 = vld [vmem:[#allocation7 + $0x400] sm:$0xff]
    %v1877 = vld [vmem:[#allocation7 + $0x408] sm:$0xff]
    %v1878 = vld [vmem:[#allocation7 + $0x410] sm:$0xff]
    %v1879 = vld [vmem:[#allocation7 + $0x418] sm:$0xff]
    %v1880 = vld [vmem:[#allocation7 + $0x420] sm:$0xff]
    %v1881 = vld [vmem:[#allocation7 + $0x428] sm:$0xff]
    %v1882 = vld [vmem:[#allocation7 + $0x430] sm:$0xff]
    %v1883 = vld [vmem:[#allocation7 + $0x438] sm:$0xff]
    %v1884 = vld [vmem:[#allocation7 + $0x440] sm:$0xff]
    %v1885 = vld [vmem:[#allocation7 + $0x448] sm:$0xff]
    %v1886 = vld [vmem:[#allocation7 + $0x450] sm:$0xff]
    %v1887 = vld [vmem:[#allocation7 + $0x458] sm:$0xff]
    %v1888 = vld [vmem:[#allocation7 + $0x460] sm:$0xff]
    %v1889 = vld [vmem:[#allocation7 + $0x468] sm:$0xff]
    %v1890 = vld [vmem:[#allocation7 + $0x470] sm:$0xff]
    %v1891 = vld [vmem:[#allocation7 + $0x478] sm:$0xff]
    %v1892 = vld [vmem:[#allocation7 + $0x480] sm:$0xff]
    %v1893 = vld [vmem:[#allocation7 + $0x488] sm:$0xff]
    %v1894 = vld [vmem:[#allocation7 + $0x490] sm:$0xff]
    %v1895 = vld [vmem:[#allocation7 + $0x498] sm:$0xff]
    %v1896 = vld [vmem:[#allocation7 + $0x4a0] sm:$0xff]
    %v1897 = vld [vmem:[#allocation7 + $0x4a8] sm:$0xff]
    %v1898 = vld [vmem:[#allocation7 + $0x4b0] sm:$0xff]
    %v1899 = vld [vmem:[#allocation7 + $0x4b8] sm:$0xff]
    %v1900 = vld [vmem:[#allocation7 + $0x4c0] sm:$0xff]
    %v1901 = vld [vmem:[#allocation7 + $0x4c8] sm:$0xff]
    %v1902 = vld [vmem:[#allocation7 + $0x4d0] sm:$0xff]
    %v1903 = vld [vmem:[#allocation7 + $0x4d8] sm:$0xff]
    %v1904 = vld [vmem:[#allocation7 + $0x4e0] sm:$0xff]
    %v1905 = vld [vmem:[#allocation7 + $0x4e8] sm:$0xff]
    %v1906 = vld [vmem:[#allocation7 + $0x4f0] sm:$0xff]
    %v1907 = vld [vmem:[#allocation7 + $0x4f8] sm:$0xff]
    %v1908 = vld [vmem:[#allocation7 + $0x500] sm:$0xff]
    %v1909 = vld [vmem:[#allocation7 + $0x508] sm:$0xff]
    %v1910 = vld [vmem:[#allocation7 + $0x510] sm:$0xff]
    %v1911 = vld [vmem:[#allocation7 + $0x518] sm:$0xff]
    %v1912 = vld [vmem:[#allocation7 + $0x520] sm:$0xff]
    %v1913 = vld [vmem:[#allocation7 + $0x528] sm:$0xff]
    %v1914 = vld [vmem:[#allocation7 + $0x530] sm:$0xff]
    %v1915 = vld [vmem:[#allocation7 + $0x538] sm:$0xff]
    %v1916 = vld [vmem:[#allocation7 + $0x540] sm:$0xff]
    %v1917 = vld [vmem:[#allocation7 + $0x548] sm:$0xff]
    %v1918 = vld [vmem:[#allocation7 + $0x550] sm:$0xff]
    %v1919 = vld [vmem:[#allocation7 + $0x558] sm:$0xff]
    %v1920 = vld [vmem:[#allocation7 + $0x560] sm:$0xff]
    %v1921 = vld [vmem:[#allocation7 + $0x568] sm:$0xff]
    %v1922 = vld [vmem:[#allocation7 + $0x570] sm:$0xff]
    %v1923 = vld [vmem:[#allocation7 + $0x578] sm:$0xff]
    %v1924 = vld [vmem:[#allocation7 + $0x580] sm:$0xff]
    %v1925 = vld [vmem:[#allocation7 + $0x588] sm:$0xff]
    %v1926 = vld [vmem:[#allocation7 + $0x590] sm:$0xff]
    %v1927 = vld [vmem:[#allocation7 + $0x598] sm:$0xff]
    %v1928 = vld [vmem:[#allocation7 + $0x5a0] sm:$0xff]
    %v1929 = vld [vmem:[#allocation7 + $0x5a8] sm:$0xff]
    %v1930 = vld [vmem:[#allocation7 + $0x5b0] sm:$0xff]
    %v1931 = vld [vmem:[#allocation7 + $0x5b8] sm:$0xff]
    %v1932 = vld [vmem:[#allocation7 + $0x5c0] sm:$0xff]
    %v1933 = vld [vmem:[#allocation7 + $0x5c8] sm:$0xff]
    %v1934 = vld [vmem:[#allocation7 + $0x5d0] sm:$0xff]
    %v1935 = vld [vmem:[#allocation7 + $0x5d8] sm:$0xff]
    %v1936 = vld [vmem:[#allocation7 + $0x5e0] sm:$0xff]
    %v1937 = vld [vmem:[#allocation7 + $0x5e8] sm:$0xff]
    %v1938 = vld [vmem:[#allocation7 + $0x5f0] sm:$0xff]
    %v1939 = vld [vmem:[#allocation7 + $0x5f8] sm:$0xff]
    %v1940 = vld [vmem:[#allocation7 + $0x600] sm:$0xff]
    %v1941 = vld [vmem:[#allocation7 + $0x608] sm:$0xff]
    %v1942 = vld [vmem:[#allocation7 + $0x610] sm:$0xff]
    %v1943 = vld [vmem:[#allocation7 + $0x618] sm:$0xff]
    %v1944 = vld [vmem:[#allocation7 + $0x620] sm:$0xff]
    %v1945 = vld [vmem:[#allocation7 + $0x628] sm:$0xff]
    %v1946 = vld [vmem:[#allocation7 + $0x630] sm:$0xff]
    %v1947 = vld [vmem:[#allocation7 + $0x638] sm:$0xff]
    %v1948 = vld [vmem:[#allocation7 + $0x640] sm:$0xff]
    %v1949 = vld [vmem:[#allocation7 + $0x648] sm:$0xff]
    %v1950 = vld [vmem:[#allocation7 + $0x650] sm:$0xff]
    %v1951 = vld [vmem:[#allocation7 + $0x658] sm:$0xff]
    %v1952 = vld [vmem:[#allocation7 + $0x660] sm:$0xff]
    %v1953 = vld [vmem:[#allocation7 + $0x668] sm:$0xff]
    %v1954 = vld [vmem:[#allocation7 + $0x670] sm:$0xff]
    %v1955 = vld [vmem:[#allocation7 + $0x678] sm:$0xff]
    %v1956 = vld [vmem:[#allocation7 + $0x680] sm:$0xff]
    %v1957 = vld [vmem:[#allocation7 + $0x688] sm:$0xff]
    %v1958 = vld [vmem:[#allocation7 + $0x690] sm:$0xff]
    %v1959 = vld [vmem:[#allocation7 + $0x698] sm:$0xff]
    %v1960 = vld [vmem:[#allocation7 + $0x6a0] sm:$0xff]
    %v1961 = vld [vmem:[#allocation7 + $0x6a8] sm:$0xff]
    %v1962 = vld [vmem:[#allocation7 + $0x6b0] sm:$0xff]
    %v1963 = vld [vmem:[#allocation7 + $0x6b8] sm:$0xff]
    %v1964 = vld [vmem:[#allocation7 + $0x6c0] sm:$0xff]
    %v1965 = vld [vmem:[#allocation7 + $0x6c8] sm:$0xff]
    %v1966 = vld [vmem:[#allocation7 + $0x6d0] sm:$0xff]
    %v1967 = vld [vmem:[#allocation7 + $0x6d8] sm:$0xff]
    %v1968 = vld [vmem:[#allocation7 + $0x6e0] sm:$0xff]
    %v1969 = vld [vmem:[#allocation7 + $0x6e8] sm:$0xff]
    %v1970 = vld [vmem:[#allocation7 + $0x6f0] sm:$0xff]
    %v1971 = vld [vmem:[#allocation7 + $0x6f8] sm:$0xff]
    %v1972 = vld [vmem:[#allocation7 + $0x700] sm:$0xff]
    %v1973 = vld [vmem:[#allocation7 + $0x708] sm:$0xff]
    %v1974 = vld [vmem:[#allocation7 + $0x710] sm:$0xff]
    %v1975 = vld [vmem:[#allocation7 + $0x718] sm:$0xff]
    %v1976 = vld [vmem:[#allocation7 + $0x720] sm:$0xff]
    %v1977 = vld [vmem:[#allocation7 + $0x728] sm:$0xff]
    %v1978 = vld [vmem:[#allocation7 + $0x730] sm:$0xff]
    %v1979 = vld [vmem:[#allocation7 + $0x738] sm:$0xff]
    %v1980 = vld [vmem:[#allocation7 + $0x740] sm:$0xff]
    %v1981 = vld [vmem:[#allocation7 + $0x748] sm:$0xff]
    %v1982 = vld [vmem:[#allocation7 + $0x750] sm:$0xff]
    %v1983 = vld [vmem:[#allocation7 + $0x758] sm:$0xff]
    %v1984 = vld [vmem:[#allocation7 + $0x760] sm:$0xff]
    %v1985 = vld [vmem:[#allocation7 + $0x768] sm:$0xff]
    %v1986 = vld [vmem:[#allocation7 + $0x770] sm:$0xff]
    %v1987 = vld [vmem:[#allocation7 + $0x778] sm:$0xff]
    %v1988 = vld [vmem:[#allocation7 + $0x780] sm:$0xff]
    %v1989 = vld [vmem:[#allocation7 + $0x788] sm:$0xff]
    %v1990 = vld [vmem:[#allocation7 + $0x790] sm:$0xff]
    %v1991 = vld [vmem:[#allocation7 + $0x798] sm:$0xff]
    %v1992 = vld [vmem:[#allocation7 + $0x7a0] sm:$0xff]
    %v1993 = vld [vmem:[#allocation7 + $0x7a8] sm:$0xff]
    %v1994 = vld [vmem:[#allocation7 + $0x7b0] sm:$0xff]
    %v1995 = vld [vmem:[#allocation7 + $0x7b8] sm:$0xff]
    %v1996 = vld [vmem:[#allocation7 + $0x7c0] sm:$0xff]
    %v1997 = vld [vmem:[#allocation7 + $0x7c8] sm:$0xff]
    %v1998 = vld [vmem:[#allocation7 + $0x7d0] sm:$0xff]
    %v1999 = vld [vmem:[#allocation7 + $0x7d8] sm:$0xff]
    %v2000 = vld [vmem:[#allocation7 + $0x7e0] sm:$0xff]
    %v2001 = vld [vmem:[#allocation7 + $0x7e8] sm:$0xff]
    %v2002 = vld [vmem:[#allocation7 + $0x7f0] sm:$0xff]
    %v2003 = vld [vmem:[#allocation7 + $0x7f8] sm:$0xff]
    %s2004 = scalar_lea.vmem [#allocation10], 2
    %v2005 = vld [vmem:[%s2004] ss:$4 sm:$0xf]
    %v2007 = vlaneseq
    %v2008 = vshrl.u32 %v2007, 7
    %v2009 = vsub.s32 0, %v2008
    %v2010 = vrot.slane %v2005, %v2009
    %v2011 = vlaneseq
    %v2012 = vshrl.u32 %v2011, 7
    %v2013 = vsub.s32 1, %v2012
    %v2014 = vrot.slane %v2005, %v2013
    %v2015 = vlaneseq
    %v2016 = vshrl.u32 %v2015, 7
    %v2017 = vsub.s32 2, %v2016
    %v2018 = vrot.slane %v2005, %v2017
    %v2019 = vlaneseq
    %v2020 = vshrl.u32 %v2019, 7
    %v2021 = vsub.s32 3, %v2020
    %v2022 = vrot.slane %v2005, %v2021
    %2027 = vmatprep.subr.mxu0 %v1749
    %2028 = vmatpush1.msra.mxu0 %v1748
    %2029 = vmatprep.subr.mxu0 %v1753
    %2030 = vmatpush1.msra.mxu0 %v1752
    %2031 = vmatprep.subr.mxu0 %v1757
    %2032 = vmatpush1.msra.mxu0 %v1756
    %2033 = vmatprep.subr.mxu0 %v1761
    %2034 = vmatpush1.msra.mxu0 %v1760
    %2035 = vmatprep.subr.mxu0 %v1765
    %2036 = vmatpush1.msra.mxu0 %v1764
    %2037 = vmatprep.subr.mxu0 %v1769
    %2038 = vmatpush1.msra.mxu0 %v1768
    %2039 = vmatprep.subr.mxu0 %v1773
    %2040 = vmatpush1.msra.mxu0 %v1772
    %2041 = vmatprep.subr.mxu0 %v1777
    %2042 = vmatpush1.msra.mxu0 %v1776
    %2043 = vmatprep.subr.mxu0 %v1781
    %2044 = vmatpush1.msra.mxu0 %v1780
    %2045 = vmatprep.subr.mxu0 %v1785
    %2046 = vmatpush1.msra.mxu0 %v1784
    %2047 = vmatprep.subr.mxu0 %v1789
    %2048 = vmatpush1.msra.mxu0 %v1788
    %2049 = vmatprep.subr.mxu0 %v1793
    %2050 = vmatpush1.msra.mxu0 %v1792
    %2051 = vmatprep.subr.mxu0 %v1797
    %2052 = vmatpush1.msra.mxu0 %v1796
    %2053 = vmatprep.subr.mxu0 %v1801
    %2054 = vmatpush1.msra.mxu0 %v1800
    %2055 = vmatprep.subr.mxu0 %v1805
    %2056 = vmatpush1.msra.mxu0 %v1804
    %2057 = vmatprep.subr.mxu0 %v1809
    %2058 = vmatpush1.msra.mxu0 %v1808
    %2059 = vmatprep.subr.mxu0 %v1813
    %2060 = vmatpush1.msra.mxu0 %v1812
    %2061 = vmatprep.subr.mxu0 %v1817
    %2062 = vmatpush1.msra.mxu0 %v1816
    %2063 = vmatprep.subr.mxu0 %v1821
    %2064 = vmatpush1.msra.mxu0 %v1820
    %2065 = vmatprep.subr.mxu0 %v1825
    %2066 = vmatpush1.msra.mxu0 %v1824
    %2067 = vmatprep.subr.mxu0 %v1829
    %2068 = vmatpush1.msra.mxu0 %v1828
    %2069 = vmatprep.subr.mxu0 %v1833
    %2070 = vmatpush1.msra.mxu0 %v1832
    %2071 = vmatprep.subr.mxu0 %v1837
    %2072 = vmatpush1.msra.mxu0 %v1836
    %2073 = vmatprep.subr.mxu0 %v1841
    %2074 = vmatpush1.msra.mxu0 %v1840
    %2075 = vmatprep.subr.mxu0 %v1845
    %2076 = vmatpush1.msra.mxu0 %v1844
    %2077 = vmatprep.subr.mxu0 %v1849
    %2078 = vmatpush1.msra.mxu0 %v1848
    %2079 = vmatprep.subr.mxu0 %v1853
    %2080 = vmatpush1.msra.mxu0 %v1852
    %2081 = vmatprep.subr.mxu0 %v1857
    %2082 = vmatpush1.msra.mxu0 %v1856
    %2083 = vmatprep.subr.mxu0 %v1861
    %2084 = vmatpush1.msra.mxu0 %v1860
    %2085 = vmatprep.subr.mxu0 %v1865
    %2086 = vmatpush1.msra.mxu0 %v1864
    %2087 = vmatprep.subr.mxu0 %v1869
    %2088 = vmatpush1.msra.mxu0 %v1868
    %2089 = vmatprep.subr.mxu0 %v1873
    %2090 = vmatpush1.msra.mxu0 %v1872
    %2091 = vmatprep.mubr.f32.mxu0 %v1745
    %2092 = vmatmul.mubr.f32.gmra.mrb[0].mxu0 %v1744
    %v2093 = vpop.f32.mrb[0].mxu0
    %v2094 = vadd.f32 %v2010, %v2093
    %v2095 = vpop.f32.mrb[0].mxu0
    %v2096 = vadd.f32 %v2014, %v2095
    %2097 = vdwg.mxu0
    %2098 = vmatprep.subr.mxu0 %v1877
    %2099 = vmatpush1.msra.mxu0 %v1876
    %2100 = vmatprep.subr.mxu0 %v1881
    %2101 = vmatpush1.msra.mxu0 %v1880
    %2102 = vmatprep.subr.mxu0 %v1885
    %2103 = vmatpush1.msra.mxu0 %v1884
    %2104 = vmatprep.subr.mxu0 %v1889
    %2105 = vmatpush1.msra.mxu0 %v1888
    %2106 = vmatprep.subr.mxu0 %v1893
    %2107 = vmatpush1.msra.mxu0 %v1892
    %2108 = vmatprep.subr.mxu0 %v1897
    %2109 = vmatpush1.msra.mxu0 %v1896
    %2110 = vmatprep.subr.mxu0 %v1901
    %2111 = vmatpush1.msra.mxu0 %v1900
    %2112 = vmatprep.subr.mxu0 %v1905
    %2113 = vmatpush1.msra.mxu0 %v1904
    %2114 = vmatprep.subr.mxu0 %v1909
    %2115 = vmatpush1.msra.mxu0 %v1908
    %2116 = vmatprep.subr.mxu0 %v1913
    %2117 = vmatpush1.msra.mxu0 %v1912
    %2118 = vmatprep.subr.mxu0 %v1917
    %2119 = vmatpush1.msra.mxu0 %v1916
    %2120 = vmatprep.subr.mxu0 %v1921
    %2121 = vmatpush1.msra.mxu0 %v1920
    %2122 = vmatprep.subr.mxu0 %v1925
    %2123 = vmatpush1.msra.mxu0 %v1924
    %2124 = vmatprep.subr.mxu0 %v1929
    %2125 = vmatpush1.msra.mxu0 %v1928
    %2126 = vmatprep.subr.mxu0 %v1933
    %2127 = vmatpush1.msra.mxu0 %v1932
    %2128 = vmatprep.subr.mxu0 %v1937
    %2129 = vmatpush1.msra.mxu0 %v1936
    %2130 = vmatprep.subr.mxu0 %v1941
    %2131 = vmatpush1.msra.mxu0 %v1940
    %2132 = vmatprep.subr.mxu0 %v1945
    %2133 = vmatpush1.msra.mxu0 %v1944
    %2134 = vmatprep.subr.mxu0 %v1949
    %2135 = vmatpush1.msra.mxu0 %v1948
    %2136 = vmatprep.subr.mxu0 %v1953
    %2137 = vmatpush1.msra.mxu0 %v1952
    %2138 = vmatprep.subr.mxu0 %v1957
    %2139 = vmatpush1.msra.mxu0 %v1956
    %2140 = vmatprep.subr.mxu0 %v1961
    %2141 = vmatpush1.msra.mxu0 %v1960
    %2142 = vmatprep.subr.mxu0 %v1965
    %2143 = vmatpush1.msra.mxu0 %v1964
    %2144 = vmatprep.subr.mxu0 %v1969
    %2145 = vmatpush1.msra.mxu0 %v1968
    %2146 = vmatprep.subr.mxu0 %v1973
    %2147 = vmatpush1.msra.mxu0 %v1972
    %2148 = vmatprep.subr.mxu0 %v1977
    %2149 = vmatpush1.msra.mxu0 %v1976
    %2150 = vmatprep.subr.mxu0 %v1981
    %2151 = vmatpush1.msra.mxu0 %v1980
    %2152 = vmatprep.subr.mxu0 %v1985
    %2153 = vmatpush1.msra.mxu0 %v1984
    %2154 = vmatprep.subr.mxu0 %v1989
    %2155 = vmatpush1.msra.mxu0 %v1988
    %2156 = vmatprep.subr.mxu0 %v1993
    %2157 = vmatpush1.msra.mxu0 %v1992
    %2158 = vmatprep.subr.mxu0 %v1997
    %2159 = vmatpush1.msra.mxu0 %v1996
    %2160 = vmatprep.subr.mxu0 %v2001
    %2161 = vmatpush1.msra.mxu0 %v2000
    %2162 = vmatprep.mubr.f32.mxu0 %v1747
    %2163 = vmatmul.mubr.f32.gmra.mrb[0].mxu0 %v1746
    %v2164 = vpop.f32.mrb[0].mxu0
    %v2165 = vadd.f32 %v2094, %v2164
    %v2166 = vpop.f32.mrb[0].mxu0
    %v2167 = vadd.f32 %v2096, %v2166
    %2168 = vdwg.mxu0
    %2169 = vmatprep.subr.mxu0 %v1751
    %2170 = vmatpush1.msra.mxu0 %v1750
    %2171 = vmatprep.subr.mxu0 %v1755
    %2172 = vmatpush1.msra.mxu0 %v1754
    %2173 = vmatprep.subr.mxu0 %v1759
    %2174 = vmatpush1.msra.mxu0 %v1758
    %2175 = vmatprep.subr.mxu0 %v1763
    %2176 = vmatpush1.msra.mxu0 %v1762
    %2177 = vmatprep.subr.mxu0 %v1767
    %2178 = vmatpush1.msra.mxu0 %v1766
    %2179 = vmatprep.subr.mxu0 %v1771
    %2180 = vmatpush1.msra.mxu0 %v1770
    %2181 = vmatprep.subr.mxu0 %v1775
    %2182 = vmatpush1.msra.mxu0 %v1774
    %2183 = vmatprep.subr.mxu0 %v1779
    %2184 = vmatpush1.msra.mxu0 %v1778
    %2185 = vmatprep.subr.mxu0 %v1783
    %2186 = vmatpush1.msra.mxu0 %v1782
    %2187 = vmatprep.subr.mxu0 %v1787
    %2188 = vmatpush1.msra.mxu0 %v1786
    %2189 = vmatprep.subr.mxu0 %v1791
    %2190 = vmatpush1.msra.mxu0 %v1790
    %2191 = vmatprep.subr.mxu0 %v1795
    %2192 = vmatpush1.msra.mxu0 %v1794
    %2193 = vmatprep.subr.mxu0 %v1799
    %2194 = vmatpush1.msra.mxu0 %v1798
    %2195 = vmatprep.subr.mxu0 %v1803
    %2196 = vmatpush1.msra.mxu0 %v1802
    %2197 = vmatprep.subr.mxu0 %v1807
    %2198 = vmatpush1.msra.mxu0 %v1806
    %2199 = vmatprep.subr.mxu0 %v1811
    %2200 = vmatpush1.msra.mxu0 %v1810
    %2201 = vmatprep.subr.mxu0 %v1815
    %2202 = vmatpush1.msra.mxu0 %v1814
    %2203 = vmatprep.subr.mxu0 %v1819
    %2204 = vmatpush1.msra.mxu0 %v1818
    %2205 = vmatprep.subr.mxu0 %v1823
    %2206 = vmatpush1.msra.mxu0 %v1822
    %2207 = vmatprep.subr.mxu0 %v1827
    %2208 = vmatpush1.msra.mxu0 %v1826
    %2209 = vmatprep.subr.mxu0 %v1831
    %2210 = vmatpush1.msra.mxu0 %v1830
    %2211 = vmatprep.subr.mxu0 %v1835
    %2212 = vmatpush1.msra.mxu0 %v1834
    %2213 = vmatprep.subr.mxu0 %v1839
    %2214 = vmatpush1.msra.mxu0 %v1838
    %2215 = vmatprep.subr.mxu0 %v1843
    %2216 = vmatpush1.msra.mxu0 %v1842
    %2217 = vmatprep.subr.mxu0 %v1847
    %2218 = vmatpush1.msra.mxu0 %v1846
    %2219 = vmatprep.subr.mxu0 %v1851
    %2220 = vmatpush1.msra.mxu0 %v1850
    %2221 = vmatprep.subr.mxu0 %v1855
    %2222 = vmatpush1.msra.mxu0 %v1854
    %2223 = vmatprep.subr.mxu0 %v1859
    %2224 = vmatpush1.msra.mxu0 %v1858
    %2225 = vmatprep.subr.mxu0 %v1863
    %2226 = vmatpush1.msra.mxu0 %v1862
    %2227 = vmatprep.subr.mxu0 %v1867
    %2228 = vmatpush1.msra.mxu0 %v1866
    %2229 = vmatprep.subr.mxu0 %v1871
    %2230 = vmatpush1.msra.mxu0 %v1870
    %2231 = vmatprep.subr.mxu0 %v1875
    %2232 = vmatpush1.msra.mxu0 %v1874
    %2233 = vmatprep.mubr.f32.mxu0 %v1745
    %2234 = vmatmul.mubr.f32.gmra.mrb[0].mxu0 %v1744
    %v2235 = vpop.f32.mrb[0].mxu0
    %v2236 = vadd.f32 %v2018, %v2235
    %v2237 = vpop.f32.mrb[0].mxu0
    %v2238 = vadd.f32 %v2022, %v2237
    %2239 = vdwg.mxu0
    %2240 = vmatprep.subr.mxu0 %v1879
    %2241 = vmatpush1.msra.mxu0 %v1878
    %2242 = vmatprep.subr.mxu0 %v1883
    %2243 = vmatpush1.msra.mxu0 %v1882
    %2244 = vmatprep.subr.mxu0 %v1887
    %2245 = vmatpush1.msra.mxu0 %v1886
    %2246 = vmatprep.subr.mxu0 %v1891
    %2247 = vmatpush1.msra.mxu0 %v1890
    %2248 = vmatprep.subr.mxu0 %v1895
    %2249 = vmatpush1.msra.mxu0 %v1894
    %2250 = vmatprep.subr.mxu0 %v1899
    %2251 = vmatpush1.msra.mxu0 %v1898
    %2252 = vmatprep.subr.mxu0 %v1903
    %2253 = vmatpush1.msra.mxu0 %v1902
    %2254 = vmatprep.subr.mxu0 %v1907
    %2255 = vmatpush1.msra.mxu0 %v1906
    %2256 = vmatprep.subr.mxu0 %v1911
    %2257 = vmatpush1.msra.mxu0 %v1910
    %2258 = vmatprep.subr.mxu0 %v1915
    %2259 = vmatpush1.msra.mxu0 %v1914
    %2260 = vmatprep.subr.mxu0 %v1919
    %2261 = vmatpush1.msra.mxu0 %v1918
    %2262 = vmatprep.subr.mxu0 %v1923
    %2263 = vmatpush1.msra.mxu0 %v1922
    %2264 = vmatprep.subr.mxu0 %v1927
    %2265 = vmatpush1.msra.mxu0 %v1926
    %2266 = vmatprep.subr.mxu0 %v1931
    %2267 = vmatpush1.msra.mxu0 %v1930
    %2268 = vmatprep.subr.mxu0 %v1935
    %2269 = vmatpush1.msra.mxu0 %v1934
    %2270 = vmatprep.subr.mxu0 %v1939
    %2271 = vmatpush1.msra.mxu0 %v1938
    %2272 = vmatprep.subr.mxu0 %v1943
    %2273 = vmatpush1.msra.mxu0 %v1942
    %2274 = vmatprep.subr.mxu0 %v1947
    %2275 = vmatpush1.msra.mxu0 %v1946
    %2276 = vmatprep.subr.mxu0 %v1951
    %2277 = vmatpush1.msra.mxu0 %v1950
    %2278 = vmatprep.subr.mxu0 %v1955
    %2279 = vmatpush1.msra.mxu0 %v1954
    %2280 = vmatprep.subr.mxu0 %v1959
    %2281 = vmatpush1.msra.mxu0 %v1958
    %2282 = vmatprep.subr.mxu0 %v1963
    %2283 = vmatpush1.msra.mxu0 %v1962
    %2284 = vmatprep.subr.mxu0 %v1967
    %2285 = vmatpush1.msra.mxu0 %v1966
    %2286 = vmatprep.subr.mxu0 %v1971
    %2287 = vmatpush1.msra.mxu0 %v1970
    %2288 = vmatprep.subr.mxu0 %v1975
    %2289 = vmatpush1.msra.mxu0 %v1974
    %2290 = vmatprep.subr.mxu0 %v1979
    %2291 = vmatpush1.msra.mxu0 %v1978
    %2292 = vmatprep.subr.mxu0 %v1983
    %2293 = vmatpush1.msra.mxu0 %v1982
    %2294 = vmatprep.subr.mxu0 %v1987
    %2295 = vmatpush1.msra.mxu0 %v1986
    %2296 = vmatprep.subr.mxu0 %v1991
    %2297 = vmatpush1.msra.mxu0 %v1990
    %2298 = vmatprep.subr.mxu0 %v1995
    %2299 = vmatpush1.msra.mxu0 %v1994
    %2300 = vmatprep.subr.mxu0 %v1999
    %2301 = vmatpush1.msra.mxu0 %v1998
    %2302 = vmatprep.subr.mxu0 %v2003
    %2303 = vmatpush1.msra.mxu0 %v2002
    %2304 = vmatprep.mubr.f32.mxu0 %v1747
    %2305 = vmatmul.mubr.f32.gmra.mrb[0].mxu0 %v1746
    %v2306 = vpop.f32.mrb[0].mxu0
    %v2307 = vadd.f32 %v2236, %v2306
    %v2308 = vpop.f32.mrb[0].mxu0
    %v2309 = vadd.f32 %v2238, %v2308
    %2310 = vdwg.mxu0
    %vm2311 = vcmp.gt.f32.partialorder %v2165, 0.0
    %vm2312 = vcmp.gt.f32.partialorder %v2167, 0.0
    %vm2313 = vcmp.gt.f32.partialorder %v2307, 0.0
    %vm2314 = vcmp.gt.f32.partialorder %v2309, 0.0
    %v2315 = vmul.f32 %v2165, 0.2
    %v2316 = vmul.f32 %v2167, 0.2
    %v2317 = vmul.f32 %v2307, 0.2
    %v2318 = vmul.f32 %v2309, 0.2
    %v2319 = vsel %vm2311, %v2165, %v2315
    %v2320 = vsel %vm2312, %v2167, %v2316
    %v2321 = vsel %vm2313, %v2307, %v2317
    %v2322 = vsel %vm2314, %v2309, %v2318
    %v2323 = vld [vmem:[#allocation8] sm:$0xff]
    %v2324 = vld [vmem:[#allocation8 + $0x8] sm:$0xff]
    %v2325 = vld [vmem:[#allocation8 + $0x10] sm:$0xff]
    %v2326 = vld [vmem:[#allocation8 + $0x18] sm:$0xff]
    %v2327 = vld [vmem:[#allocation8 + $0x20] sm:$0xff]
    %v2328 = vld [vmem:[#allocation8 + $0x28] sm:$0xff]
    %v2329 = vld [vmem:[#allocation8 + $0x30] sm:$0xff]
    %v2330 = vld [vmem:[#allocation8 + $0x38] sm:$0xff]
    %v2331 = vld [vmem:[#allocation8 + $0x40] sm:$0xff]
    %v2332 = vld [vmem:[#allocation8 + $0x48] sm:$0xff]
    %v2333 = vld [vmem:[#allocation8 + $0x50] sm:$0xff]
    %v2334 = vld [vmem:[#allocation8 + $0x58] sm:$0xff]
    %v2335 = vld [vmem:[#allocation8 + $0x60] sm:$0xff]
    %v2336 = vld [vmem:[#allocation8 + $0x68] sm:$0xff]
    %v2337 = vld [vmem:[#allocation8 + $0x70] sm:$0xff]
    %v2338 = vld [vmem:[#allocation8 + $0x78] sm:$0xff]
    %v2339 = vld [vmem:[#allocation8 + $0x80] sm:$0xff]
    %v2340 = vld [vmem:[#allocation8 + $0x88] sm:$0xff]
    %v2341 = vld [vmem:[#allocation8 + $0x90] sm:$0xff]
    %v2342 = vld [vmem:[#allocation8 + $0x98] sm:$0xff]
    %v2343 = vld [vmem:[#allocation8 + $0xa0] sm:$0xff]
    %v2344 = vld [vmem:[#allocation8 + $0xa8] sm:$0xff]
    %v2345 = vld [vmem:[#allocation8 + $0xb0] sm:$0xff]
    %v2346 = vld [vmem:[#allocation8 + $0xb8] sm:$0xff]
    %v2347 = vld [vmem:[#allocation8 + $0xc0] sm:$0xff]
    %v2348 = vld [vmem:[#allocation8 + $0xc8] sm:$0xff]
    %v2349 = vld [vmem:[#allocation8 + $0xd0] sm:$0xff]
    %v2350 = vld [vmem:[#allocation8 + $0xd8] sm:$0xff]
    %v2351 = vld [vmem:[#allocation8 + $0xe0] sm:$0xff]
    %v2352 = vld [vmem:[#allocation8 + $0xe8] sm:$0xff]
    %v2353 = vld [vmem:[#allocation8 + $0xf0] sm:$0xff]
    %v2354 = vld [vmem:[#allocation8 + $0xf8] sm:$0xff]
    %v2355 = vld [vmem:[#allocation8 + $0x100] sm:$0xff]
    %v2356 = vld [vmem:[#allocation8 + $0x108] sm:$0xff]
    %v2357 = vld [vmem:[#allocation8 + $0x110] sm:$0xff]
    %v2358 = vld [vmem:[#allocation8 + $0x118] sm:$0xff]
    %v2359 = vld [vmem:[#allocation8 + $0x120] sm:$0xff]
    %v2360 = vld [vmem:[#allocation8 + $0x128] sm:$0xff]
    %v2361 = vld [vmem:[#allocation8 + $0x130] sm:$0xff]
    %v2362 = vld [vmem:[#allocation8 + $0x138] sm:$0xff]
    %v2363 = vld [vmem:[#allocation8 + $0x140] sm:$0xff]
    %v2364 = vld [vmem:[#allocation8 + $0x148] sm:$0xff]
    %v2365 = vld [vmem:[#allocation8 + $0x150] sm:$0xff]
    %v2366 = vld [vmem:[#allocation8 + $0x158] sm:$0xff]
    %v2367 = vld [vmem:[#allocation8 + $0x160] sm:$0xff]
    %v2368 = vld [vmem:[#allocation8 + $0x168] sm:$0xff]
    %v2369 = vld [vmem:[#allocation8 + $0x170] sm:$0xff]
    %v2370 = vld [vmem:[#allocation8 + $0x178] sm:$0xff]
    %v2371 = vld [vmem:[#allocation8 + $0x180] sm:$0xff]
    %v2372 = vld [vmem:[#allocation8 + $0x188] sm:$0xff]
    %v2373 = vld [vmem:[#allocation8 + $0x190] sm:$0xff]
    %v2374 = vld [vmem:[#allocation8 + $0x198] sm:$0xff]
    %v2375 = vld [vmem:[#allocation8 + $0x1a0] sm:$0xff]
    %v2376 = vld [vmem:[#allocation8 + $0x1a8] sm:$0xff]
    %v2377 = vld [vmem:[#allocation8 + $0x1b0] sm:$0xff]
    %v2378 = vld [vmem:[#allocation8 + $0x1b8] sm:$0xff]
    %v2379 = vld [vmem:[#allocation8 + $0x1c0] sm:$0xff]
    %v2380 = vld [vmem:[#allocation8 + $0x1c8] sm:$0xff]
    %v2381 = vld [vmem:[#allocation8 + $0x1d0] sm:$0xff]
    %v2382 = vld [vmem:[#allocation8 + $0x1d8] sm:$0xff]
    %v2383 = vld [vmem:[#allocation8 + $0x1e0] sm:$0xff]
    %v2384 = vld [vmem:[#allocation8 + $0x1e8] sm:$0xff]
    %v2385 = vld [vmem:[#allocation8 + $0x1f0] sm:$0xff]
    %v2386 = vld [vmem:[#allocation8 + $0x1f8] sm:$0xff]
    %v2387 = vld [vmem:[#allocation8 + $0x200] sm:$0xff]
    %v2388 = vld [vmem:[#allocation8 + $0x208] sm:$0xff]
    %v2389 = vld [vmem:[#allocation8 + $0x210] sm:$0xff]
    %v2390 = vld [vmem:[#allocation8 + $0x218] sm:$0xff]
    %v2391 = vld [vmem:[#allocation8 + $0x220] sm:$0xff]
    %v2392 = vld [vmem:[#allocation8 + $0x228] sm:$0xff]
    %v2393 = vld [vmem:[#allocation8 + $0x230] sm:$0xff]
    %v2394 = vld [vmem:[#allocation8 + $0x238] sm:$0xff]
    %v2395 = vld [vmem:[#allocation8 + $0x240] sm:$0xff]
    %v2396 = vld [vmem:[#allocation8 + $0x248] sm:$0xff]
    %v2397 = vld [vmem:[#allocation8 + $0x250] sm:$0xff]
    %v2398 = vld [vmem:[#allocation8 + $0x258] sm:$0xff]
    %v2399 = vld [vmem:[#allocation8 + $0x260] sm:$0xff]
    %v2400 = vld [vmem:[#allocation8 + $0x268] sm:$0xff]
    %v2401 = vld [vmem:[#allocation8 + $0x270] sm:$0xff]
    %v2402 = vld [vmem:[#allocation8 + $0x278] sm:$0xff]
    %v2403 = vld [vmem:[#allocation8 + $0x280] sm:$0xff]
    %v2404 = vld [vmem:[#allocation8 + $0x288] sm:$0xff]
    %v2405 = vld [vmem:[#allocation8 + $0x290] sm:$0xff]
    %v2406 = vld [vmem:[#allocation8 + $0x298] sm:$0xff]
    %v2407 = vld [vmem:[#allocation8 + $0x2a0] sm:$0xff]
    %v2408 = vld [vmem:[#allocation8 + $0x2a8] sm:$0xff]
    %v2409 = vld [vmem:[#allocation8 + $0x2b0] sm:$0xff]
    %v2410 = vld [vmem:[#allocation8 + $0x2b8] sm:$0xff]
    %v2411 = vld [vmem:[#allocation8 + $0x2c0] sm:$0xff]
    %v2412 = vld [vmem:[#allocation8 + $0x2c8] sm:$0xff]
    %v2413 = vld [vmem:[#allocation8 + $0x2d0] sm:$0xff]
    %v2414 = vld [vmem:[#allocation8 + $0x2d8] sm:$0xff]
    %v2415 = vld [vmem:[#allocation8 + $0x2e0] sm:$0xff]
    %v2416 = vld [vmem:[#allocation8 + $0x2e8] sm:$0xff]
    %v2417 = vld [vmem:[#allocation8 + $0x2f0] sm:$0xff]
    %v2418 = vld [vmem:[#allocation8 + $0x2f8] sm:$0xff]
    %v2419 = vld [vmem:[#allocation8 + $0x300] sm:$0xff]
    %v2420 = vld [vmem:[#allocation8 + $0x308] sm:$0xff]
    %v2421 = vld [vmem:[#allocation8 + $0x310] sm:$0xff]
    %v2422 = vld [vmem:[#allocation8 + $0x318] sm:$0xff]
    %v2423 = vld [vmem:[#allocation8 + $0x320] sm:$0xff]
    %v2424 = vld [vmem:[#allocation8 + $0x328] sm:$0xff]
    %v2425 = vld [vmem:[#allocation8 + $0x330] sm:$0xff]
    %v2426 = vld [vmem:[#allocation8 + $0x338] sm:$0xff]
    %v2427 = vld [vmem:[#allocation8 + $0x340] sm:$0xff]
    %v2428 = vld [vmem:[#allocation8 + $0x348] sm:$0xff]
    %v2429 = vld [vmem:[#allocation8 + $0x350] sm:$0xff]
    %v2430 = vld [vmem:[#allocation8 + $0x358] sm:$0xff]
    %v2431 = vld [vmem:[#allocation8 + $0x360] sm:$0xff]
    %v2432 = vld [vmem:[#allocation8 + $0x368] sm:$0xff]
    %v2433 = vld [vmem:[#allocation8 + $0x370] sm:$0xff]
    %v2434 = vld [vmem:[#allocation8 + $0x378] sm:$0xff]
    %v2435 = vld [vmem:[#allocation8 + $0x380] sm:$0xff]
    %v2436 = vld [vmem:[#allocation8 + $0x388] sm:$0xff]
    %v2437 = vld [vmem:[#allocation8 + $0x390] sm:$0xff]
    %v2438 = vld [vmem:[#allocation8 + $0x398] sm:$0xff]
    %v2439 = vld [vmem:[#allocation8 + $0x3a0] sm:$0xff]
    %v2440 = vld [vmem:[#allocation8 + $0x3a8] sm:$0xff]
    %v2441 = vld [vmem:[#allocation8 + $0x3b0] sm:$0xff]
    %v2442 = vld [vmem:[#allocation8 + $0x3b8] sm:$0xff]
    %v2443 = vld [vmem:[#allocation8 + $0x3c0] sm:$0xff]
    %v2444 = vld [vmem:[#allocation8 + $0x3c8] sm:$0xff]
    %v2445 = vld [vmem:[#allocation8 + $0x3d0] sm:$0xff]
    %v2446 = vld [vmem:[#allocation8 + $0x3d8] sm:$0xff]
    %v2447 = vld [vmem:[#allocation8 + $0x3e0] sm:$0xff]
    %v2448 = vld [vmem:[#allocation8 + $0x3e8] sm:$0xff]
    %v2449 = vld [vmem:[#allocation8 + $0x3f0] sm:$0xff]
    %v2450 = vld [vmem:[#allocation8 + $0x3f8] sm:$0xff]
    %v2451 = vld [vmem:[#allocation8 + $0x400] sm:$0xff]
    %v2452 = vld [vmem:[#allocation8 + $0x408] sm:$0xff]
    %v2453 = vld [vmem:[#allocation8 + $0x410] sm:$0xff]
    %v2454 = vld [vmem:[#allocation8 + $0x418] sm:$0xff]
    %v2455 = vld [vmem:[#allocation8 + $0x420] sm:$0xff]
    %v2456 = vld [vmem:[#allocation8 + $0x428] sm:$0xff]
    %v2457 = vld [vmem:[#allocation8 + $0x430] sm:$0xff]
    %v2458 = vld [vmem:[#allocation8 + $0x438] sm:$0xff]
    %v2459 = vld [vmem:[#allocation8 + $0x440] sm:$0xff]
    %v2460 = vld [vmem:[#allocation8 + $0x448] sm:$0xff]
    %v2461 = vld [vmem:[#allocation8 + $0x450] sm:$0xff]
    %v2462 = vld [vmem:[#allocation8 + $0x458] sm:$0xff]
    %v2463 = vld [vmem:[#allocation8 + $0x460] sm:$0xff]
    %v2464 = vld [vmem:[#allocation8 + $0x468] sm:$0xff]
    %v2465 = vld [vmem:[#allocation8 + $0x470] sm:$0xff]
    %v2466 = vld [vmem:[#allocation8 + $0x478] sm:$0xff]
    %v2467 = vld [vmem:[#allocation8 + $0x480] sm:$0xff]
    %v2468 = vld [vmem:[#allocation8 + $0x488] sm:$0xff]
    %v2469 = vld [vmem:[#allocation8 + $0x490] sm:$0xff]
    %v2470 = vld [vmem:[#allocation8 + $0x498] sm:$0xff]
    %v2471 = vld [vmem:[#allocation8 + $0x4a0] sm:$0xff]
    %v2472 = vld [vmem:[#allocation8 + $0x4a8] sm:$0xff]
    %v2473 = vld [vmem:[#allocation8 + $0x4b0] sm:$0xff]
    %v2474 = vld [vmem:[#allocation8 + $0x4b8] sm:$0xff]
    %v2475 = vld [vmem:[#allocation8 + $0x4c0] sm:$0xff]
    %v2476 = vld [vmem:[#allocation8 + $0x4c8] sm:$0xff]
    %v2477 = vld [vmem:[#allocation8 + $0x4d0] sm:$0xff]
    %v2478 = vld [vmem:[#allocation8 + $0x4d8] sm:$0xff]
    %v2479 = vld [vmem:[#allocation8 + $0x4e0] sm:$0xff]
    %v2480 = vld [vmem:[#allocation8 + $0x4e8] sm:$0xff]
    %v2481 = vld [vmem:[#allocation8 + $0x4f0] sm:$0xff]
    %v2482 = vld [vmem:[#allocation8 + $0x4f8] sm:$0xff]
    %v2483 = vld [vmem:[#allocation8 + $0x500] sm:$0xff]
    %v2484 = vld [vmem:[#allocation8 + $0x508] sm:$0xff]
    %v2485 = vld [vmem:[#allocation8 + $0x510] sm:$0xff]
    %v2486 = vld [vmem:[#allocation8 + $0x518] sm:$0xff]
    %v2487 = vld [vmem:[#allocation8 + $0x520] sm:$0xff]
    %v2488 = vld [vmem:[#allocation8 + $0x528] sm:$0xff]
    %v2489 = vld [vmem:[#allocation8 + $0x530] sm:$0xff]
    %v2490 = vld [vmem:[#allocation8 + $0x538] sm:$0xff]
    %v2491 = vld [vmem:[#allocation8 + $0x540] sm:$0xff]
    %v2492 = vld [vmem:[#allocation8 + $0x548] sm:$0xff]
    %v2493 = vld [vmem:[#allocation8 + $0x550] sm:$0xff]
    %v2494 = vld [vmem:[#allocation8 + $0x558] sm:$0xff]
    %v2495 = vld [vmem:[#allocation8 + $0x560] sm:$0xff]
    %v2496 = vld [vmem:[#allocation8 + $0x568] sm:$0xff]
    %v2497 = vld [vmem:[#allocation8 + $0x570] sm:$0xff]
    %v2498 = vld [vmem:[#allocation8 + $0x578] sm:$0xff]
    %v2499 = vld [vmem:[#allocation8 + $0x580] sm:$0xff]
    %v2500 = vld [vmem:[#allocation8 + $0x588] sm:$0xff]
    %v2501 = vld [vmem:[#allocation8 + $0x590] sm:$0xff]
    %v2502 = vld [vmem:[#allocation8 + $0x598] sm:$0xff]
    %v2503 = vld [vmem:[#allocation8 + $0x5a0] sm:$0xff]
    %v2504 = vld [vmem:[#allocation8 + $0x5a8] sm:$0xff]
    %v2505 = vld [vmem:[#allocation8 + $0x5b0] sm:$0xff]
    %v2506 = vld [vmem:[#allocation8 + $0x5b8] sm:$0xff]
    %v2507 = vld [vmem:[#allocation8 + $0x5c0] sm:$0xff]
    %v2508 = vld [vmem:[#allocation8 + $0x5c8] sm:$0xff]
    %v2509 = vld [vmem:[#allocation8 + $0x5d0] sm:$0xff]
    %v2510 = vld [vmem:[#allocation8 + $0x5d8] sm:$0xff]
    %v2511 = vld [vmem:[#allocation8 + $0x5e0] sm:$0xff]
    %v2512 = vld [vmem:[#allocation8 + $0x5e8] sm:$0xff]
    %v2513 = vld [vmem:[#allocation8 + $0x5f0] sm:$0xff]
    %v2514 = vld [vmem:[#allocation8 + $0x5f8] sm:$0xff]
    %v2515 = vld [vmem:[#allocation8 + $0x600] sm:$0xff]
    %v2516 = vld [vmem:[#allocation8 + $0x608] sm:$0xff]
    %v2517 = vld [vmem:[#allocation8 + $0x610] sm:$0xff]
    %v2518 = vld [vmem:[#allocation8 + $0x618] sm:$0xff]
    %v2519 = vld [vmem:[#allocation8 + $0x620] sm:$0xff]
    %v2520 = vld [vmem:[#allocation8 + $0x628] sm:$0xff]
    %v2521 = vld [vmem:[#allocation8 + $0x630] sm:$0xff]
    %v2522 = vld [vmem:[#allocation8 + $0x638] sm:$0xff]
    %v2523 = vld [vmem:[#allocation8 + $0x640] sm:$0xff]
    %v2524 = vld [vmem:[#allocation8 + $0x648] sm:$0xff]
    %v2525 = vld [vmem:[#allocation8 + $0x650] sm:$0xff]
    %v2526 = vld [vmem:[#allocation8 + $0x658] sm:$0xff]
    %v2527 = vld [vmem:[#allocation8 + $0x660] sm:$0xff]
    %v2528 = vld [vmem:[#allocation8 + $0x668] sm:$0xff]
    %v2529 = vld [vmem:[#allocation8 + $0x670] sm:$0xff]
    %v2530 = vld [vmem:[#allocation8 + $0x678] sm:$0xff]
    %v2531 = vld [vmem:[#allocation8 + $0x680] sm:$0xff]
    %v2532 = vld [vmem:[#allocation8 + $0x688] sm:$0xff]
    %v2533 = vld [vmem:[#allocation8 + $0x690] sm:$0xff]
    %v2534 = vld [vmem:[#allocation8 + $0x698] sm:$0xff]
    %v2535 = vld [vmem:[#allocation8 + $0x6a0] sm:$0xff]
    %v2536 = vld [vmem:[#allocation8 + $0x6a8] sm:$0xff]
    %v2537 = vld [vmem:[#allocation8 + $0x6b0] sm:$0xff]
    %v2538 = vld [vmem:[#allocation8 + $0x6b8] sm:$0xff]
    %v2539 = vld [vmem:[#allocation8 + $0x6c0] sm:$0xff]
    %v2540 = vld [vmem:[#allocation8 + $0x6c8] sm:$0xff]
    %v2541 = vld [vmem:[#allocation8 + $0x6d0] sm:$0xff]
    %v2542 = vld [vmem:[#allocation8 + $0x6d8] sm:$0xff]
    %v2543 = vld [vmem:[#allocation8 + $0x6e0] sm:$0xff]
    %v2544 = vld [vmem:[#allocation8 + $0x6e8] sm:$0xff]
    %v2545 = vld [vmem:[#allocation8 + $0x6f0] sm:$0xff]
    %v2546 = vld [vmem:[#allocation8 + $0x6f8] sm:$0xff]
    %v2547 = vld [vmem:[#allocation8 + $0x700] sm:$0xff]
    %v2548 = vld [vmem:[#allocation8 + $0x708] sm:$0xff]
    %v2549 = vld [vmem:[#allocation8 + $0x710] sm:$0xff]
    %v2550 = vld [vmem:[#allocation8 + $0x718] sm:$0xff]
    %v2551 = vld [vmem:[#allocation8 + $0x720] sm:$0xff]
    %v2552 = vld [vmem:[#allocation8 + $0x728] sm:$0xff]
    %v2553 = vld [vmem:[#allocation8 + $0x730] sm:$0xff]
    %v2554 = vld [vmem:[#allocation8 + $0x738] sm:$0xff]
    %v2555 = vld [vmem:[#allocation8 + $0x740] sm:$0xff]
    %v2556 = vld [vmem:[#allocation8 + $0x748] sm:$0xff]
    %v2557 = vld [vmem:[#allocation8 + $0x750] sm:$0xff]
    %v2558 = vld [vmem:[#allocation8 + $0x758] sm:$0xff]
    %v2559 = vld [vmem:[#allocation8 + $0x760] sm:$0xff]
    %v2560 = vld [vmem:[#allocation8 + $0x768] sm:$0xff]
    %v2561 = vld [vmem:[#allocation8 + $0x770] sm:$0xff]
    %v2562 = vld [vmem:[#allocation8 + $0x778] sm:$0xff]
    %v2563 = vld [vmem:[#allocation8 + $0x780] sm:$0xff]
    %v2564 = vld [vmem:[#allocation8 + $0x788] sm:$0xff]
    %v2565 = vld [vmem:[#allocation8 + $0x790] sm:$0xff]
    %v2566 = vld [vmem:[#allocation8 + $0x798] sm:$0xff]
    %v2567 = vld [vmem:[#allocation8 + $0x7a0] sm:$0xff]
    %v2568 = vld [vmem:[#allocation8 + $0x7a8] sm:$0xff]
    %v2569 = vld [vmem:[#allocation8 + $0x7b0] sm:$0xff]
    %v2570 = vld [vmem:[#allocation8 + $0x7b8] sm:$0xff]
    %v2571 = vld [vmem:[#allocation8 + $0x7c0] sm:$0xff]
    %v2572 = vld [vmem:[#allocation8 + $0x7c8] sm:$0xff]
    %v2573 = vld [vmem:[#allocation8 + $0x7d0] sm:$0xff]
    %v2574 = vld [vmem:[#allocation8 + $0x7d8] sm:$0xff]
    %v2575 = vld [vmem:[#allocation8 + $0x7e0] sm:$0xff]
    %v2576 = vld [vmem:[#allocation8 + $0x7e8] sm:$0xff]
    %v2577 = vld [vmem:[#allocation8 + $0x7f0] sm:$0xff]
    %v2578 = vld [vmem:[#allocation8 + $0x7f8] sm:$0xff]
    %s2579 = scalar_lea.vmem [#allocation10], 3
    %v2580 = vld [vmem:[%s2579] ss:$4 sm:$0xf]
    %v2582 = vlaneseq
    %v2583 = vshrl.u32 %v2582, 7
    %v2584 = vsub.s32 0, %v2583
    %v2585 = vrot.slane %v2580, %v2584
    %v2586 = vlaneseq
    %v2587 = vshrl.u32 %v2586, 7
    %v2588 = vsub.s32 1, %v2587
    %v2589 = vrot.slane %v2580, %v2588
    %v2590 = vlaneseq
    %v2591 = vshrl.u32 %v2590, 7
    %v2592 = vsub.s32 2, %v2591
    %v2593 = vrot.slane %v2580, %v2592
    %v2594 = vlaneseq
    %v2595 = vshrl.u32 %v2594, 7
    %v2596 = vsub.s32 3, %v2595
    %v2597 = vrot.slane %v2580, %v2596
    %2602 = vmatprep.subr.mxu0 %v2324
    %2603 = vmatpush1.msra.mxu0 %v2323
    %2604 = vmatprep.subr.mxu0 %v2328
    %2605 = vmatpush1.msra.mxu0 %v2327
    %2606 = vmatprep.subr.mxu0 %v2332
    %2607 = vmatpush1.msra.mxu0 %v2331
    %2608 = vmatprep.subr.mxu0 %v2336
    %2609 = vmatpush1.msra.mxu0 %v2335
    %2610 = vmatprep.subr.mxu0 %v2340
    %2611 = vmatpush1.msra.mxu0 %v2339
    %2612 = vmatprep.subr.mxu0 %v2344
    %2613 = vmatpush1.msra.mxu0 %v2343
    %2614 = vmatprep.subr.mxu0 %v2348
    %2615 = vmatpush1.msra.mxu0 %v2347
    %2616 = vmatprep.subr.mxu0 %v2352
    %2617 = vmatpush1.msra.mxu0 %v2351
    %2618 = vmatprep.subr.mxu0 %v2356
    %2619 = vmatpush1.msra.mxu0 %v2355
    %2620 = vmatprep.subr.mxu0 %v2360
    %2621 = vmatpush1.msra.mxu0 %v2359
    %2622 = vmatprep.subr.mxu0 %v2364
    %2623 = vmatpush1.msra.mxu0 %v2363
    %2624 = vmatprep.subr.mxu0 %v2368
    %2625 = vmatpush1.msra.mxu0 %v2367
    %2626 = vmatprep.subr.mxu0 %v2372
    %2627 = vmatpush1.msra.mxu0 %v2371
    %2628 = vmatprep.subr.mxu0 %v2376
    %2629 = vmatpush1.msra.mxu0 %v2375
    %2630 = vmatprep.subr.mxu0 %v2380
    %2631 = vmatpush1.msra.mxu0 %v2379
    %2632 = vmatprep.subr.mxu0 %v2384
    %2633 = vmatpush1.msra.mxu0 %v2383
    %2634 = vmatprep.subr.mxu0 %v2388
    %2635 = vmatpush1.msra.mxu0 %v2387
    %2636 = vmatprep.subr.mxu0 %v2392
    %2637 = vmatpush1.msra.mxu0 %v2391
    %2638 = vmatprep.subr.mxu0 %v2396
    %2639 = vmatpush1.msra.mxu0 %v2395
    %2640 = vmatprep.subr.mxu0 %v2400
    %2641 = vmatpush1.msra.mxu0 %v2399
    %2642 = vmatprep.subr.mxu0 %v2404
    %2643 = vmatpush1.msra.mxu0 %v2403
    %2644 = vmatprep.subr.mxu0 %v2408
    %2645 = vmatpush1.msra.mxu0 %v2407
    %2646 = vmatprep.subr.mxu0 %v2412
    %2647 = vmatpush1.msra.mxu0 %v2411
    %2648 = vmatprep.subr.mxu0 %v2416
    %2649 = vmatpush1.msra.mxu0 %v2415
    %2650 = vmatprep.subr.mxu0 %v2420
    %2651 = vmatpush1.msra.mxu0 %v2419
    %2652 = vmatprep.subr.mxu0 %v2424
    %2653 = vmatpush1.msra.mxu0 %v2423
    %2654 = vmatprep.subr.mxu0 %v2428
    %2655 = vmatpush1.msra.mxu0 %v2427
    %2656 = vmatprep.subr.mxu0 %v2432
    %2657 = vmatpush1.msra.mxu0 %v2431
    %2658 = vmatprep.subr.mxu0 %v2436
    %2659 = vmatpush1.msra.mxu0 %v2435
    %2660 = vmatprep.subr.mxu0 %v2440
    %2661 = vmatpush1.msra.mxu0 %v2439
    %2662 = vmatprep.subr.mxu0 %v2444
    %2663 = vmatpush1.msra.mxu0 %v2443
    %2664 = vmatprep.subr.mxu0 %v2448
    %2665 = vmatpush1.msra.mxu0 %v2447
    %2666 = vmatprep.mubr.f32.mxu0 %v2320
    %2667 = vmatmul.mubr.f32.gmra.mrb[0].mxu0 %v2319
    %v2668 = vpop.f32.mrb[0].mxu0
    %v2669 = vadd.f32 %v2585, %v2668
    %v2670 = vpop.f32.mrb[0].mxu0
    %v2671 = vadd.f32 %v2589, %v2670
    %2672 = vdwg.mxu0
    %2673 = vmatprep.subr.mxu0 %v2452
    %2674 = vmatpush1.msra.mxu0 %v2451
    %2675 = vmatprep.subr.mxu0 %v2456
    %2676 = vmatpush1.msra.mxu0 %v2455
    %2677 = vmatprep.subr.mxu0 %v2460
    %2678 = vmatpush1.msra.mxu0 %v2459
    %2679 = vmatprep.subr.mxu0 %v2464
    %2680 = vmatpush1.msra.mxu0 %v2463
    %2681 = vmatprep.subr.mxu0 %v2468
    %2682 = vmatpush1.msra.mxu0 %v2467
    %2683 = vmatprep.subr.mxu0 %v2472
    %2684 = vmatpush1.msra.mxu0 %v2471
    %2685 = vmatprep.subr.mxu0 %v2476
    %2686 = vmatpush1.msra.mxu0 %v2475
    %2687 = vmatprep.subr.mxu0 %v2480
    %2688 = vmatpush1.msra.mxu0 %v2479
    %2689 = vmatprep.subr.mxu0 %v2484
    %2690 = vmatpush1.msra.mxu0 %v2483
    %2691 = vmatprep.subr.mxu0 %v2488
    %2692 = vmatpush1.msra.mxu0 %v2487
    %2693 = vmatprep.subr.mxu0 %v2492
    %2694 = vmatpush1.msra.mxu0 %v2491
    %2695 = vmatprep.subr.mxu0 %v2496
    %2696 = vmatpush1.msra.mxu0 %v2495
    %2697 = vmatprep.subr.mxu0 %v2500
    %2698 = vmatpush1.msra.mxu0 %v2499
    %2699 = vmatprep.subr.mxu0 %v2504
    %2700 = vmatpush1.msra.mxu0 %v2503
    %2701 = vmatprep.subr.mxu0 %v2508
    %2702 = vmatpush1.msra.mxu0 %v2507
    %2703 = vmatprep.subr.mxu0 %v2512
    %2704 = vmatpush1.msra.mxu0 %v2511
    %2705 = vmatprep.subr.mxu0 %v2516
    %2706 = vmatpush1.msra.mxu0 %v2515
    %2707 = vmatprep.subr.mxu0 %v2520
    %2708 = vmatpush1.msra.mxu0 %v2519
    %2709 = vmatprep.subr.mxu0 %v2524
    %2710 = vmatpush1.msra.mxu0 %v2523
    %2711 = vmatprep.subr.mxu0 %v2528
    %2712 = vmatpush1.msra.mxu0 %v2527
    %2713 = vmatprep.subr.mxu0 %v2532
    %2714 = vmatpush1.msra.mxu0 %v2531
    %2715 = vmatprep.subr.mxu0 %v2536
    %2716 = vmatpush1.msra.mxu0 %v2535
    %2717 = vmatprep.subr.mxu0 %v2540
    %2718 = vmatpush1.msra.mxu0 %v2539
    %2719 = vmatprep.subr.mxu0 %v2544
    %2720 = vmatpush1.msra.mxu0 %v2543
    %2721 = vmatprep.subr.mxu0 %v2548
    %2722 = vmatpush1.msra.mxu0 %v2547
    %2723 = vmatprep.subr.mxu0 %v2552
    %2724 = vmatpush1.msra.mxu0 %v2551
    %2725 = vmatprep.subr.mxu0 %v2556
    %2726 = vmatpush1.msra.mxu0 %v2555
    %2727 = vmatprep.subr.mxu0 %v2560
    %2728 = vmatpush1.msra.mxu0 %v2559
    %2729 = vmatprep.subr.mxu0 %v2564
    %2730 = vmatpush1.msra.mxu0 %v2563
    %2731 = vmatprep.subr.mxu0 %v2568
    %2732 = vmatpush1.msra.mxu0 %v2567
    %2733 = vmatprep.subr.mxu0 %v2572
    %2734 = vmatpush1.msra.mxu0 %v2571
    %2735 = vmatprep.subr.mxu0 %v2576
    %2736 = vmatpush1.msra.mxu0 %v2575
    %2737 = vmatprep.mubr.f32.mxu0 %v2322
    %2738 = vmatmul.mubr.f32.gmra.mrb[0].mxu0 %v2321
    %v2739 = vpop.f32.mrb[0].mxu0
    %v2740 = vadd.f32 %v2669, %v2739
    %v2741 = vpop.f32.mrb[0].mxu0
    %v2742 = vadd.f32 %v2671, %v2741
    %2743 = vdwg.mxu0
    %2744 = vmatprep.subr.mxu0 %v2326
    %2745 = vmatpush1.msra.mxu0 %v2325
    %2746 = vmatprep.subr.mxu0 %v2330
    %2747 = vmatpush1.msra.mxu0 %v2329
    %2748 = vmatprep.subr.mxu0 %v2334
    %2749 = vmatpush1.msra.mxu0 %v2333
    %2750 = vmatprep.subr.mxu0 %v2338
    %2751 = vmatpush1.msra.mxu0 %v2337
    %2752 = vmatprep.subr.mxu0 %v2342
    %2753 = vmatpush1.msra.mxu0 %v2341
    %2754 = vmatprep.subr.mxu0 %v2346
    %2755 = vmatpush1.msra.mxu0 %v2345
    %2756 = vmatprep.subr.mxu0 %v2350
    %2757 = vmatpush1.msra.mxu0 %v2349
    %2758 = vmatprep.subr.mxu0 %v2354
    %2759 = vmatpush1.msra.mxu0 %v2353
    %2760 = vmatprep.subr.mxu0 %v2358
    %2761 = vmatpush1.msra.mxu0 %v2357
    %2762 = vmatprep.subr.mxu0 %v2362
    %2763 = vmatpush1.msra.mxu0 %v2361
    %2764 = vmatprep.subr.mxu0 %v2366
    %2765 = vmatpush1.msra.mxu0 %v2365
    %2766 = vmatprep.subr.mxu0 %v2370
    %2767 = vmatpush1.msra.mxu0 %v2369
    %2768 = vmatprep.subr.mxu0 %v2374
    %2769 = vmatpush1.msra.mxu0 %v2373
    %2770 = vmatprep.subr.mxu0 %v2378
    %2771 = vmatpush1.msra.mxu0 %v2377
    %2772 = vmatprep.subr.mxu0 %v2382
    %2773 = vmatpush1.msra.mxu0 %v2381
    %2774 = vmatprep.subr.mxu0 %v2386
    %2775 = vmatpush1.msra.mxu0 %v2385
    %2776 = vmatprep.subr.mxu0 %v2390
    %2777 = vmatpush1.msra.mxu0 %v2389
    %2778 = vmatprep.subr.mxu0 %v2394
    %2779 = vmatpush1.msra.mxu0 %v2393
    %2780 = vmatprep.subr.mxu0 %v2398
    %2781 = vmatpush1.msra.mxu0 %v2397
    %2782 = vmatprep.subr.mxu0 %v2402
    %2783 = vmatpush1.msra.mxu0 %v2401
    %2784 = vmatprep.subr.mxu0 %v2406
    %2785 = vmatpush1.msra.mxu0 %v2405
    %2786 = vmatprep.subr.mxu0 %v2410
    %2787 = vmatpush1.msra.mxu0 %v2409
    %2788 = vmatprep.subr.mxu0 %v2414
    %2789 = vmatpush1.msra.mxu0 %v2413
    %2790 = vmatprep.subr.mxu0 %v2418
    %2791 = vmatpush1.msra.mxu0 %v2417
    %2792 = vmatprep.subr.mxu0 %v2422
    %2793 = vmatpush1.msra.mxu0 %v2421
    %2794 = vmatprep.subr.mxu0 %v2426
    %2795 = vmatpush1.msra.mxu0 %v2425
    %2796 = vmatprep.subr.mxu0 %v2430
    %2797 = vmatpush1.msra.mxu0 %v2429
    %2798 = vmatprep.subr.mxu0 %v2434
    %2799 = vmatpush1.msra.mxu0 %v2433
    %2800 = vmatprep.subr.mxu0 %v2438
    %2801 = vmatpush1.msra.mxu0 %v2437
    %2802 = vmatprep.subr.mxu0 %v2442
    %2803 = vmatpush1.msra.mxu0 %v2441
    %2804 = vmatprep.subr.mxu0 %v2446
    %2805 = vmatpush1.msra.mxu0 %v2445
    %2806 = vmatprep.subr.mxu0 %v2450
    %2807 = vmatpush1.msra.mxu0 %v2449
    %2808 = vmatprep.mubr.f32.mxu0 %v2320
    %2809 = vmatmul.mubr.f32.gmra.mrb[0].mxu0 %v2319
    %v2810 = vpop.f32.mrb[0].mxu0
    %v2811 = vadd.f32 %v2593, %v2810
    %v2812 = vpop.f32.mrb[0].mxu0
    %v2813 = vadd.f32 %v2597, %v2812
    %2814 = vdwg.mxu0
    %2815 = vmatprep.subr.mxu0 %v2454
    %2816 = vmatpush1.msra.mxu0 %v2453
    %2817 = vmatprep.subr.mxu0 %v2458
    %2818 = vmatpush1.msra.mxu0 %v2457
    %2819 = vmatprep.subr.mxu0 %v2462
    %2820 = vmatpush1.msra.mxu0 %v2461
    %2821 = vmatprep.subr.mxu0 %v2466
    %2822 = vmatpush1.msra.mxu0 %v2465
    %2823 = vmatprep.subr.mxu0 %v2470
    %2824 = vmatpush1.msra.mxu0 %v2469
    %2825 = vmatprep.subr.mxu0 %v2474
    %2826 = vmatpush1.msra.mxu0 %v2473
    %2827 = vmatprep.subr.mxu0 %v2478
    %2828 = vmatpush1.msra.mxu0 %v2477
    %2829 = vmatprep.subr.mxu0 %v2482
    %2830 = vmatpush1.msra.mxu0 %v2481
    %2831 = vmatprep.subr.mxu0 %v2486
    %2832 = vmatpush1.msra.mxu0 %v2485
    %2833 = vmatprep.subr.mxu0 %v2490
    %2834 = vmatpush1.msra.mxu0 %v2489
    %2835 = vmatprep.subr.mxu0 %v2494
    %2836 = vmatpush1.msra.mxu0 %v2493
    %2837 = vmatprep.subr.mxu0 %v2498
    %2838 = vmatpush1.msra.mxu0 %v2497
    %2839 = vmatprep.subr.mxu0 %v2502
    %2840 = vmatpush1.msra.mxu0 %v2501
    %2841 = vmatprep.subr.mxu0 %v2506
    %2842 = vmatpush1.msra.mxu0 %v2505
    %2843 = vmatprep.subr.mxu0 %v2510
    %2844 = vmatpush1.msra.mxu0 %v2509
    %2845 = vmatprep.subr.mxu0 %v2514
    %2846 = vmatpush1.msra.mxu0 %v2513
    %2847 = vmatprep.subr.mxu0 %v2518
    %2848 = vmatpush1.msra.mxu0 %v2517
    %2849 = vmatprep.subr.mxu0 %v2522
    %2850 = vmatpush1.msra.mxu0 %v2521
    %2851 = vmatprep.subr.mxu0 %v2526
    %2852 = vmatpush1.msra.mxu0 %v2525
    %2853 = vmatprep.subr.mxu0 %v2530
    %2854 = vmatpush1.msra.mxu0 %v2529
    %2855 = vmatprep.subr.mxu0 %v2534
    %2856 = vmatpush1.msra.mxu0 %v2533
    %2857 = vmatprep.subr.mxu0 %v2538
    %2858 = vmatpush1.msra.mxu0 %v2537
    %2859 = vmatprep.subr.mxu0 %v2542
    %2860 = vmatpush1.msra.mxu0 %v2541
    %2861 = vmatprep.subr.mxu0 %v2546
    %2862 = vmatpush1.msra.mxu0 %v2545
    %2863 = vmatprep.subr.mxu0 %v2550
    %2864 = vmatpush1.msra.mxu0 %v2549
    %2865 = vmatprep.subr.mxu0 %v2554
    %2866 = vmatpush1.msra.mxu0 %v2553
    %2867 = vmatprep.subr.mxu0 %v2558
    %2868 = vmatpush1.msra.mxu0 %v2557
    %2869 = vmatprep.subr.mxu0 %v2562
    %2870 = vmatpush1.msra.mxu0 %v2561
    %2871 = vmatprep.subr.mxu0 %v2566
    %2872 = vmatpush1.msra.mxu0 %v2565
    %2873 = vmatprep.subr.mxu0 %v2570
    %2874 = vmatpush1.msra.mxu0 %v2569
    %2875 = vmatprep.subr.mxu0 %v2574
    %2876 = vmatpush1.msra.mxu0 %v2573
    %2877 = vmatprep.subr.mxu0 %v2578
    %2878 = vmatpush1.msra.mxu0 %v2577
    %2879 = vmatprep.mubr.f32.mxu0 %v2322
    %2880 = vmatmul.mubr.f32.gmra.mrb[0].mxu0 %v2321
    %v2881 = vpop.f32.mrb[0].mxu0
    %v2882 = vadd.f32 %v2811, %v2881
    %v2883 = vpop.f32.mrb[0].mxu0
    %v2884 = vadd.f32 %v2813, %v2883
    %2885 = vdwg.mxu0
    %vm2886 = vcmp.gt.f32.partialorder %v2740, 0.0
    %vm2887 = vcmp.gt.f32.partialorder %v2742, 0.0
    %vm2888 = vcmp.gt.f32.partialorder %v2882, 0.0
    %vm2889 = vcmp.gt.f32.partialorder %v2884, 0.0
    %v2890 = vmul.f32 %v2740, 0.2
    %v2891 = vmul.f32 %v2742, 0.2
    %v2892 = vmul.f32 %v2882, 0.2
    %v2893 = vmul.f32 %v2884, 0.2
    %v2894 = vsel %vm2886, %v2740, %v2890
    %v2895 = vsel %vm2887, %v2742, %v2891
    %v2896 = vsel %vm2888, %v2882, %v2892
    %v2897 = vsel %vm2889, %v2884, %v2893
    %v2898 = vlaneseq
    %v2899 = vshrl.u32 %v2898, 7
    %v2900 = vsub.s32 0, %v2899
    %v2901 = vrot.slane %v2894, %v2900
    %v2902 = vlaneseq
    %v2903 = vshrl.u32 %v2902, 7
    %v2904 = vsub.s32 0, %v2903
    %v2905 = vrot.slane %v2895, %v2904
    %v2906 = vlaneseq
    %v2907 = vshrl.u32 %v2906, 7
    %v2908 = vsub.s32 0, %v2907
    %v2909 = vrot.slane %v2896, %v2908
    %v2910 = vlaneseq
    %v2911 = vshrl.u32 %v2910, 7
    %v2912 = vsub.s32 0, %v2911
    %v2913 = vrot.slane %v2897, %v2912
    %2914 = vst [vmem:[#allocation11] sm:$0xff] %v2901
    %2915 = vst [vmem:[#allocation11 + $0x8] sm:$0xff] %v2905
    %2916 = vst [vmem:[#allocation11 + $0x10] sm:$0xff] %v2909
    %2917 = vst [vmem:[#allocation11 + $0x18] sm:$0xff] %v2913
    // Predicated region
    $region42: #{tpu_custom_call.1} parent=1 // pred_check
      _
    $region43: #{tpu_custom_call.1} parent=1 // pred_check_branch
      %2919 = sbr.rel (0) target = $region45
    $region44: #{tpu_custom_call.1} parent=1 // pred_region
      %s2921 = ssub.s32 512, 512
      %2922 = vsyncadd [#allocation4], %s2921
      %s2924 = sshll.u32 [#allocation11], 4
      %s2925 = int_to_ptr.vmem [resolvable:$true] %s2924
      %2927 = dma.vmem_to_hbm [thread:$0]  %s2925, 512, %s5, [#allocation4]
    $region45: #{tpu_custom_call.1} parent=1 // pred_fallthru
      _
    // Predicated region
    $region46: #{tpu_custom_call.1} parent=1 // pred_check
      _
    $region47: #{tpu_custom_call.1} parent=1 // pred_check_branch
      %2929 = sbr.rel (0) target = $region49
    $region48: #{tpu_custom_call.1} parent=1 // pred_region
      %2930 = dma.done [#allocation4], 512
    $region49: #{tpu_custom_call.1} parent=1 // pred_fallthru
      _
    %2931 = vsyncpa [#allocation3], 1
    %2932 = vsyncpa [#allocation6], 1
    %2933 = vsyncpa [#allocation9], 1
    %2934 = vsyncpa [#allocation4], 1

</llo_original>
